<compile_context>
chip_gen: v6e
topology: v6e:2x2x1
jax: 0.10.0
libtpu: 0.0.40
codegen_flags: <defaults>
</compile_context>

<pallas_src>
import jax
import jax.numpy as jnp
import numpy as np
from jax.experimental import pallas as pl
from jax.experimental.pallas import tpu as pltpu


# ----------------------------------------------------------------------------
# kernel
# ----------------------------------------------------------------------------
def _down_kernel(x_cur_ref, x_top_ref, x_bot_ref,
                 w1_ref, s1_ref, t1_ref, w2_ref, s2_ref, t2_ref,
                 out_ref, src1_scr, h1_scr):
    """One (batch, row-tile) grid step of maxpool(2) + [conv3x3+BN+ReLU] x2.

    x_cur_ref : (1, TH, 2, Wp, 2*Cin) bf16  raw rows of this tile (pool taps)
    x_top_ref : (1, 2,  2, Wp, 2*Cin) bf16  pooled rows [r*TH-2, r*TH)
    x_bot_ref : (1, 2,  2, Wp, 2*Cin) bf16  pooled rows [(r+1)*TH, +2)
    w1_ref    : (9, Cin,    Cmid_p)   bf16  per-tap conv1 weights
    w2_ref    : (9, Cmid_p, Cout_p)   bf16  per-tap conv2 weights
    s*/t*     : (1, C_p) f32                folded conv-bias + BN scale/shift
    out_ref   : (1, TH, Wp, Cout_p)   bf16
    src1_scr  : (TH+4, Wp+2, Cin)     bf16  zero-bordered conv1 source
    h1_scr    : (TH+2, Wp+2, Cmid_p)  bf16  zero-bordered conv2 source
    """
    r = pl.program_id(1)
    n_rt = pl.num_programs(1)

    th = out_ref.shape[1]
    wp = out_ref.shape[2]
    cout_p = out_ref.shape[3]
    cin = src1_scr.shape[-1]
    cmid_p = h1_scr.shape[-1]
    th1 = th + 2

    def pool2x2(x):                      # (rows, 2, Wp, 2*Cin) -> (rows, Wp, Cin)
        v = jnp.maximum(x[:, 0], x[:, 1])               # vertical max
        return jnp.maximum(v[..., :cin], v[..., cin:])  # horizontal max

    # ---- stage pooled rows into the zero-bordered conv1 source scratch -----
    src1_scr[:, 0:1, :] = jnp.zeros((th + 4, 1, cin), src1_scr.dtype)
    src1_scr[:, wp + 1:wp + 2, :] = jnp.zeros((th + 4, 1, cin), src1_scr.dtype)
    src1_scr[0:2, 1:1 + wp, :] = pool2x2(x_top_ref[0])
    src1_scr[2:2 + th, 1:1 + wp, :] = pool2x2(x_cur_ref[0])
    src1_scr[2 + th:4 + th, 1:1 + wp, :] = pool2x2(x_bot_ref[0])

    @pl.when(r == 0)                     # image top: halo rows are conv padding
    def _():
        src1_scr[0:2, 1:1 + wp, :] = jnp.zeros((2, wp, cin), src1_scr.dtype)

    @pl.when(r == n_rt - 1)              # image bottom
    def _():
        src1_scr[2 + th:4 + th, 1:1 + wp, :] = jnp.zeros((2, wp, cin),
                                                         src1_scr.dtype)

    def conv3x3(src_ref, w_ref, out_rows, c, n_out):
        """3x3 conv as 9 per-tap matmuls (K = c), f32 accumulation, no concat."""
        acc = jnp.zeros((out_rows * wp, n_out), jnp.float32)
        for dy in range(3):
            for dx in range(3):
                tap = src_ref[dy:dy + out_rows, dx:dx + wp, :]
                tap = tap.reshape(out_rows * wp, c)
                acc = acc + jnp.dot(tap, w_ref[dy * 3 + dx],
                                    preferred_element_type=jnp.float32)
        return acc

    # ---- conv1 + BN + ReLU over TH+2 rows (one extra row each side = conv2 halo)
    h1 = conv3x3(src1_scr, w1_ref, th1, cin, cmid_p)
    h1 = jnp.maximum(h1 * s1_ref[...] + t1_ref[...], 0.0)
    h1 = h1.reshape(th1, wp, cmid_p).astype(h1_scr.dtype)

    h1_scr[:, 0:1, :] = jnp.zeros((th1, 1, cmid_p), h1_scr.dtype)
    h1_scr[:, wp + 1:wp + 2, :] = jnp.zeros((th1, 1, cmid_p), h1_scr.dtype)
    h1_scr[:, 1:1 + wp, :] = h1

    @pl.when(r == 0)                     # conv2's zero padding at the image top
    def _():
        h1_scr[0:1, 1:1 + wp, :] = jnp.zeros((1, wp, cmid_p), h1_scr.dtype)

    @pl.when(r == n_rt - 1)              # ... and bottom
    def _():
        h1_scr[th1 - 1:th1, 1:1 + wp, :] = jnp.zeros((1, wp, cmid_p),
                                                     h1_scr.dtype)

    # ---- conv2 + BN + ReLU over the TH output rows
    y = conv3x3(h1_scr, w2_ref, th, cmid_p, cout_p)
    y = jnp.maximum(y * s2_ref[...] + t2_ref[...], 0.0)
    out_ref[...] = y.reshape(1, th, wp, cout_p).astype(out_ref.dtype)


# ----------------------------------------------------------------------------
# wrapper helpers
# ----------------------------------------------------------------------------
def _round_up(v, m):
    return ((v + m - 1) // m) * m


def _nbytes(a):
    return a.size * a.dtype.itemsize


def _fold_bn(conv_bias, gamma, beta, mean, var, c_pad, eps=1e-5):
    """conv(x)+b then BN(eval)  ==  conv(x)*s + t   (zero-padded to c_pad)."""
    s = gamma / jnp.sqrt(var + eps)
    t = (conv_bias - mean) * s + beta
    pad = (0, c_pad - s.shape[0])
    s = jnp.pad(s, pad).reshape(1, c_pad).astype(jnp.float32)
    t = jnp.pad(t, pad).reshape(1, c_pad).astype(jnp.float32)
    return s, t


def _prep_conv_weight(w_oihw, cin_pad, cout_pad):
    """PyTorch (O, I, 3, 3) -> per-tap layout (9, I_pad, O_pad) bf16."""
    o, i, kh, kw = w_oihw.shape
    w = jnp.transpose(w_oihw, (2, 3, 1, 0)).reshape(kh * kw, i, o)
    w = jnp.pad(w, ((0, 0), (0, cin_pad - i), (0, cout_pad - o)))
    return w.astype(jnp.bfloat16)


def _step_bytes(th, wp, cin, cmid_p, cout_p):
    """Per-grid-step VMEM estimate: pipelined blocks (x2) + scratch + transients."""
    r8 = lambda v: _round_up(v, 8)
    lane = lambda c: _round_up(c, 128)
    th1 = th + 2
    x_cur = th * 2 * wp * 2 * cin * 2                    # bf16 input block
    halos = 2 * (2 * 2 * wp * 2 * cin * 2)
    out_blk = th * wp * cout_p * 2                       # bf16 output block
    pipelined = 2 * (x_cur + halos + out_blk)            # double-buffered
    src1 = (th + 4) * r8(wp + 2) * lane(cin) * 2         # persistent scratch
    h1s = th1 * r8(wp + 2) * cmid_p * 2
    trans = (2 * th1 * wp * cmid_p * 4                   # conv1 acc + post-BN f32
             + th * wp * cout_p * 4                      # conv2 acc
             + th1 * r8(wp) * lane(max(cin, cmid_p)) * 2)  # one tap slice
    return pipelined + src1 + h1s + trans


def _pick_row_tile(hp, wp, cin, cmid_p, cout_p, budget_bytes, max_rows=None):
    """Largest even divisor of hp fitting the budget (never a giant fallback)."""
    cands = [t for t in range(2, hp + 1, 2) if hp % t == 0]
    if max_rows is not None:
        limited = [t for t in cands if t <= max_rows]
        cands = limited or cands
    if not cands:              # hp odd -> single tile; halos fully zeroed in-kernel
        return hp
    fits = [t for t in cands
            if _step_bytes(t, wp, cin, cmid_p, cout_p) <= budget_bytes]
    return max(fits) if fits else min(cands)


# ----------------------------------------------------------------------------
# wrapper
# ----------------------------------------------------------------------------
def down_forward(x_nchw, params, *, max_tile_rows=None):
    """Pallas implementation of `down.forward` (NCHW in / NCHW out, f32)."""
    n, cin, h, w = x_nchw.shape
    hp, wp = h // 2, w // 2
    assert hp >= 2 and wp >= 1, "input too small for MaxPool2d(2) + 3x3 convs"
    cmid = params["w1"].shape[0]
    cout = params["w2"].shape[0]
    cmid_p = _round_up(cmid, 128)
    cout_p = _round_up(cout, 128)

    # NCHW -> NHWC in bf16 (halves DMA bytes; max-pool commutes with the cast),
    # crop to even extent (MaxPool2d floors), expose 2x2 pool taps via a free
    # reshape.
    # TODO(synk): the NCHW<->NHWC transposes exist only for the PyTorch
    # interface; an NHWC end-to-end model would drop both HBM passes.
    x = jnp.transpose(x_nchw.astype(jnp.bfloat16), (0, 2, 3, 1))
    x = x[:, :2 * hp, :2 * wp, :].reshape(n, hp, 2, wp, 2 * cin)

    w1 = _prep_conv_weight(params["w1"], cin, cmid_p)      # (9, cin,    cmid_p)
    w2 = _prep_conv_weight(params["w2"], cmid_p, cout_p)   # (9, cmid_p, cout_p)
    s1, t1 = _fold_bn(params["b1"], params["g1"], params["be1"],
                      params["m1"], params["v1"], cmid_p)
    s2, t2 = _fold_bn(params["b2"], params["g2"], params["be2"],
                      params["m2"], params["v2"], cout_p)

    # ---- per-generation VMEM sizing -----------------------------------------
    try:    # physical VMEM: 128 MiB on v5e/v6e, 64 MiB per TC on v7x
        cap = int(getattr(pltpu.get_tpu_info(), "vmem_capacity_bytes", 64 << 20))
    except Exception:
        cap = 64 << 20
    # resident weights/scales; x2 because BlockSpec inputs are double-buffered
    # even with constant index maps (single-buffering them is a possible
    # further v7x win, left out to keep lowering simple).
    resident = 2 * sum(_nbytes(a) for a in (w1, w2, s1, t1, s2, t2))
    budget = min(max((cap * 3) // 4 - resident, 4 << 20), 48 << 20)

    th = _pick_row_tile(hp, wp, cin, cmid_p, cout_p, budget,
                        max_rows=max_tile_rows)
    assert th == hp or (th % 2 == 0 and hp % th == 0)
    n_rt = hp // th
    hth = th // 2                        # halo blocks are 2 pooled rows each
    max_halo_blk = max(hp // 2 - 1, 0)

    step_b = _step_bytes(th, wp, cin, cmid_p, cout_p)
    vmem_limit = int(min(cap, max(32 << 20, resident + step_b + (8 << 20))))
    # TODO(synk): very large Wp*Cmid_p could overflow v7x's 64 MiB even at TH=2;
    # a width-tiling grid axis (1-column halos) would cover that case.

    x_cur_spec = pl.BlockSpec((1, th, 2, wp, 2 * cin),
                              lambda b, r: (b, r, 0, 0, 0))
    x_top_spec = pl.BlockSpec(
        (1, 2, 2, wp, 2 * cin),
        lambda b, r: (b, jnp.maximum(r * hth - 1, 0), 0, 0, 0))
    x_bot_spec = pl.BlockSpec(
        (1, 2, 2, wp, 2 * cin),
        lambda b, r: (b, jnp.clip((r + 1) * hth, 0, max_halo_blk), 0, 0, 0))

    def resident_spec(arr):              # weights/scales pinned in VMEM
        return pl.BlockSpec(arr.shape, lambda b, r: (0,) * arr.ndim)

    out = pl.pallas_call(
        _down_kernel,
        out_shape=jax.ShapeDtypeStruct((n, hp, wp, cout_p), jnp.bfloat16),
        grid=(n, n_rt),
        in_specs=[x_cur_spec, x_top_spec, x_bot_spec,
                  resident_spec(w1), resident_spec(s1), resident_spec(t1),
                  resident_spec(w2), resident_spec(s2), resident_spec(t2)],
        out_specs=pl.BlockSpec((1, th, wp, cout_p),
                               lambda b, r: (b, r, 0, 0)),
        scratch_shapes=[pltpu.VMEM((th + 4, wp + 2, cin), jnp.bfloat16),
                        pltpu.VMEM((th + 2, wp + 2, cmid_p), jnp.bfloat16)],
        compiler_params=pltpu.CompilerParams(
            dimension_semantics=("parallel", "parallel"),
            vmem_limit_bytes=vmem_limit),
    )(x, x, x, w1, s1, t1, w2, s2, t2)

    # drop lane padding, NHWC -> NCHW, back to f32 (one fused XLA op)
    return jnp.transpose(out[..., :cout], (0, 3, 1, 2)).astype(jnp.float32)


# ----------------------------------------------------------------------------
# pure-JAX reference (eval-mode BN), NCHW throughout
# ----------------------------------------------------------------------------
def reference_forward(x_nchw, params, eps=1e-5):
    x = x_nchw.astype(jnp.float32)
    pooled = jax.lax.reduce_window(
        x, -jnp.inf, jax.lax.max,
        window_dimensions=(1, 1, 2, 2), window_strides=(1, 1, 2, 2),
        padding="VALID")

    def conv_bn_relu(z, w, b, g, be, mu, var):
        y = jax.lax.conv_general_dilated(
            z, w, window_strides=(1, 1), padding="SAME",
            dimension_numbers=("NCHW", "OIHW", "NCHW"),
            precision=jax.lax.Precision.HIGHEST)
        y = y + b[None, :, None, None]
        y = (y - mu[None, :, None, None]) / jnp.sqrt(var + eps)[None, :, None, None]
        y = y * g[None, :, None, None] + be[None, :, None, None]
        return jnp.maximum(y, 0.0)

    h = conv_bn_relu(pooled, params["w1"], params["b1"], params["g1"],
                     params["be1"], params["m1"], params["v1"])
    o = conv_bn_relu(h, params["w2"], params["b2"], params["g2"],
                     params["be2"], params["m2"], params["v2"])
    return o


def make_params(key, in_ch, out_ch):
    ks = jax.random.split(key, 12)
    f32 = jnp.float32
    return {
        "w1": jax.random.normal(ks[0], (out_ch, in_ch, 3, 3), f32) * 0.2,
        "b1": jax.random.normal(ks[1], (out_ch,), f32) * 0.1,
        "g1": 1.0 + 0.1 * jax.random.normal(ks[2], (out_ch,), f32),
        "be1": 0.1 * jax.random.normal(ks[3], (out_ch,), f32),
        "m1": 0.05 * jax.random.normal(ks[4], (out_ch,), f32),
        "v1": 1.0 + 0.1 * jnp.abs(jax.random.normal(ks[5], (out_ch,), f32)),
        "w2": jax.random.normal(ks[6], (out_ch, out_ch, 3, 3), f32) * 0.2,
        "b2": jax.random.normal(ks[7], (out_ch,), f32) * 0.1,
        "g2": 1.0 + 0.1 * jax.random.normal(ks[8], (out_ch,), f32),
        "be2": 0.1 * jax.random.normal(ks[9], (out_ch,), f32),
        "m2": 0.05 * jax.random.normal(ks[10], (out_ch,), f32),
        "v2": 1.0 + 0.1 * jnp.abs(jax.random.normal(ks[11], (out_ch,), f32)),
    }


if __name__ == "__main__":
    key = jax.random.PRNGKey(0)
    k_x, k_x2, k_p = jax.random.split(key, 3)

    N, IN_CH, OUT_CH, H, W = 2, 4, 8, 16, 16
    x = jax.random.normal(k_x, (N, IN_CH, H, W), jnp.float32)     # NCHW input
    params = make_params(k_p, IN_CH, OUT_CH)

    out = jax.block_until_ready(down_forward(x, params))
    ref = jax.block_until_ready(reference_forward(x, params))
    assert out.shape == (N, OUT_CH, H // 2, W // 2), out.shape
    # bf16 matmul operands / bf16 writeback vs an f32 HIGHEST reference.
    np.testing.assert_allclose(np.asarray(out), np.asarray(ref),
                               rtol=5e-2, atol=5e-2)

    # Exercise the multi-row-tile halo path (forced TH=4 -> 4 row tiles).
    x2 = jax.random.normal(k_x2, (1, IN_CH, 32, 16), jnp.float32)
    out2 = jax.block_until_ready(down_forward(x2, params, max_tile_rows=4))
    ref2 = jax.block_until_ready(reference_forward(x2, params))
    np.testing.assert_allclose(np.asarray(out2), np.asarray(ref2),
                               rtol=5e-2, atol=5e-2)

    print("KERNEL_OK")
</pallas_src>

<mosaic_0001>
module attributes {stable_mosaic.version = 11 : i64} {
  func.func @_down_kernel(%arg0: i32, %arg1: i32, %arg2: memref<1x8x2x8x8xbf16, #tpu.memory_space<vmem>>, %arg3: memref<1x2x2x8x8xbf16, #tpu.memory_space<vmem>>, %arg4: memref<1x2x2x8x8xbf16, #tpu.memory_space<vmem>>, %arg5: memref<9x4x128xbf16, #tpu.memory_space<vmem>>, %arg6: memref<1x128xf32, #tpu.memory_space<vmem>>, %arg7: memref<1x128xf32, #tpu.memory_space<vmem>>, %arg8: memref<9x128x128xbf16, #tpu.memory_space<vmem>>, %arg9: memref<1x128xf32, #tpu.memory_space<vmem>>, %arg10: memref<1x128xf32, #tpu.memory_space<vmem>>, %arg11: memref<1x8x8x128xbf16, #tpu.memory_space<vmem>>, %arg12: memref<12x10x4xbf16, #tpu.memory_space<vmem>>, %arg13: memref<10x10x128xbf16, #tpu.memory_space<vmem>>) attributes {dimension_semantics = [#tpu.dimension_semantics<parallel>, #tpu.dimension_semantics<parallel>], iteration_bounds = array<i64: 2, 1>, scalar_prefetch = 0 : i64, scratch_operands = 2 : i64, tpu.core_type = #tpu.core_type<tc>, window_params = [{transform_indices = @transform_0, window_bounds = array<i64: 1, 8, 2, 8, 8>}, {transform_indices = @transform_1, window_bounds = array<i64: 1, 2, 2, 8, 8>}, {transform_indices = @transform_2, window_bounds = array<i64: 1, 2, 2, 8, 8>}, {pipeline_mode = #tpu.pipeline_mode<synchronous>, transform_indices = @transform_3, window_bounds = array<i64: 9, 4, 128>}, {pipeline_mode = #tpu.pipeline_mode<synchronous>, transform_indices = @transform_4, window_bounds = array<i64: 1, 128>}, {pipeline_mode = #tpu.pipeline_mode<synchronous>, transform_indices = @transform_5, window_bounds = array<i64: 1, 128>}, {pipeline_mode = #tpu.pipeline_mode<synchronous>, transform_indices = @transform_6, window_bounds = array<i64: 9, 128, 128>}, {pipeline_mode = #tpu.pipeline_mode<synchronous>, transform_indices = @transform_7, window_bounds = array<i64: 1, 128>}, {pipeline_mode = #tpu.pipeline_mode<synchronous>, transform_indices = @transform_8, window_bounds = array<i64: 1, 128>}, {transform_indices = @transform_9, window_bounds = array<i64: 1, 8, 8, 128>}]} {
    %cst = arith.constant 0.000000e+00 : bf16
    %0 = vector.broadcast %cst : bf16 to vector<12x1x4xbf16>
    %c0 = arith.constant 0 : index
    %c0_0 = arith.constant 0 : index
    %c0_1 = arith.constant 0 : index
    %1 = vector.load %arg12[%c0, %c0_0, %c0_1] : memref<12x10x4xbf16, #tpu.memory_space<vmem>>, vector<12x1x4xbf16>
    tpu.vector_store %arg12[%c0, %c0_0, %c0_1], %0 {strides = array<i32>} : memref<12x10x4xbf16, #tpu.memory_space<vmem>>, vector<12x1x4xbf16>,
    %cst_2 = arith.constant 0.000000e+00 : bf16
    %2 = vector.broadcast %cst_2 : bf16 to vector<12x1x4xbf16>
    %c0_3 = arith.constant 0 : index
    %c9 = arith.constant 9 : index
    %c0_4 = arith.constant 0 : index
    %3 = vector.load %arg12[%c0_3, %c9, %c0_4] : memref<12x10x4xbf16, #tpu.memory_space<vmem>>, vector<12x1x4xbf16>
    tpu.vector_store %arg12[%c0_3, %c9, %c0_4], %2 {strides = array<i32>} : memref<12x10x4xbf16, #tpu.memory_space<vmem>>, vector<12x1x4xbf16>,
    %c0_5 = arith.constant 0 : index
    %c0_6 = arith.constant 0 : index
    %c0_7 = arith.constant 0 : index
    %c0_8 = arith.constant 0 : index
    %c0_9 = arith.constant 0 : index
    %4 = vector.load %arg3[%c0_5, %c0_6, %c0_7, %c0_8, %c0_9] : memref<1x2x2x8x8xbf16, #tpu.memory_space<vmem>>, vector<1x2x2x8x8xbf16>
    %5 = vector.shape_cast %4 : vector<1x2x2x8x8xbf16> to vector<2x2x8x8xbf16>
    %6 = vector.extract_strided_slice %5 {offsets = [0, 0, 0, 0], sizes = [2, 1, 8, 8], strides = [1, 1, 1, 1]} : vector<2x2x8x8xbf16> to vector<2x1x8x8xbf16>
    %7 = vector.shape_cast %6 : vector<2x1x8x8xbf16> to vector<2x8x8xbf16>
    %8 = vector.extract_strided_slice %5 {offsets = [0, 1, 0, 0], sizes = [2, 1, 8, 8], strides = [1, 1, 1, 1]} : vector<2x2x8x8xbf16> to vector<2x1x8x8xbf16>
    %9 = vector.shape_cast %8 : vector<2x1x8x8xbf16> to vector<2x8x8xbf16>
    %10 = arith.maximumf %7, %9 : vector<2x8x8xbf16>
    %11 = vector.extract_strided_slice %10 {offsets = [0, 0, 0], sizes = [2, 8, 4], strides = [1, 1, 1]} : vector<2x8x8xbf16> to vector<2x8x4xbf16>
    %12 = vector.extract_strided_slice %10 {offsets = [0, 0, 4], sizes = [2, 8, 4], strides = [1, 1, 1]} : vector<2x8x8xbf16> to vector<2x8x4xbf16>
    %13 = arith.maximumf %11, %12 : vector<2x8x4xbf16>
    %c0_10 = arith.constant 0 : index
    %c1 = arith.constant 1 : index
    %c0_11 = arith.constant 0 : index
    %14 = vector.load %arg12[%c0_10, %c1, %c0_11] : memref<12x10x4xbf16, #tpu.memory_space<vmem>>, vector<2x8x4xbf16>
    tpu.vector_store %arg12[%c0_10, %c1, %c0_11], %13 {strides = array<i32>} : memref<12x10x4xbf16, #tpu.memory_space<vmem>>, vector<2x8x4xbf16>,
    %c0_12 = arith.constant 0 : index
    %c0_13 = arith.constant 0 : index
    %c0_14 = arith.constant 0 : index
    %c0_15 = arith.constant 0 : index
    %c0_16 = arith.constant 0 : index
    %15 = vector.load %arg2[%c0_12, %c0_13, %c0_14, %c0_15, %c0_16] : memref<1x8x2x8x8xbf16, #tpu.memory_space<vmem>>, vector<1x8x2x8x8xbf16>
    %16 = vector.shape_cast %15 : vector<1x8x2x8x8xbf16> to vector<8x2x8x8xbf16>
    %17 = vector.extract_strided_slice %16 {offsets = [0, 0, 0, 0], sizes = [8, 1, 8, 8], strides = [1, 1, 1, 1]} : vector<8x2x8x8xbf16> to vector<8x1x8x8xbf16>
    %18 = vector.shape_cast %17 : vector<8x1x8x8xbf16> to vector<8x8x8xbf16>
    %19 = vector.extract_strided_slice %16 {offsets = [0, 1, 0, 0], sizes = [8, 1, 8, 8], strides = [1, 1, 1, 1]} : vector<8x2x8x8xbf16> to vector<8x1x8x8xbf16>
    %20 = vector.shape_cast %19 : vector<8x1x8x8xbf16> to vector<8x8x8xbf16>
    %21 = arith.maximumf %18, %20 : vector<8x8x8xbf16>
    %22 = vector.extract_strided_slice %21 {offsets = [0, 0, 0], sizes = [8, 8, 4], strides = [1, 1, 1]} : vector<8x8x8xbf16> to vector<8x8x4xbf16>
    %23 = vector.extract_strided_slice %21 {offsets = [0, 0, 4], sizes = [8, 8, 4], strides = [1, 1, 1]} : vector<8x8x8xbf16> to vector<8x8x4xbf16>
    %24 = arith.maximumf %22, %23 : vector<8x8x4xbf16>
    %c2 = arith.constant 2 : index
    %c1_17 = arith.constant 1 : index
    %c0_18 = arith.constant 0 : index
    %25 = vector.load %arg12[%c2, %c1_17, %c0_18] : memref<12x10x4xbf16, #tpu.memory_space<vmem>>, vector<8x8x4xbf16>
    tpu.vector_store %arg12[%c2, %c1_17, %c0_18], %24 {strides = array<i32>} : memref<12x10x4xbf16, #tpu.memory_space<vmem>>, vector<8x8x4xbf16>,
    %c0_19 = arith.constant 0 : index
    %c0_20 = arith.constant 0 : index
    %c0_21 = arith.constant 0 : index
    %c0_22 = arith.constant 0 : index
    %c0_23 = arith.constant 0 : index
    %26 = vector.load %arg4[%c0_19, %c0_20, %c0_21, %c0_22, %c0_23] : memref<1x2x2x8x8xbf16, #tpu.memory_space<vmem>>, vector<1x2x2x8x8xbf16>
    %27 = vector.shape_cast %26 : vector<1x2x2x8x8xbf16> to vector<2x2x8x8xbf16>
    %28 = vector.extract_strided_slice %27 {offsets = [0, 0, 0, 0], sizes = [2, 1, 8, 8], strides = [1, 1, 1, 1]} : vector<2x2x8x8xbf16> to vector<2x1x8x8xbf16>
    %29 = vector.shape_cast %28 : vector<2x1x8x8xbf16> to vector<2x8x8xbf16>
    %30 = vector.extract_strided_slice %27 {offsets = [0, 1, 0, 0], sizes = [2, 1, 8, 8], strides = [1, 1, 1, 1]} : vector<2x2x8x8xbf16> to vector<2x1x8x8xbf16>
    %31 = vector.shape_cast %30 : vector<2x1x8x8xbf16> to vector<2x8x8xbf16>
    %32 = arith.maximumf %29, %31 : vector<2x8x8xbf16>
    %33 = vector.extract_strided_slice %32 {offsets = [0, 0, 0], sizes = [2, 8, 4], strides = [1, 1, 1]} : vector<2x8x8xbf16> to vector<2x8x4xbf16>
    %34 = vector.extract_strided_slice %32 {offsets = [0, 0, 4], sizes = [2, 8, 4], strides = [1, 1, 1]} : vector<2x8x8xbf16> to vector<2x8x4xbf16>
    %35 = arith.maximumf %33, %34 : vector<2x8x4xbf16>
    %c10 = arith.constant 10 : index
    %c1_24 = arith.constant 1 : index
    %c0_25 = arith.constant 0 : index
    %36 = vector.load %arg12[%c10, %c1_24, %c0_25] : memref<12x10x4xbf16, #tpu.memory_space<vmem>>, vector<2x8x4xbf16>
    tpu.vector_store %arg12[%c10, %c1_24, %c0_25], %35 {strides = array<i32>} : memref<12x10x4xbf16, #tpu.memory_space<vmem>>, vector<2x8x4xbf16>,
    %c0_i32 = arith.constant 0 : i32
    %37 = arith.cmpi eq, %arg1, %c0_i32 : i32
    %38 = arith.extui %37 : i1 to i32
    %c0_i32_26 = arith.constant 0 : i32
    %39 = arith.cmpi ne, %38, %c0_i32_26 : i32
    scf.if %39 {
      %cst_180 = arith.constant 0.000000e+00 : bf16
      %185 = vector.broadcast %cst_180 : bf16 to vector<2x8x4xbf16>
      %c0_181 = arith.constant 0 : index
      %c1_182 = arith.constant 1 : index
      %c0_183 = arith.constant 0 : index
      %186 = vector.load %arg12[%c0_181, %c1_182, %c0_183] : memref<12x10x4xbf16, #tpu.memory_space<vmem>>, vector<2x8x4xbf16>
      tpu.vector_store %arg12[%c0_181, %c1_182, %c0_183], %185 {strides = array<i32>} : memref<12x10x4xbf16, #tpu.memory_space<vmem>>, vector<2x8x4xbf16>,
    } else {
    }
    %c0_i32_27 = arith.constant 0 : i32
    %40 = arith.cmpi eq, %arg1, %c0_i32_27 : i32
    %41 = arith.extui %40 : i1 to i32
    %c0_i32_28 = arith.constant 0 : i32
    %42 = arith.cmpi ne, %41, %c0_i32_28 : i32
    scf.if %42 {
      %cst_180 = arith.constant 0.000000e+00 : bf16
      %185 = vector.broadcast %cst_180 : bf16 to vector<2x8x4xbf16>
      %c10_181 = arith.constant 10 : index
      %c1_182 = arith.constant 1 : index
      %c0_183 = arith.constant 0 : index
      %186 = vector.load %arg12[%c10_181, %c1_182, %c0_183] : memref<12x10x4xbf16, #tpu.memory_space<vmem>>, vector<2x8x4xbf16>
      tpu.vector_store %arg12[%c10_181, %c1_182, %c0_183], %185 {strides = array<i32>} : memref<12x10x4xbf16, #tpu.memory_space<vmem>>, vector<2x8x4xbf16>,
    } else {
    }
    %cst_29 = arith.constant 0.000000e+00 : f32
    %43 = vector.broadcast %cst_29 : f32 to vector<80x128xf32>
    %c0_30 = arith.constant 0 : index
    %c0_31 = arith.constant 0 : index
    %c0_32 = arith.constant 0 : index
    %44 = vector.load %arg12[%c0_30, %c0_31, %c0_32] : memref<12x10x4xbf16, #tpu.memory_space<vmem>>, vector<10x8x4xbf16>
    %45 = vector.shape_cast %44 : vector<10x8x4xbf16> to vector<80x4xbf16>
    %c0_33 = arith.constant 0 : index
    %c0_34 = arith.constant 0 : index
    %c0_35 = arith.constant 0 : index
    %46 = vector.load %arg5[%c0_33, %c0_34, %c0_35] : memref<9x4x128xbf16, #tpu.memory_space<vmem>>, vector<1x4x128xbf16>
    %47 = vector.shape_cast %46 : vector<1x4x128xbf16> to vector<4x128xbf16>
    %cst_36 = arith.constant dense<0.000000e+00> : vector<80x128xf32>
    %48 = tpu.matmul %45, %47, %cst_36 {dimension_numbers = #tpu.dot_dimension_numbers<[1], [0], [0], [1], [0, 0, 1, 1], [], []>} : vector<80x4xbf16>, vector<4x128xbf16>, vector<80x128xf32> -> vector<80x128xf32>
    %49 = arith.addf %43, %48 : vector<80x128xf32>
    %c0_37 = arith.constant 0 : index
    %c1_38 = arith.constant 1 : index
    %c0_39 = arith.constant 0 : index
    %50 = vector.load %arg12[%c0_37, %c1_38, %c0_39] : memref<12x10x4xbf16, #tpu.memory_space<vmem>>, vector<10x8x4xbf16>
    %51 = vector.shape_cast %50 : vector<10x8x4xbf16> to vector<80x4xbf16>
    %c1_40 = arith.constant 1 : index
    %c0_41 = arith.constant 0 : index
    %c0_42 = arith.constant 0 : index
    %52 = vector.load %arg5[%c1_40, %c0_41, %c0_42] : memref<9x4x128xbf16, #tpu.memory_space<vmem>>, vector<1x4x128xbf16>
    %53 = vector.shape_cast %52 : vector<1x4x128xbf16> to vector<4x128xbf16>
    %cst_43 = arith.constant dense<0.000000e+00> : vector<80x128xf32>
    %54 = tpu.matmul %51, %53, %cst_43 {dimension_numbers = #tpu.dot_dimension_numbers<[1], [0], [0], [1], [0, 0, 1, 1], [], []>} : vector<80x4xbf16>, vector<4x128xbf16>, vector<80x128xf32> -> vector<80x128xf32>
    %55 = arith.addf %49, %54 : vector<80x128xf32>
    %c0_44 = arith.constant 0 : index
    %c2_45 = arith.constant 2 : index
    %c0_46 = arith.constant 0 : index
    %56 = vector.load %arg12[%c0_44, %c2_45, %c0_46] : memref<12x10x4xbf16, #tpu.memory_space<vmem>>, vector<10x8x4xbf16>
    %57 = vector.shape_cast %56 : vector<10x8x4xbf16> to vector<80x4xbf16>
    %c2_47 = arith.constant 2 : index
    %c0_48 = arith.constant 0 : index
    %c0_49 = arith.constant 0 : index
    %58 = vector.load %arg5[%c2_47, %c0_48, %c0_49] : memref<9x4x128xbf16, #tpu.memory_space<vmem>>, vector<1x4x128xbf16>
    %59 = vector.shape_cast %58 : vector<1x4x128xbf16> to vector<4x128xbf16>
    %cst_50 = arith.constant dense<0.000000e+00> : vector<80x128xf32>
    %60 = tpu.matmul %57, %59, %cst_50 {dimension_numbers = #tpu.dot_dimension_numbers<[1], [0], [0], [1], [0, 0, 1, 1], [], []>} : vector<80x4xbf16>, vector<4x128xbf16>, vector<80x128xf32> -> vector<80x128xf32>
    %61 = arith.addf %55, %60 : vector<80x128xf32>
    %c1_51 = arith.constant 1 : index
    %c0_52 = arith.constant 0 : index
    %c0_53 = arith.constant 0 : index
    %62 = vector.load %arg12[%c1_51, %c0_52, %c0_53] : memref<12x10x4xbf16, #tpu.memory_space<vmem>>, vector<10x8x4xbf16>
    %63 = vector.shape_cast %62 : vector<10x8x4xbf16> to vector<80x4xbf16>
    %c3 = arith.constant 3 : index
    %c0_54 = arith.constant 0 : index
    %c0_55 = arith.constant 0 : index
    %64 = vector.load %arg5[%c3, %c0_54, %c0_55] : memref<9x4x128xbf16, #tpu.memory_space<vmem>>, vector<1x4x128xbf16>
    %65 = vector.shape_cast %64 : vector<1x4x128xbf16> to vector<4x128xbf16>
    %cst_56 = arith.constant dense<0.000000e+00> : vector<80x128xf32>
    %66 = tpu.matmul %63, %65, %cst_56 {dimension_numbers = #tpu.dot_dimension_numbers<[1], [0], [0], [1], [0, 0, 1, 1], [], []>} : vector<80x4xbf16>, vector<4x128xbf16>, vector<80x128xf32> -> vector<80x128xf32>
    %67 = arith.addf %61, %66 : vector<80x128xf32>
    %c1_57 = arith.constant 1 : index
    %c1_58 = arith.constant 1 : index
    %c0_59 = arith.constant 0 : index
    %68 = vector.load %arg12[%c1_57, %c1_58, %c0_59] : memref<12x10x4xbf16, #tpu.memory_space<vmem>>, vector<10x8x4xbf16>
    %69 = vector.shape_cast %68 : vector<10x8x4xbf16> to vector<80x4xbf16>
    %c4 = arith.constant 4 : index
    %c0_60 = arith.constant 0 : index
    %c0_61 = arith.constant 0 : index
    %70 = vector.load %arg5[%c4, %c0_60, %c0_61] : memref<9x4x128xbf16, #tpu.memory_space<vmem>>, vector<1x4x128xbf16>
    %71 = vector.shape_cast %70 : vector<1x4x128xbf16> to vector<4x128xbf16>
    %cst_62 = arith.constant dense<0.000000e+00> : vector<80x128xf32>
    %72 = tpu.matmul %69, %71, %cst_62 {dimension_numbers = #tpu.dot_dimension_numbers<[1], [0], [0], [1], [0, 0, 1, 1], [], []>} : vector<80x4xbf16>, vector<4x128xbf16>, vector<80x128xf32> -> vector<80x128xf32>
    %73 = arith.addf %67, %72 : vector<80x128xf32>
    %c1_63 = arith.constant 1 : index
    %c2_64 = arith.constant 2 : index
    %c0_65 = arith.constant 0 : index
    %74 = vector.load %arg12[%c1_63, %c2_64, %c0_65] : memref<12x10x4xbf16, #tpu.memory_space<vmem>>, vector<10x8x4xbf16>
    %75 = vector.shape_cast %74 : vector<10x8x4xbf16> to vector<80x4xbf16>
    %c5 = arith.constant 5 : index
    %c0_66 = arith.constant 0 : index
    %c0_67 = arith.constant 0 : index
    %76 = vector.load %arg5[%c5, %c0_66, %c0_67] : memref<9x4x128xbf16, #tpu.memory_space<vmem>>, vector<1x4x128xbf16>
    %77 = vector.shape_cast %76 : vector<1x4x128xbf16> to vector<4x128xbf16>
    %cst_68 = arith.constant dense<0.000000e+00> : vector<80x128xf32>
    %78 = tpu.matmul %75, %77, %cst_68 {dimension_numbers = #tpu.dot_dimension_numbers<[1], [0], [0], [1], [0, 0, 1, 1], [], []>} : vector<80x4xbf16>, vector<4x128xbf16>, vector<80x128xf32> -> vector<80x128xf32>
    %79 = arith.addf %73, %78 : vector<80x128xf32>
    %c2_69 = arith.constant 2 : index
    %c0_70 = arith.constant 0 : index
    %c0_71 = arith.constant 0 : index
    %80 = vector.load %arg12[%c2_69, %c0_70, %c0_71] : memref<12x10x4xbf16, #tpu.memory_space<vmem>>, vector<10x8x4xbf16>
    %81 = vector.shape_cast %80 : vector<10x8x4xbf16> to vector<80x4xbf16>
    %c6 = arith.constant 6 : index
    %c0_72 = arith.constant 0 : index
    %c0_73 = arith.constant 0 : index
    %82 = vector.load %arg5[%c6, %c0_72, %c0_73] : memref<9x4x128xbf16, #tpu.memory_space<vmem>>, vector<1x4x128xbf16>
    %83 = vector.shape_cast %82 : vector<1x4x128xbf16> to vector<4x128xbf16>
    %cst_74 = arith.constant dense<0.000000e+00> : vector<80x128xf32>
    %84 = tpu.matmul %81, %83, %cst_74 {dimension_numbers = #tpu.dot_dimension_numbers<[1], [0], [0], [1], [0, 0, 1, 1], [], []>} : vector<80x4xbf16>, vector<4x128xbf16>, vector<80x128xf32> -> vector<80x128xf32>
    %85 = arith.addf %79, %84 : vector<80x128xf32>
    %c2_75 = arith.constant 2 : index
    %c1_76 = arith.constant 1 : index
    %c0_77 = arith.constant 0 : index
    %86 = vector.load %arg12[%c2_75, %c1_76, %c0_77] : memref<12x10x4xbf16, #tpu.memory_space<vmem>>, vector<10x8x4xbf16>
    %87 = vector.shape_cast %86 : vector<10x8x4xbf16> to vector<80x4xbf16>
    %c7 = arith.constant 7 : index
    %c0_78 = arith.constant 0 : index
    %c0_79 = arith.constant 0 : index
    %88 = vector.load %arg5[%c7, %c0_78, %c0_79] : memref<9x4x128xbf16, #tpu.memory_space<vmem>>, vector<1x4x128xbf16>
    %89 = vector.shape_cast %88 : vector<1x4x128xbf16> to vector<4x128xbf16>
    %cst_80 = arith.constant dense<0.000000e+00> : vector<80x128xf32>
    %90 = tpu.matmul %87, %89, %cst_80 {dimension_numbers = #tpu.dot_dimension_numbers<[1], [0], [0], [1], [0, 0, 1, 1], [], []>} : vector<80x4xbf16>, vector<4x128xbf16>, vector<80x128xf32> -> vector<80x128xf32>
    %91 = arith.addf %85, %90 : vector<80x128xf32>
    %c2_81 = arith.constant 2 : index
    %c2_82 = arith.constant 2 : index
    %c0_83 = arith.constant 0 : index
    %92 = vector.load %arg12[%c2_81, %c2_82, %c0_83] : memref<12x10x4xbf16, #tpu.memory_space<vmem>>, vector<10x8x4xbf16>
    %93 = vector.shape_cast %92 : vector<10x8x4xbf16> to vector<80x4xbf16>
    %c8 = arith.constant 8 : index
    %c0_84 = arith.constant 0 : index
    %c0_85 = arith.constant 0 : index
    %94 = vector.load %arg5[%c8, %c0_84, %c0_85] : memref<9x4x128xbf16, #tpu.memory_space<vmem>>, vector<1x4x128xbf16>
    %95 = vector.shape_cast %94 : vector<1x4x128xbf16> to vector<4x128xbf16>
    %cst_86 = arith.constant dense<0.000000e+00> : vector<80x128xf32>
    %96 = tpu.matmul %93, %95, %cst_86 {dimension_numbers = #tpu.dot_dimension_numbers<[1], [0], [0], [1], [0, 0, 1, 1], [], []>} : vector<80x4xbf16>, vector<4x128xbf16>, vector<80x128xf32> -> vector<80x128xf32>
    %97 = arith.addf %91, %96 : vector<80x128xf32>
    %c0_87 = arith.constant 0 : index
    %c0_88 = arith.constant 0 : index
    %98 = vector.load %arg6[%c0_87, %c0_88] : memref<1x128xf32, #tpu.memory_space<vmem>>, vector<1x128xf32>
    %99 = vector.broadcast %98 : vector<1x128xf32> to vector<80x128xf32>
    %100 = arith.mulf %97, %99 : vector<80x128xf32>
    %c0_89 = arith.constant 0 : index
    %c0_90 = arith.constant 0 : index
    %101 = vector.load %arg7[%c0_89, %c0_90] : memref<1x128xf32, #tpu.memory_space<vmem>>, vector<1x128xf32>
    %102 = vector.broadcast %101 : vector<1x128xf32> to vector<80x128xf32>
    %103 = arith.addf %100, %102 : vector<80x128xf32>
    %cst_91 = arith.constant 0.000000e+00 : f32
    %104 = vector.broadcast %cst_91 : f32 to vector<80x128xf32>
    %105 = arith.maximumf %103, %104 : vector<80x128xf32>
    %106 = vector.shape_cast %105 : vector<80x128xf32> to vector<10x8x128xf32>
    %107 = arith.truncf %106 : vector<10x8x128xf32> to vector<10x8x128xbf16>
    %cst_92 = arith.constant 0.000000e+00 : bf16
    %108 = vector.broadcast %cst_92 : bf16 to vector<10x1x128xbf16>
    %c0_93 = arith.constant 0 : index
    %c0_94 = arith.constant 0 : index
    %c0_95 = arith.constant 0 : index
    %109 = vector.load %arg13[%c0_93, %c0_94, %c0_95] : memref<10x10x128xbf16, #tpu.memory_space<vmem>>, vector<10x1x128xbf16>
    tpu.vector_store %arg13[%c0_93, %c0_94, %c0_95], %108 {strides = array<i32>} : memref<10x10x128xbf16, #tpu.memory_space<vmem>>, vector<10x1x128xbf16>,
    %cst_96 = arith.constant 0.000000e+00 : bf16
    %110 = vector.broadcast %cst_96 : bf16 to vector<10x1x128xbf16>
    %c0_97 = arith.constant 0 : index
    %c9_98 = arith.constant 9 : index
    %c0_99 = arith.constant 0 : index
    %111 = vector.load %arg13[%c0_97, %c9_98, %c0_99] : memref<10x10x128xbf16, #tpu.memory_space<vmem>>, vector<10x1x128xbf16>
    tpu.vector_store %arg13[%c0_97, %c9_98, %c0_99], %110 {strides = array<i32>} : memref<10x10x128xbf16, #tpu.memory_space<vmem>>, vector<10x1x128xbf16>,
    %c0_100 = arith.constant 0 : index
    %c1_101 = arith.constant 1 : index
    %c0_102 = arith.constant 0 : index
    %112 = vector.load %arg13[%c0_100, %c1_101, %c0_102] : memref<10x10x128xbf16, #tpu.memory_space<vmem>>, vector<10x8x128xbf16>
    tpu.vector_store %arg13[%c0_100, %c1_101, %c0_102], %107 {strides = array<i32>} : memref<10x10x128xbf16, #tpu.memory_space<vmem>>, vector<10x8x128xbf16>,
    %c0_i32_103 = arith.constant 0 : i32
    %113 = arith.cmpi eq, %arg1, %c0_i32_103 : i32
    %114 = arith.extui %113 : i1 to i32
    %c0_i32_104 = arith.constant 0 : i32
    %115 = arith.cmpi ne, %114, %c0_i32_104 : i32
    scf.if %115 {
      %cst_180 = arith.constant 0.000000e+00 : bf16
      %185 = vector.broadcast %cst_180 : bf16 to vector<1x8x128xbf16>
      %c0_181 = arith.constant 0 : index
      %c1_182 = arith.constant 1 : index
      %c0_183 = arith.constant 0 : index
      %186 = vector.load %arg13[%c0_181, %c1_182, %c0_183] : memref<10x10x128xbf16, #tpu.memory_space<vmem>>, vector<1x8x128xbf16>
      tpu.vector_store %arg13[%c0_181, %c1_182, %c0_183], %185 {strides = array<i32>} : memref<10x10x128xbf16, #tpu.memory_space<vmem>>, vector<1x8x128xbf16>,
    } else {
    }
    %c0_i32_105 = arith.constant 0 : i32
    %116 = arith.cmpi eq, %arg1, %c0_i32_105 : i32
    %117 = arith.extui %116 : i1 to i32
    %c0_i32_106 = arith.constant 0 : i32
    %118 = arith.cmpi ne, %117, %c0_i32_106 : i32
    scf.if %118 {
      %cst_180 = arith.constant 0.000000e+00 : bf16
      %185 = vector.broadcast %cst_180 : bf16 to vector<1x8x128xbf16>
      %c9_181 = arith.constant 9 : index
      %c1_182 = arith.constant 1 : index
      %c0_183 = arith.constant 0 : index
      %186 = vector.load %arg13[%c9_181, %c1_182, %c0_183] : memref<10x10x128xbf16, #tpu.memory_space<vmem>>, vector<1x8x128xbf16>
      tpu.vector_store %arg13[%c9_181, %c1_182, %c0_183], %185 {strides = array<i32>} : memref<10x10x128xbf16, #tpu.memory_space<vmem>>, vector<1x8x128xbf16>,
    } else {
    }
    %cst_107 = arith.constant 0.000000e+00 : f32
    %119 = vector.broadcast %cst_107 : f32 to vector<64x128xf32>
    %c0_108 = arith.constant 0 : index
    %c0_109 = arith.constant 0 : index
    %c0_110 = arith.constant 0 : index
    %120 = vector.load %arg13[%c0_108, %c0_109, %c0_110] : memref<10x10x128xbf16, #tpu.memory_space<vmem>>, vector<8x8x128xbf16>
    %121 = vector.shape_cast %120 : vector<8x8x128xbf16> to vector<64x128xbf16>
    %c0_111 = arith.constant 0 : index
    %c0_112 = arith.constant 0 : index
    %c0_113 = arith.constant 0 : index
    %122 = vector.load %arg8[%c0_111, %c0_112, %c0_113] : memref<9x128x128xbf16, #tpu.memory_space<vmem>>, vector<1x128x128xbf16>
    %123 = vector.shape_cast %122 : vector<1x128x128xbf16> to vector<128x128xbf16>
    %cst_114 = arith.constant dense<0.000000e+00> : vector<64x128xf32>
    %124 = tpu.matmul %121, %123, %cst_114 {dimension_numbers = #tpu.dot_dimension_numbers<[1], [0], [0], [1], [0, 0, 1, 1], [], []>} : vector<64x128xbf16>, vector<128x128xbf16>, vector<64x128xf32> -> vector<64x128xf32>
    %125 = arith.addf %119, %124 : vector<64x128xf32>
    %c0_115 = arith.constant 0 : index
    %c1_116 = arith.constant 1 : index
    %c0_117 = arith.constant 0 : index
    %126 = vector.load %arg13[%c0_115, %c1_116, %c0_117] : memref<10x10x128xbf16, #tpu.memory_space<vmem>>, vector<8x8x128xbf16>
    %127 = vector.shape_cast %126 : vector<8x8x128xbf16> to vector<64x128xbf16>
    %c1_118 = arith.constant 1 : index
    %c0_119 = arith.constant 0 : index
    %c0_120 = arith.constant 0 : index
    %128 = vector.load %arg8[%c1_118, %c0_119, %c0_120] : memref<9x128x128xbf16, #tpu.memory_space<vmem>>, vector<1x128x128xbf16>
    %129 = vector.shape_cast %128 : vector<1x128x128xbf16> to vector<128x128xbf16>
    %cst_121 = arith.constant dense<0.000000e+00> : vector<64x128xf32>
    %130 = tpu.matmul %127, %129, %cst_121 {dimension_numbers = #tpu.dot_dimension_numbers<[1], [0], [0], [1], [0, 0, 1, 1], [], []>} : vector<64x128xbf16>, vector<128x128xbf16>, vector<64x128xf32> -> vector<64x128xf32>
    %131 = arith.addf %125, %130 : vector<64x128xf32>
    %c0_122 = arith.constant 0 : index
    %c2_123 = arith.constant 2 : index
    %c0_124 = arith.constant 0 : index
    %132 = vector.load %arg13[%c0_122, %c2_123, %c0_124] : memref<10x10x128xbf16, #tpu.memory_space<vmem>>, vector<8x8x128xbf16>
    %133 = vector.shape_cast %132 : vector<8x8x128xbf16> to vector<64x128xbf16>
    %c2_125 = arith.constant 2 : index
    %c0_126 = arith.constant 0 : index
    %c0_127 = arith.constant 0 : index
    %134 = vector.load %arg8[%c2_125, %c0_126, %c0_127] : memref<9x128x128xbf16, #tpu.memory_space<vmem>>, vector<1x128x128xbf16>
    %135 = vector.shape_cast %134 : vector<1x128x128xbf16> to vector<128x128xbf16>
    %cst_128 = arith.constant dense<0.000000e+00> : vector<64x128xf32>
    %136 = tpu.matmul %133, %135, %cst_128 {dimension_numbers = #tpu.dot_dimension_numbers<[1], [0], [0], [1], [0, 0, 1, 1], [], []>} : vector<64x128xbf16>, vector<128x128xbf16>, vector<64x128xf32> -> vector<64x128xf32>
    %137 = arith.addf %131, %136 : vector<64x128xf32>
    %c1_129 = arith.constant 1 : index
    %c0_130 = arith.constant 0 : index
    %c0_131 = arith.constant 0 : index
    %138 = vector.load %arg13[%c1_129, %c0_130, %c0_131] : memref<10x10x128xbf16, #tpu.memory_space<vmem>>, vector<8x8x128xbf16>
    %139 = vector.shape_cast %138 : vector<8x8x128xbf16> to vector<64x128xbf16>
    %c3_132 = arith.constant 3 : index
    %c0_133 = arith.constant 0 : index
    %c0_134 = arith.constant 0 : index
    %140 = vector.load %arg8[%c3_132, %c0_133, %c0_134] : memref<9x128x128xbf16, #tpu.memory_space<vmem>>, vector<1x128x128xbf16>
    %141 = vector.shape_cast %140 : vector<1x128x128xbf16> to vector<128x128xbf16>
    %cst_135 = arith.constant dense<0.000000e+00> : vector<64x128xf32>
    %142 = tpu.matmul %139, %141, %cst_135 {dimension_numbers = #tpu.dot_dimension_numbers<[1], [0], [0], [1], [0, 0, 1, 1], [], []>} : vector<64x128xbf16>, vector<128x128xbf16>, vector<64x128xf32> -> vector<64x128xf32>
    %143 = arith.addf %137, %142 : vector<64x128xf32>
    %c1_136 = arith.constant 1 : index
    %c1_137 = arith.constant 1 : index
    %c0_138 = arith.constant 0 : index
    %144 = vector.load %arg13[%c1_136, %c1_137, %c0_138] : memref<10x10x128xbf16, #tpu.memory_space<vmem>>, vector<8x8x128xbf16>
    %145 = vector.shape_cast %144 : vector<8x8x128xbf16> to vector<64x128xbf16>
    %c4_139 = arith.constant 4 : index
    %c0_140 = arith.constant 0 : index
    %c0_141 = arith.constant 0 : index
    %146 = vector.load %arg8[%c4_139, %c0_140, %c0_141] : memref<9x128x128xbf16, #tpu.memory_space<vmem>>, vector<1x128x128xbf16>
    %147 = vector.shape_cast %146 : vector<1x128x128xbf16> to vector<128x128xbf16>
    %cst_142 = arith.constant dense<0.000000e+00> : vector<64x128xf32>
    %148 = tpu.matmul %145, %147, %cst_142 {dimension_numbers = #tpu.dot_dimension_numbers<[1], [0], [0], [1], [0, 0, 1, 1], [], []>} : vector<64x128xbf16>, vector<128x128xbf16>, vector<64x128xf32> -> vector<64x128xf32>
    %149 = arith.addf %143, %148 : vector<64x128xf32>
    %c1_143 = arith.constant 1 : index
    %c2_144 = arith.constant 2 : index
    %c0_145 = arith.constant 0 : index
    %150 = vector.load %arg13[%c1_143, %c2_144, %c0_145] : memref<10x10x128xbf16, #tpu.memory_space<vmem>>, vector<8x8x128xbf16>
    %151 = vector.shape_cast %150 : vector<8x8x128xbf16> to vector<64x128xbf16>
    %c5_146 = arith.constant 5 : index
    %c0_147 = arith.constant 0 : index
    %c0_148 = arith.constant 0 : index
    %152 = vector.load %arg8[%c5_146, %c0_147, %c0_148] : memref<9x128x128xbf16, #tpu.memory_space<vmem>>, vector<1x128x128xbf16>
    %153 = vector.shape_cast %152 : vector<1x128x128xbf16> to vector<128x128xbf16>
    %cst_149 = arith.constant dense<0.000000e+00> : vector<64x128xf32>
    %154 = tpu.matmul %151, %153, %cst_149 {dimension_numbers = #tpu.dot_dimension_numbers<[1], [0], [0], [1], [0, 0, 1, 1], [], []>} : vector<64x128xbf16>, vector<128x128xbf16>, vector<64x128xf32> -> vector<64x128xf32>
    %155 = arith.addf %149, %154 : vector<64x128xf32>
    %c2_150 = arith.constant 2 : index
    %c0_151 = arith.constant 0 : index
    %c0_152 = arith.constant 0 : index
    %156 = vector.load %arg13[%c2_150, %c0_151, %c0_152] : memref<10x10x128xbf16, #tpu.memory_space<vmem>>, vector<8x8x128xbf16>
    %157 = vector.shape_cast %156 : vector<8x8x128xbf16> to vector<64x128xbf16>
    %c6_153 = arith.constant 6 : index
    %c0_154 = arith.constant 0 : index
    %c0_155 = arith.constant 0 : index
    %158 = vector.load %arg8[%c6_153, %c0_154, %c0_155] : memref<9x128x128xbf16, #tpu.memory_space<vmem>>, vector<1x128x128xbf16>
    %159 = vector.shape_cast %158 : vector<1x128x128xbf16> to vector<128x128xbf16>
    %cst_156 = arith.constant dense<0.000000e+00> : vector<64x128xf32>
    %160 = tpu.matmul %157, %159, %cst_156 {dimension_numbers = #tpu.dot_dimension_numbers<[1], [0], [0], [1], [0, 0, 1, 1], [], []>} : vector<64x128xbf16>, vector<128x128xbf16>, vector<64x128xf32> -> vector<64x128xf32>
    %161 = arith.addf %155, %160 : vector<64x128xf32>
    %c2_157 = arith.constant 2 : index
    %c1_158 = arith.constant 1 : index
    %c0_159 = arith.constant 0 : index
    %162 = vector.load %arg13[%c2_157, %c1_158, %c0_159] : memref<10x10x128xbf16, #tpu.memory_space<vmem>>, vector<8x8x128xbf16>
    %163 = vector.shape_cast %162 : vector<8x8x128xbf16> to vector<64x128xbf16>
    %c7_160 = arith.constant 7 : index
    %c0_161 = arith.constant 0 : index
    %c0_162 = arith.constant 0 : index
    %164 = vector.load %arg8[%c7_160, %c0_161, %c0_162] : memref<9x128x128xbf16, #tpu.memory_space<vmem>>, vector<1x128x128xbf16>
    %165 = vector.shape_cast %164 : vector<1x128x128xbf16> to vector<128x128xbf16>
    %cst_163 = arith.constant dense<0.000000e+00> : vector<64x128xf32>
    %166 = tpu.matmul %163, %165, %cst_163 {dimension_numbers = #tpu.dot_dimension_numbers<[1], [0], [0], [1], [0, 0, 1, 1], [], []>} : vector<64x128xbf16>, vector<128x128xbf16>, vector<64x128xf32> -> vector<64x128xf32>
    %167 = arith.addf %161, %166 : vector<64x128xf32>
    %c2_164 = arith.constant 2 : index
    %c2_165 = arith.constant 2 : index
    %c0_166 = arith.constant 0 : index
    %168 = vector.load %arg13[%c2_164, %c2_165, %c0_166] : memref<10x10x128xbf16, #tpu.memory_space<vmem>>, vector<8x8x128xbf16>
    %169 = vector.shape_cast %168 : vector<8x8x128xbf16> to vector<64x128xbf16>
    %c8_167 = arith.constant 8 : index
    %c0_168 = arith.constant 0 : index
    %c0_169 = arith.constant 0 : index
    %170 = vector.load %arg8[%c8_167, %c0_168, %c0_169] : memref<9x128x128xbf16, #tpu.memory_space<vmem>>, vector<1x128x128xbf16>
    %171 = vector.shape_cast %170 : vector<1x128x128xbf16> to vector<128x128xbf16>
    %cst_170 = arith.constant dense<0.000000e+00> : vector<64x128xf32>
    %172 = tpu.matmul %169, %171, %cst_170 {dimension_numbers = #tpu.dot_dimension_numbers<[1], [0], [0], [1], [0, 0, 1, 1], [], []>} : vector<64x128xbf16>, vector<128x128xbf16>, vector<64x128xf32> -> vector<64x128xf32>
    %173 = arith.addf %167, %172 : vector<64x128xf32>
    %c0_171 = arith.constant 0 : index
    %c0_172 = arith.constant 0 : index
    %174 = vector.load %arg9[%c0_171, %c0_172] : memref<1x128xf32, #tpu.memory_space<vmem>>, vector<1x128xf32>
    %175 = vector.broadcast %174 : vector<1x128xf32> to vector<64x128xf32>
    %176 = arith.mulf %173, %175 : vector<64x128xf32>
    %c0_173 = arith.constant 0 : index
    %c0_174 = arith.constant 0 : index
    %177 = vector.load %arg10[%c0_173, %c0_174] : memref<1x128xf32, #tpu.memory_space<vmem>>, vector<1x128xf32>
    %178 = vector.broadcast %177 : vector<1x128xf32> to vector<64x128xf32>
    %179 = arith.addf %176, %178 : vector<64x128xf32>
    %cst_175 = arith.constant 0.000000e+00 : f32
    %180 = vector.broadcast %cst_175 : f32 to vector<64x128xf32>
    %181 = arith.maximumf %179, %180 : vector<64x128xf32>
    %182 = vector.shape_cast %181 : vector<64x128xf32> to vector<1x8x8x128xf32>
    %183 = arith.truncf %182 : vector<1x8x8x128xf32> to vector<1x8x8x128xbf16>
    %c0_176 = arith.constant 0 : index
    %c0_177 = arith.constant 0 : index
    %c0_178 = arith.constant 0 : index
    %c0_179 = arith.constant 0 : index
    %184 = vector.load %arg11[%c0_176, %c0_177, %c0_178, %c0_179] : memref<1x8x8x128xbf16, #tpu.memory_space<vmem>>, vector<1x8x8x128xbf16>
    tpu.vector_store %arg11[%c0_176, %c0_177, %c0_178, %c0_179], %183 {strides = array<i32>} : memref<1x8x8x128xbf16, #tpu.memory_space<vmem>>, vector<1x8x8x128xbf16>,
    return
  }
  func.func @transform_0(%arg0: i32, %arg1: i32) -> (i32, i32, i32, i32, i32) {
    %c0_i32 = arith.constant 0 : i32
    %c0_i32_0 = arith.constant 0 : i32
    %c0_i32_1 = arith.constant 0 : i32
    %c0_i32_2 = arith.constant 0 : i32
    return %arg0, %arg1, %c0_i32, %c0_i32_0, %c0_i32_1 : i32, i32, i32, i32, i32
  }
  func.func @transform_1(%arg0: i32, %arg1: i32) -> (i32, i32, i32, i32, i32) {
    %c4_i32 = arith.constant 4 : i32
    %0 = arith.muli %arg1, %c4_i32 : i32
    %c1_i32 = arith.constant 1 : i32
    %1 = arith.subi %0, %c1_i32 : i32
    %c0_i32 = arith.constant 0 : i32
    %2 = arith.maxsi %1, %c0_i32 : i32
    %c0_i32_0 = arith.constant 0 : i32
    %c0_i32_1 = arith.constant 0 : i32
    %c0_i32_2 = arith.constant 0 : i32
    %c0_i32_3 = arith.constant 0 : i32
    return %arg0, %2, %c0_i32_0, %c0_i32_1, %c0_i32_2 : i32, i32, i32, i32, i32
  }
  func.func @transform_2(%arg0: i32, %arg1: i32) -> (i32, i32, i32, i32, i32) {
    %c1_i32 = arith.constant 1 : i32
    %0 = arith.addi %arg1, %c1_i32 : i32
    %c4_i32 = arith.constant 4 : i32
    %1 = arith.muli %0, %c4_i32 : i32
    %c0_i32 = arith.constant 0 : i32
    %c3_i32 = arith.constant 3 : i32
    %2 = arith.maxsi %c0_i32, %1 : i32
    %3 = arith.minsi %c3_i32, %2 : i32
    %c0_i32_0 = arith.constant 0 : i32
    %c0_i32_1 = arith.constant 0 : i32
    %c0_i32_2 = arith.constant 0 : i32
    %c0_i32_3 = arith.constant 0 : i32
    return %arg0, %3, %c0_i32_0, %c0_i32_1, %c0_i32_2 : i32, i32, i32, i32, i32
  }
  func.func @transform_3(%arg0: i32, %arg1: i32) -> (i32, i32, i32) {
    %c0_i32 = arith.constant 0 : i32
    %c0_i32_0 = arith.constant 0 : i32
    %c0_i32_1 = arith.constant 0 : i32
    %c0_i32_2 = arith.constant 0 : i32
    return %c0_i32, %c0_i32_0, %c0_i32_1 : i32, i32, i32
  }
  func.func @transform_4(%arg0: i32, %arg1: i32) -> (i32, i32) {
    %c0_i32 = arith.constant 0 : i32
    %c0_i32_0 = arith.constant 0 : i32
    %c0_i32_1 = arith.constant 0 : i32
    return %c0_i32, %c0_i32_0 : i32, i32
  }
  func.func @transform_5(%arg0: i32, %arg1: i32) -> (i32, i32) {
    %c0_i32 = arith.constant 0 : i32
    %c0_i32_0 = arith.constant 0 : i32
    %c0_i32_1 = arith.constant 0 : i32
    return %c0_i32, %c0_i32_0 : i32, i32
  }
  func.func @transform_6(%arg0: i32, %arg1: i32) -> (i32, i32, i32) {
    %c0_i32 = arith.constant 0 : i32
    %c0_i32_0 = arith.constant 0 : i32
    %c0_i32_1 = arith.constant 0 : i32
    %c0_i32_2 = arith.constant 0 : i32
    return %c0_i32, %c0_i32_0, %c0_i32_1 : i32, i32, i32
  }
  func.func @transform_7(%arg0: i32, %arg1: i32) -> (i32, i32) {
    %c0_i32 = arith.constant 0 : i32
    %c0_i32_0 = arith.constant 0 : i32
    %c0_i32_1 = arith.constant 0 : i32
    return %c0_i32, %c0_i32_0 : i32, i32
  }
  func.func @transform_8(%arg0: i32, %arg1: i32) -> (i32, i32) {
    %c0_i32 = arith.constant 0 : i32
    %c0_i32_0 = arith.constant 0 : i32
    %c0_i32_1 = arith.constant 0 : i32
    return %c0_i32, %c0_i32_0 : i32, i32
  }
  func.func @transform_9(%arg0: i32, %arg1: i32) -> (i32, i32, i32, i32) {
    %c0_i32 = arith.constant 0 : i32
    %c0_i32_0 = arith.constant 0 : i32
    %c0_i32_1 = arith.constant 0 : i32
    return %arg0, %arg1, %c0_i32, %c0_i32_0 : i32, i32, i32, i32
  }
}

</mosaic_0001>

<llo_original>
// kernel: tpu_custom_call.1
$region0: #{tpu_custom_call.1}
  #allocation0 [shape = 'u32[]', space=smem, size = 0x4, offset = 0x4, fixed_abs, tag = 'smem constant byte address 0x4 - core index']
  #allocation1 [shape = 'u32[144,128]{1,0:T(1,128)}', space=vmem, size = 0x12000, scoped, tag = 'internal scratch']
  #allocation2 [shape = 'bf16[12,10,4]{2,1,0:T(8,128)(2,1)}', space=vmem, size = 0xc000, scoped, tag = 'scratch operand']
  #allocation3 [shape = 'bf16[10,10,128]{2,1,0:T(8,128)(2,1)}', space=vmem, size = 0xa000, scoped, tag = 'scratch operand']
  %s0 = inlined_call_operand.hbm [shape: bf16[2,8,2,8,8], index: 0, kind: input, shape index: {}]
  %s1 = inlined_call_operand.hbm [shape: bf16[2,8,2,8,8], index: 1, kind: input, shape index: {}]
  %s2 = inlined_call_operand.hbm [shape: bf16[2,8,2,8,8], index: 2, kind: input, shape index: {}]
  %s3 = inlined_call_operand.hbm [shape: bf16[9,4,128], index: 3, kind: input, shape index: {}]
  %s4 = inlined_call_operand.vmem [shape: f32[1,128], index: 4, kind: input, shape index: {}]
  %s5 = inlined_call_operand.vmem [shape: f32[1,128], index: 5, kind: input, shape index: {}]
  %s6 = inlined_call_operand.hbm [shape: bf16[9,128,128], index: 6, kind: input, shape index: {}]
  %s7 = inlined_call_operand.vmem [shape: f32[1,128], index: 7, kind: input, shape index: {}]
  %s8 = inlined_call_operand.vmem [shape: f32[1,128], index: 8, kind: input, shape index: {}]
  %s9 = inlined_call_operand.hbm [shape: bf16[2,8,8,128], index: 9, kind: output, shape index: {}]
  %s10 = sld [smem:[#allocation0]]
  $region97: #{tpu_custom_call.1} parent=0
    _
  %s12 = ssub.s32 1, %s10
  %s13 = scalar_select 0, %s12, %s10
  $region1: #{tpu_custom_call.1} parent=0
    #allocation4 [shape = 'u8[65536]{0}', space=vmem, size = 0x10000, scoped, tag = 'input window, operand 0']
    #allocation5 [shape = 's32[2]{0}', space=sflag, size = 0x8, scoped, tag = 'scoped memory for tpu_custom_call.1']
    #allocation6 [shape = 's32[2]{0}', space=sflag, size = 0x8, scoped, tag = 'scoped memory for tpu_custom_call.1']
    #allocation7 [shape = 'u8[16384]{0}', space=vmem, size = 0x4000, scoped, tag = 'input window, operand 1']
    #allocation8 [shape = 's32[2]{0}', space=sflag, size = 0x8, scoped, tag = 'scoped memory for tpu_custom_call.1']
    #allocation9 [shape = 'u8[16384]{0}', space=vmem, size = 0x4000, scoped, tag = 'input window, operand 2']
    #allocation10 [shape = 'u8[9216]{0}', space=vmem, size = 0x2400, scoped, tag = 'input window, operand 3, single buffered']
    #allocation11 [shape = 's32[1]{0}', space=sflag, size = 0x4, scoped, tag = 'scoped memory for tpu_custom_call.1']
    #allocation12 [shape = 'u8[294912]{0}', space=vmem, size = 0x48000, scoped, tag = 'input window, operand 6, single buffered']
    #allocation13 [shape = 'u8[32768]{0}', space=vmem, size = 0x8000, scoped, tag = 'output window, operand 0']
    %14 = vsyncpa [#allocation5], 0
    %s15 = scalar_lea.sflag [#allocation5], 1
    %16 = vsyncpa %s15, 0
    %17 = vsyncpa [#allocation8], 0
    %s18 = scalar_lea.sflag [#allocation8], 1
    %19 = vsyncpa %s18, 0
    %20 = vsyncpa [#allocation11], 0
    %21 = vsyncpa [#allocation6], 0
    %s22 = scalar_lea.sflag [#allocation6], 1
    %23 = vsyncpa %s22, 0
    loop: start=0, step=1, limit=4
    $region2: #{tpu_custom_call.1} parent=1 // loop_pre_header
      _
    $region3: #{tpu_custom_call.1} parent=1 // loop_header
      %s25 = sphi 0, %s29
      %p26 = scmp.ge.s32.totalorder %s25, 4
      %s32 = sphi 0, %s44
      %s33 = sphi 0, %s40
      %s34 = sphi 0, %s32
      %s35 = sphi 0, %s33
      %s36 = sphi 0, %s34
      %s37 = sphi 0, %s35
      %s49 = sphi 0, %s51
      %s52 = sphi 0, %s49
      %s53 = sphi 0, %s52
      %s69 = sphi 0, %s53
      %s85 = sphi 0, %s87
      %s88 = sphi 0, %s85
      %s89 = sphi 0, %s88
      %s105 = sphi 0, %s89
      %s125 = sphi 0, %s127
      %s128 = sphi 0, %s125
      %s129 = sphi 0, %s128
      %s145 = sphi 0, %s129
      %s149 = sphi 0, %s149
      %s151 = sphi 0, %s149
      %s152 = sphi 0, %s151
      %s166 = sphi 0, %s152
      %s170 = sphi 0, %s170
      %s172 = sphi 0, %s170
      %s173 = sphi 0, %s172
      %s187 = sphi 0, %s173
      %s191 = sphi 0, %s191
      %s193 = sphi 0, %s191
      %s194 = sphi 0, %s193
      %s208 = sphi 0, %s194
      %s212 = sphi 0, %s212
      %s214 = sphi 0, %s212
      %s215 = sphi 0, %s214
      %s229 = sphi 0, %s215
      %s233 = sphi 0, %s233
      %s235 = sphi 0, %s233
      %s236 = sphi 0, %s235
      %s250 = sphi 0, %s236
      %s254 = sphi 0, %s254
      %s256 = sphi 0, %s254
      %s257 = sphi 0, %s256
      %s271 = sphi 0, %s257
      %s279 = sphi 0, %s281
      %s282 = sphi 0, %s279
      %s283 = sphi 0, %s282
      %s299 = sphi 0, %s283
    $region4: #{tpu_custom_call.1} parent=1 // loop_header_branch
      %28 = sbr.rel (%p26) target = $region8
    $region5: #{tpu_custom_call.1} parent=1 // loop_body
      %s30 = ssub.s32 %s25, 1
      %s31 = ssub.s32 %s25, 2
      %s38 = sadd.s32 1, %s33
      %p39 = scmp.ge.s32.totalorder %s38, 1
      %s40 = scalar_select %p39, 0, %s38
      %s41 = sadd.s32 1, %s32
      %s42 = scalar_select %p39, %s41, %s32
      %p43 = scmp.ge.s32.totalorder %s42, 2
      %s44 = scalar_select %p43, 0, %s42
      %s45 = ssub.s32 %s32, %s44
      %s46 = ssub.s32 %s33, %s40
      %s47 = sor.u32 %s45, %s46
      %p48 = scmp.eq.s32.totalorder %s47, 0
      %s50 = sadd.s32 %s49, 1
      %s51 = scalar_select %p48, %s49, %s50
      %p54 = pneg %p48
      %p55 = scmp.eq.s32.totalorder %s25, 1
      %p56 = por %p54, %p55
      %p57 = scmp.ne.s32.totalorder %s49, %s52
      %p58 = scmp.eq.s32.totalorder %s25, 0
      %p59 = por %p57, %p58
      %p60 = scmp.ne.s32.totalorder %s49, %s52
      %p61 = scmp.eq.s32.totalorder %s30, 1
      %p62 = por %p60, %p61
      %p63 = scmp.ne.s32.totalorder %s52, %s53
      %p64 = scmp.eq.s32.totalorder %s30, 0
      %p65 = por %p63, %p64
      %p66 = scmp.ne.s32.totalorder %s52, %s53
      %p67 = scmp.eq.s32.totalorder %s31, 1
      %p68 = por %p66, %p67
      %p70 = scmp.ne.s32.totalorder %s53, %s69
      %p71 = scmp.eq.s32.totalorder %s31, 0
      %p72 = por %p70, %p71
      %s73 = smul.u32 %s33, 4
      %s74 = ssub.s32 %s73, 1
      %p75 = scmp.gt.s32.totalorder %s74, 0
      %s76 = scalar_select %p75, %s74, 0
      %s77 = smul.u32 %s40, 4
      %s78 = ssub.s32 %s77, 1
      %p79 = scmp.gt.s32.totalorder %s78, 0
      %s80 = scalar_select %p79, %s78, 0
      %s81 = ssub.s32 %s32, %s44
      %s82 = ssub.s32 %s76, %s80
      %s83 = sor.u32 %s81, %s82
      %p84 = scmp.eq.s32.totalorder %s83, 0
      %s86 = sadd.s32 %s85, 1
      %s87 = scalar_select %p84, %s85, %s86
      %p90 = pneg %p84
      %p91 = scmp.eq.s32.totalorder %s25, 1
      %p92 = por %p90, %p91
      %p93 = scmp.ne.s32.totalorder %s85, %s88
      %p94 = scmp.eq.s32.totalorder %s25, 0
      %p95 = por %p93, %p94
      %p96 = scmp.ne.s32.totalorder %s85, %s88
      %p97 = scmp.eq.s32.totalorder %s30, 1
      %p98 = por %p96, %p97
      %p99 = scmp.ne.s32.totalorder %s88, %s89
      %p100 = scmp.eq.s32.totalorder %s30, 0
      %p101 = por %p99, %p100
      %p102 = scmp.ne.s32.totalorder %s88, %s89
      %p103 = scmp.eq.s32.totalorder %s31, 1
      %p104 = por %p102, %p103
      %p106 = scmp.ne.s32.totalorder %s89, %s105
      %p107 = scmp.eq.s32.totalorder %s31, 0
      %p108 = por %p106, %p107
      %s109 = sadd.s32 %s33, 1
      %s110 = smul.u32 %s109, 4
      %p111 = scmp.gt.s32.totalorder %s110, 0
      %s112 = scalar_select %p111, %s110, 0
      %p113 = scmp.lt.s32.totalorder %s112, 3
      %s114 = scalar_select %p113, %s112, 3
      %s115 = sadd.s32 %s40, 1
      %s116 = smul.u32 %s115, 4
      %p117 = scmp.gt.s32.totalorder %s116, 0
      %s118 = scalar_select %p117, %s116, 0
      %p119 = scmp.lt.s32.totalorder %s118, 3
      %s120 = scalar_select %p119, %s118, 3
      %s121 = ssub.s32 %s32, %s44
      %s122 = ssub.s32 %s114, %s120
      %s123 = sor.u32 %s121, %s122
      %p124 = scmp.eq.s32.totalorder %s123, 0
      %s126 = sadd.s32 %s125, 1
      %s127 = scalar_select %p124, %s125, %s126
      %p130 = pneg %p124
      %p131 = scmp.eq.s32.totalorder %s25, 1
      %p132 = por %p130, %p131
      %p133 = scmp.ne.s32.totalorder %s125, %s128
      %p134 = scmp.eq.s32.totalorder %s25, 0
      %p135 = por %p133, %p134
      %p136 = scmp.ne.s32.totalorder %s125, %s128
      %p137 = scmp.eq.s32.totalorder %s30, 1
      %p138 = por %p136, %p137
      %p139 = scmp.ne.s32.totalorder %s128, %s129
      %p140 = scmp.eq.s32.totalorder %s30, 0
      %p141 = por %p139, %p140
      %p142 = scmp.ne.s32.totalorder %s128, %s129
      %p143 = scmp.eq.s32.totalorder %s31, 1
      %p144 = por %p142, %p143
      %p146 = scmp.ne.s32.totalorder %s129, %s145
      %p147 = scmp.eq.s32.totalorder %s31, 0
      %p148 = por %p146, %p147
      %s150 = sadd.s32 %s149, 1
      %p153 = scmp.eq.s32.totalorder %s25, 1
      %p154 = scmp.ne.s32.totalorder %s149, %s151
      %p155 = scmp.eq.s32.totalorder %s25, 0
      %p156 = por %p154, %p155
      %p157 = scmp.ne.s32.totalorder %s149, %s151
      %p158 = scmp.eq.s32.totalorder %s30, 1
      %p159 = por %p157, %p158
      %p160 = scmp.ne.s32.totalorder %s151, %s152
      %p161 = scmp.eq.s32.totalorder %s30, 0
      %p162 = por %p160, %p161
      %p163 = scmp.ne.s32.totalorder %s151, %s152
      %p164 = scmp.eq.s32.totalorder %s31, 1
      %p165 = por %p163, %p164
      %p167 = scmp.ne.s32.totalorder %s152, %s166
      %p168 = scmp.eq.s32.totalorder %s31, 0
      %p169 = por %p167, %p168
      %s171 = sadd.s32 %s170, 1
      %p174 = scmp.eq.s32.totalorder %s25, 1
      %p175 = scmp.ne.s32.totalorder %s170, %s172
      %p176 = scmp.eq.s32.totalorder %s25, 0
      %p177 = por %p175, %p176
      %p178 = scmp.ne.s32.totalorder %s170, %s172
      %p179 = scmp.eq.s32.totalorder %s30, 1
      %p180 = por %p178, %p179
      %p181 = scmp.ne.s32.totalorder %s172, %s173
      %p182 = scmp.eq.s32.totalorder %s30, 0
      %p183 = por %p181, %p182
      %p184 = scmp.ne.s32.totalorder %s172, %s173
      %p185 = scmp.eq.s32.totalorder %s31, 1
      %p186 = por %p184, %p185
      %p188 = scmp.ne.s32.totalorder %s173, %s187
      %p189 = scmp.eq.s32.totalorder %s31, 0
      %p190 = por %p188, %p189
      %s192 = sadd.s32 %s191, 1
      %p195 = scmp.eq.s32.totalorder %s25, 1
      %p196 = scmp.ne.s32.totalorder %s191, %s193
      %p197 = scmp.eq.s32.totalorder %s25, 0
      %p198 = por %p196, %p197
      %p199 = scmp.ne.s32.totalorder %s191, %s193
      %p200 = scmp.eq.s32.totalorder %s30, 1
      %p201 = por %p199, %p200
      %p202 = scmp.ne.s32.totalorder %s193, %s194
      %p203 = scmp.eq.s32.totalorder %s30, 0
      %p204 = por %p202, %p203
      %p205 = scmp.ne.s32.totalorder %s193, %s194
      %p206 = scmp.eq.s32.totalorder %s31, 1
      %p207 = por %p205, %p206
      %p209 = scmp.ne.s32.totalorder %s194, %s208
      %p210 = scmp.eq.s32.totalorder %s31, 0
      %p211 = por %p209, %p210
      %s213 = sadd.s32 %s212, 1
      %p216 = scmp.eq.s32.totalorder %s25, 1
      %p217 = scmp.ne.s32.totalorder %s212, %s214
      %p218 = scmp.eq.s32.totalorder %s25, 0
      %p219 = por %p217, %p218
      %p220 = scmp.ne.s32.totalorder %s212, %s214
      %p221 = scmp.eq.s32.totalorder %s30, 1
      %p222 = por %p220, %p221
      %p223 = scmp.ne.s32.totalorder %s214, %s215
      %p224 = scmp.eq.s32.totalorder %s30, 0
      %p225 = por %p223, %p224
      %p226 = scmp.ne.s32.totalorder %s214, %s215
      %p227 = scmp.eq.s32.totalorder %s31, 1
      %p228 = por %p226, %p227
      %p230 = scmp.ne.s32.totalorder %s215, %s229
      %p231 = scmp.eq.s32.totalorder %s31, 0
      %p232 = por %p230, %p231
      %s234 = sadd.s32 %s233, 1
      %p237 = scmp.eq.s32.totalorder %s25, 1
      %p238 = scmp.ne.s32.totalorder %s233, %s235
      %p239 = scmp.eq.s32.totalorder %s25, 0
      %p240 = por %p238, %p239
      %p241 = scmp.ne.s32.totalorder %s233, %s235
      %p242 = scmp.eq.s32.totalorder %s30, 1
      %p243 = por %p241, %p242
      %p244 = scmp.ne.s32.totalorder %s235, %s236
      %p245 = scmp.eq.s32.totalorder %s30, 0
      %p246 = por %p244, %p245
      %p247 = scmp.ne.s32.totalorder %s235, %s236
      %p248 = scmp.eq.s32.totalorder %s31, 1
      %p249 = por %p247, %p248
      %p251 = scmp.ne.s32.totalorder %s236, %s250
      %p252 = scmp.eq.s32.totalorder %s31, 0
      %p253 = por %p251, %p252
      %s255 = sadd.s32 %s254, 1
      %p258 = scmp.eq.s32.totalorder %s25, 1
      %p259 = scmp.ne.s32.totalorder %s254, %s256
      %p260 = scmp.eq.s32.totalorder %s25, 0
      %p261 = por %p259, %p260
      %p262 = scmp.ne.s32.totalorder %s254, %s256
      %p263 = scmp.eq.s32.totalorder %s30, 1
      %p264 = por %p262, %p263
      %p265 = scmp.ne.s32.totalorder %s256, %s257
      %p266 = scmp.eq.s32.totalorder %s30, 0
      %p267 = por %p265, %p266
      %p268 = scmp.ne.s32.totalorder %s256, %s257
      %p269 = scmp.eq.s32.totalorder %s31, 1
      %p270 = por %p268, %p269
      %p272 = scmp.ne.s32.totalorder %s257, %s271
      %p273 = scmp.eq.s32.totalorder %s31, 0
      %p274 = por %p272, %p273
      %s275 = ssub.s32 %s32, %s44
      %s276 = ssub.s32 %s33, %s40
      %s277 = sor.u32 %s275, %s276
      %p278 = scmp.eq.s32.totalorder %s277, 0
      %s280 = sadd.s32 %s279, 1
      %s281 = scalar_select %p278, %s279, %s280
      %p284 = pneg %p278
      %p285 = scmp.eq.s32.totalorder %s25, 1
      %p286 = por %p284, %p285
      %p287 = scmp.ne.s32.totalorder %s279, %s282
      %p288 = scmp.eq.s32.totalorder %s25, 0
      %p289 = por %p287, %p288
      %p290 = scmp.ne.s32.totalorder %s279, %s282
      %p291 = scmp.eq.s32.totalorder %s30, 1
      %p292 = por %p290, %p291
      %p293 = scmp.ne.s32.totalorder %s282, %s283
      %p294 = scmp.eq.s32.totalorder %s30, 0
      %p295 = por %p293, %p294
      %p296 = scmp.ne.s32.totalorder %s282, %s283
      %p297 = scmp.eq.s32.totalorder %s31, 1
      %p298 = por %p296, %p297
      %p300 = scmp.ne.s32.totalorder %s283, %s299
      %p301 = scmp.eq.s32.totalorder %s31, 0
      %p302 = por %p300, %p301
      %p303 = scmp.le.s32.totalorder 1, %s25
      %p304 = scmp.lt.s32.totalorder %s25, 3
      %p305 = pnand %p303, %p304
      %p306 = pneg %p305
      // Predicated region
      $region9: #{tpu_custom_call.1} parent=5 // pred_check
        _
      $region10: #{tpu_custom_call.1} parent=5 // pred_check_branch
        %308 = sbr.rel (%p305) target = $region12
      $region11: #{tpu_custom_call.1} parent=5 // pred_region
        %s309 = ssub.s32 %s25, 1
        // Predicated region
        $region13: #{tpu_custom_call.1} parent=11 // pred_check
          %p310 = pneg %p162
        $region14: #{tpu_custom_call.1} parent=11 // pred_check_branch
          %312 = sbr.rel (%p310) target = $region16
        $region15: #{tpu_custom_call.1} parent=11 // pred_region
          %s314 = ssub.s32 288, 288
          %315 = vsyncadd [#allocation11], %s314
          %s316 = sshll.u32 [#allocation10], 4
          %s317 = int_to_ptr.vmem [resolvable:$true] %s316
          %322 = dma.hbm_to_vmem [thread:$0]  %s3, 288, %s317, [#allocation11], 32, 32, 2
        $region16: #{tpu_custom_call.1} parent=11 // pred_fallthru
          _
        // Predicated region
        $region17: #{tpu_custom_call.1} parent=11 // pred_check
          %p323 = pneg %p183
        $region18: #{tpu_custom_call.1} parent=11 // pred_check_branch
          %325 = sbr.rel (%p323) target = $region20
        $region19: #{tpu_custom_call.1} parent=11 // pred_region
          _
        $region20: #{tpu_custom_call.1} parent=11 // pred_fallthru
          _
        // Predicated region
        $region21: #{tpu_custom_call.1} parent=11 // pred_check
          %p326 = pneg %p204
        $region22: #{tpu_custom_call.1} parent=11 // pred_check_branch
          %328 = sbr.rel (%p326) target = $region24
        $region23: #{tpu_custom_call.1} parent=11 // pred_region
          _
        $region24: #{tpu_custom_call.1} parent=11 // pred_fallthru
          _
        // Predicated region
        $region25: #{tpu_custom_call.1} parent=11 // pred_check
          %p329 = pneg %p225
        $region26: #{tpu_custom_call.1} parent=11 // pred_check_branch
          %331 = sbr.rel (%p329) target = $region28
        $region27: #{tpu_custom_call.1} parent=11 // pred_region
          %s333 = ssub.s32 9216, 9216
          %334 = vsyncadd [#allocation11], %s333
          %s335 = sshll.u32 [#allocation12], 4
          %s336 = int_to_ptr.vmem [resolvable:$true] %s335
          %341 = dma.hbm_to_vmem [thread:$0]  %s6, 9216, %s336, [#allocation11], 64, 64, 4
        $region28: #{tpu_custom_call.1} parent=11 // pred_fallthru
          _
        // Predicated region
        $region29: #{tpu_custom_call.1} parent=11 // pred_check
          %p342 = pneg %p246
        $region30: #{tpu_custom_call.1} parent=11 // pred_check_branch
          %344 = sbr.rel (%p342) target = $region32
        $region31: #{tpu_custom_call.1} parent=11 // pred_region
          _
        $region32: #{tpu_custom_call.1} parent=11 // pred_fallthru
          _
        // Predicated region
        $region33: #{tpu_custom_call.1} parent=11 // pred_check
          %p345 = pneg %p267
        $region34: #{tpu_custom_call.1} parent=11 // pred_check_branch
          %347 = sbr.rel (%p345) target = $region36
        $region35: #{tpu_custom_call.1} parent=11 // pred_region
          _
        $region36: #{tpu_custom_call.1} parent=11 // pred_fallthru
          _
      $region12: #{tpu_custom_call.1} parent=5 // pred_fallthru
        _
      %p348 = scmp.lt.s32.totalorder %s25, 2
      // Predicated region
      $region37: #{tpu_custom_call.1} parent=5 // pred_check
        %p349 = pneg %p348
      $region38: #{tpu_custom_call.1} parent=5 // pred_check_branch
        %351 = sbr.rel (%p349) target = $region40
      $region39: #{tpu_custom_call.1} parent=5 // pred_region
        // Predicated region
        $region41: #{tpu_custom_call.1} parent=39 // pred_check
          %p352 = pneg %p59
        $region42: #{tpu_custom_call.1} parent=39 // pred_check_branch
          %354 = sbr.rel (%p352) target = $region44
        $region43: #{tpu_custom_call.1} parent=39 // pred_region
          %s355 = sand.u32 %s49, 1
          %s356 = scalar_lea.sflag [#allocation5], %s355
          %s357 = sand.u32 %s49, 1
          %s358 = smul.addr %s357, 64
          %s359 = scalar_lea.vmem [#allocation4], %s358
          %s360 = smul.u32 8, %s33
          %s362 = ssub.s32 1024, 1024
          %363 = vsyncadd %s356, %s362
          %s364 = smul.addr %s360, 2
          %s365 = smul.addr %s32, 16
          %s366 = sadd.s32 %s364, %s365
          %s367 = smul.addr %s366, 64
          %s368 = scalar_lea.hbm %s0, %s367
          %s369 = sshll.u32 %s359, 4
          %s370 = int_to_ptr.vmem [resolvable:$true] %s369
          %375 = dma.hbm_to_vmem [thread:$0]  %s368, 1024, %s370, %s356, 64, 64, 4
        $region44: #{tpu_custom_call.1} parent=39 // pred_fallthru
          _
        // Predicated region
        $region45: #{tpu_custom_call.1} parent=39 // pred_check
          %p376 = pneg %p95
        $region46: #{tpu_custom_call.1} parent=39 // pred_check_branch
          %378 = sbr.rel (%p376) target = $region48
        $region47: #{tpu_custom_call.1} parent=39 // pred_region
          %s379 = sand.u32 %s25, 1
          %s380 = scalar_lea.sflag [#allocation8], %s379
          %s381 = sand.u32 %s85, 1
          %s382 = smul.addr %s381, 16
          %s383 = scalar_lea.vmem [#allocation7], %s382
          %s384 = smul.u32 %s33, 4
          %s385 = ssub.s32 %s384, 1
          %p386 = scmp.gt.s32.totalorder %s385, 0
          %s387 = scalar_select %p386, %s385, 0
          %s388 = smul.u32 2, %s387
          %s390 = ssub.s32 256, 256
          %391 = vsyncadd %s380, %s390
          %s392 = smul.addr %s388, 2
          %s393 = smul.addr %s32, 16
          %s394 = sadd.s32 %s392, %s393
          %s395 = smul.addr %s394, 64
          %s396 = scalar_lea.hbm %s1, %s395
          %s397 = sshll.u32 %s383, 4
          %s398 = int_to_ptr.vmem [resolvable:$true] %s397
          %403 = dma.hbm_to_vmem [thread:$0]  %s396, 256, %s398, %s380, 64, 64, 4
        $region48: #{tpu_custom_call.1} parent=39 // pred_fallthru
          _
        // Predicated region
        $region49: #{tpu_custom_call.1} parent=39 // pred_check
          %p404 = pneg %p135
        $region50: #{tpu_custom_call.1} parent=39 // pred_check_branch
          %406 = sbr.rel (%p404) target = $region52
        $region51: #{tpu_custom_call.1} parent=39 // pred_region
          %s407 = sand.u32 %s25, 1
          %s408 = scalar_lea.sflag [#allocation8], %s407
          %s409 = sand.u32 %s125, 1
          %s410 = smul.addr %s409, 16
          %s411 = scalar_lea.vmem [#allocation9], %s410
          %s412 = sadd.s32 %s33, 1
          %s413 = smul.u32 %s412, 4
          %p414 = scmp.gt.s32.totalorder %s413, 0
          %s415 = scalar_select %p414, %s413, 0
          %p416 = scmp.lt.s32.totalorder %s415, 3
          %s417 = scalar_select %p416, %s415, 3
          %s418 = smul.u32 2, %s417
          %s420 = ssub.s32 256, 256
          %421 = vsyncadd %s408, %s420
          %s422 = smul.addr %s418, 2
          %s423 = smul.addr %s32, 16
          %s424 = sadd.s32 %s422, %s423
          %s425 = smul.addr %s424, 64
          %s426 = scalar_lea.hbm %s2, %s425
          %s427 = sshll.u32 %s411, 4
          %s428 = int_to_ptr.vmem [resolvable:$true] %s427
          %433 = dma.hbm_to_vmem [thread:$0]  %s426, 256, %s428, %s408, 64, 64, 4
        $region52: #{tpu_custom_call.1} parent=39 // pred_fallthru
          _
      $region40: #{tpu_custom_call.1} parent=5 // pred_fallthru
        _
      %p434 = scmp.le.s32.totalorder 1, %s25
      %p435 = scmp.lt.s32.totalorder %s25, 3
      %p436 = pnand %p434, %p435
      %p437 = pneg %p436
      // Predicated region
      $region53: #{tpu_custom_call.1} parent=5 // pred_check
        _
      $region54: #{tpu_custom_call.1} parent=5 // pred_check_branch
        %439 = sbr.rel (%p436) target = $region56
      $region55: #{tpu_custom_call.1} parent=5 // pred_region
        %s440 = ssub.s32 %s25, 1
        %s441 = sand.u32 %s52, 1
        %s442 = scalar_lea.sflag [#allocation5], %s441
        %s443 = sand.u32 %s52, 1
        %s444 = smul.addr %s443, 64
        %s445 = scalar_lea.vmem [#allocation4], %s444
        // Predicated region
        $region57: #{tpu_custom_call.1} parent=55 // pred_check
          %p446 = pneg %p65
        $region58: #{tpu_custom_call.1} parent=55 // pred_check_branch
          %448 = sbr.rel (%p446) target = $region60
        $region59: #{tpu_custom_call.1} parent=55 // pred_region
          %449 = dma.done %s442, 1024
        $region60: #{tpu_custom_call.1} parent=55 // pred_fallthru
          _
        %s450 = sand.u32 %s30, 1
        %s451 = scalar_lea.sflag [#allocation8], %s450
        %s452 = sand.u32 %s88, 1
        %s453 = smul.addr %s452, 16
        %s454 = scalar_lea.vmem [#allocation7], %s453
        // Predicated region
        $region61: #{tpu_custom_call.1} parent=55 // pred_check
          %p455 = pneg %p101
        $region62: #{tpu_custom_call.1} parent=55 // pred_check_branch
          %457 = sbr.rel (%p455) target = $region64
        $region63: #{tpu_custom_call.1} parent=55 // pred_region
          %458 = dma.done %s451, 256
        $region64: #{tpu_custom_call.1} parent=55 // pred_fallthru
          _
        %s459 = sand.u32 %s30, 1
        %s460 = scalar_lea.sflag [#allocation8], %s459
        %s461 = sand.u32 %s128, 1
        %s462 = smul.addr %s461, 16
        %s463 = scalar_lea.vmem [#allocation9], %s462
        // Predicated region
        $region65: #{tpu_custom_call.1} parent=55 // pred_check
          %p464 = pneg %p141
        $region66: #{tpu_custom_call.1} parent=55 // pred_check_branch
          %466 = sbr.rel (%p464) target = $region68
        $region67: #{tpu_custom_call.1} parent=55 // pred_region
          %467 = dma.done %s460, 256
        $region68: #{tpu_custom_call.1} parent=55 // pred_fallthru
          _
        // Predicated region
        $region69: #{tpu_custom_call.1} parent=55 // pred_check
          %p468 = pneg %p162
        $region70: #{tpu_custom_call.1} parent=55 // pred_check_branch
          %470 = sbr.rel (%p468) target = $region72
        $region71: #{tpu_custom_call.1} parent=55 // pred_region
          %471 = dma.done [#allocation11], 288
        $region72: #{tpu_custom_call.1} parent=55 // pred_fallthru
          _
        // Predicated region
        $region73: #{tpu_custom_call.1} parent=55 // pred_check
          %p472 = pneg %p225
        $region74: #{tpu_custom_call.1} parent=55 // pred_check_branch
          %474 = sbr.rel (%p472) target = $region76
        $region75: #{tpu_custom_call.1} parent=55 // pred_region
          %475 = dma.done [#allocation11], 9216
        $region76: #{tpu_custom_call.1} parent=55 // pred_fallthru
          _
        %s476 = sand.u32 %s52, 1
        %s477 = scalar_lea.sflag [#allocation5], %s476
        %s478 = sand.u32 %s52, 1
        %s479 = smul.addr %s478, 64
        %s480 = scalar_lea.vmem [#allocation4], %s479
        %p481 = pneg %p65
        %p482 = pneg %p62
        %s483 = sand.u32 %s30, 1
        %s484 = scalar_lea.sflag [#allocation8], %s483
        %s485 = sand.u32 %s88, 1
        %s486 = smul.addr %s485, 16
        %s487 = scalar_lea.vmem [#allocation7], %s486
        %p488 = pneg %p101
        %p489 = pneg %p98
        %s490 = sand.u32 %s30, 1
        %s491 = scalar_lea.sflag [#allocation8], %s490
        %s492 = sand.u32 %s128, 1
        %s493 = smul.addr %s492, 16
        %s494 = scalar_lea.vmem [#allocation9], %s493
        %p495 = pneg %p141
        %p496 = pneg %p138
        %p497 = pneg %p162
        %p498 = pneg %p159
        %p499 = pneg %p183
        %p500 = pneg %p180
        %p501 = pneg %p204
        %p502 = pneg %p201
        %p503 = pneg %p225
        %p504 = pneg %p222
        %p505 = pneg %p246
        %p506 = pneg %p243
        %p507 = pneg %p267
        %p508 = pneg %p264
        %p509 = pneg %p295
        %p510 = pneg %p292
        %s511 = sand.u32 %s282, 1
        %s512 = scalar_lea.sflag [#allocation6], %s511
        %s513 = sand.u32 %s282, 1
        %s514 = smul.addr %s513, 32
        %s515 = scalar_lea.vmem [#allocation13], %s514
        %s516 = smul.u32 8, %s35
        %s517 = smul.u32 %s35, 4
        %s518 = ssub.s32 %s517, 1
        %p519 = scmp.gt.s32.totalorder %s518, 0
        %s520 = scalar_select %p519, %s518, 0
        %s521 = smul.u32 2, %s520
        %s522 = sadd.s32 %s35, 1
        %s523 = smul.u32 %s522, 4
        %p524 = scmp.gt.s32.totalorder %s523, 0
        %s525 = scalar_select %p524, %s523, 0
        %p526 = scmp.lt.s32.totalorder %s525, 3
        %s527 = scalar_select %p526, %s525, 3
        %s528 = smul.u32 2, %s527
        %s529 = smul.u32 8, %s35
        %vm531 = vcmask 24576
        %vm532 = vsmask.f32 256
        %vm533 = vmand %vm531, %vm532
        %v534 = vld [vmem:[#allocation2] sm:$0x1]
        %v535 = vsel %vm533, 0, %v534
        %536 = vst [vmem:[#allocation2] sm:$0x1] %v535
        %v537 = vld [vmem:[#allocation2 + $0x8] sm:$0x1]
        %v538 = vsel %vm533, 0, %v537
        %539 = vst [vmem:[#allocation2 + $0x8] sm:$0x1] %v538
        %v540 = vld [vmem:[#allocation2 + $0x10] sm:$0x1]
        %v541 = vsel %vm533, 0, %v540
        %542 = vst [vmem:[#allocation2 + $0x10] sm:$0x1] %v541
        %v543 = vld [vmem:[#allocation2 + $0x18] sm:$0x1]
        %v544 = vsel %vm533, 0, %v543
        %545 = vst [vmem:[#allocation2 + $0x18] sm:$0x1] %v544
        %v546 = vld [vmem:[#allocation2 + $0x20] sm:$0x1]
        %v547 = vsel %vm533, 0, %v546
        %548 = vst [vmem:[#allocation2 + $0x20] sm:$0x1] %v547
        %v549 = vld [vmem:[#allocation2 + $0x28] sm:$0x1]
        %v550 = vsel %vm533, 0, %v549
        %551 = vst [vmem:[#allocation2 + $0x28] sm:$0x1] %v550
        %v552 = vld [vmem:[#allocation2 + $0x30] sm:$0x1]
        %v553 = vsel %vm533, 0, %v552
        %554 = vst [vmem:[#allocation2 + $0x30] sm:$0x1] %v553
        %v555 = vld [vmem:[#allocation2 + $0x38] sm:$0x1]
        %v556 = vsel %vm533, 0, %v555
        %557 = vst [vmem:[#allocation2 + $0x38] sm:$0x1] %v556
        %v558 = vld [vmem:[#allocation2 + $0x40] sm:$0x1]
        %v559 = vsel %vm533, 0, %v558
        %560 = vst [vmem:[#allocation2 + $0x40] sm:$0x1] %v559
        %v561 = vld [vmem:[#allocation2 + $0x48] sm:$0x1]
        %v562 = vsel %vm533, 0, %v561
        %563 = vst [vmem:[#allocation2 + $0x48] sm:$0x1] %v562
        %v564 = vld [vmem:[#allocation2 + $0x50] sm:$0x1]
        %v565 = vsel %vm533, 0, %v564
        %566 = vst [vmem:[#allocation2 + $0x50] sm:$0x1] %v565
        %v567 = vld [vmem:[#allocation2 + $0x58] sm:$0x1]
        %v568 = vsel %vm533, 0, %v567
        %569 = vst [vmem:[#allocation2 + $0x58] sm:$0x1] %v568
        %vm570 = vsmask.f32 7938
        %vm571 = vmand %vm531, %vm570
        %v572 = vld [vmem:[#allocation2 + $0x4] sm:$0x1]
        %v573 = vsel %vm571, 0, %v572
        %574 = vst [vmem:[#allocation2 + $0x4] sm:$0x1] %v573
        %v575 = vld [vmem:[#allocation2 + $0xc] sm:$0x1]
        %v576 = vsel %vm571, 0, %v575
        %577 = vst [vmem:[#allocation2 + $0xc] sm:$0x1] %v576
        %v578 = vld [vmem:[#allocation2 + $0x14] sm:$0x1]
        %v579 = vsel %vm571, 0, %v578
        %580 = vst [vmem:[#allocation2 + $0x14] sm:$0x1] %v579
        %v581 = vld [vmem:[#allocation2 + $0x1c] sm:$0x1]
        %v582 = vsel %vm571, 0, %v581
        %583 = vst [vmem:[#allocation2 + $0x1c] sm:$0x1] %v582
        %v584 = vld [vmem:[#allocation2 + $0x24] sm:$0x1]
        %v585 = vsel %vm571, 0, %v584
        %586 = vst [vmem:[#allocation2 + $0x24] sm:$0x1] %v585
        %v587 = vld [vmem:[#allocation2 + $0x2c] sm:$0x1]
        %v588 = vsel %vm571, 0, %v587
        %589 = vst [vmem:[#allocation2 + $0x2c] sm:$0x1] %v588
        %v590 = vld [vmem:[#allocation2 + $0x34] sm:$0x1]
        %v591 = vsel %vm571, 0, %v590
        %592 = vst [vmem:[#allocation2 + $0x34] sm:$0x1] %v591
        %v593 = vld [vmem:[#allocation2 + $0x3c] sm:$0x1]
        %v594 = vsel %vm571, 0, %v593
        %595 = vst [vmem:[#allocation2 + $0x3c] sm:$0x1] %v594
        %v596 = vld [vmem:[#allocation2 + $0x44] sm:$0x1]
        %v597 = vsel %vm571, 0, %v596
        %598 = vst [vmem:[#allocation2 + $0x44] sm:$0x1] %v597
        %v599 = vld [vmem:[#allocation2 + $0x4c] sm:$0x1]
        %v600 = vsel %vm571, 0, %v599
        %601 = vst [vmem:[#allocation2 + $0x4c] sm:$0x1] %v600
        %v602 = vld [vmem:[#allocation2 + $0x54] sm:$0x1]
        %v603 = vsel %vm571, 0, %v602
        %604 = vst [vmem:[#allocation2 + $0x54] sm:$0x1] %v603
        %v605 = vld [vmem:[#allocation2 + $0x5c] sm:$0x1]
        %v606 = vsel %vm571, 0, %v605
        %607 = vst [vmem:[#allocation2 + $0x5c] sm:$0x1] %v606
        %v608 = vld [vmem:[%s454] sm:$0xf]
        %v609 = vld [vmem:[%s454 + $0x4] sm:$0xf]
        %v610 = vld [vmem:[%s454 + $0x8] sm:$0xf]
        %v611 = vld [vmem:[%s454 + $0xc] sm:$0xf]
        %v612 = vmax.bf16 %v608, %v609
        %v613 = vmax.bf16 %v610, %v611
        %616 = vrot.lane.b32.xlu0 %v612, 124
        %v617 = vpop.permute.xlu0 %616
        %618 = vrot.lane.b32.xlu0 %v613, 124
        %v619 = vpop.permute.xlu0 %618
        %v622 = vmax.bf16 %v612, %v617
        %v623 = vmax.bf16 %v613, %v619
        %v625 = vshrl.u32 %v622, 16
        %v627 = vrot.slane %v625, 7
        %v628 = vshll.u32 %v622, 16
        %v630 = vor.u32 %v627, %v628
        %v631 = vrot.slane %v627, 4
        %v633 = vshrl.u32 %v623, 16
        %v635 = vrot.slane %v633, 7
        %v636 = vshll.u32 %v623, 16
        %v638 = vor.u32 %v635, %v636
        %v639 = vrot.slane %v635, 4
        %vm644 = vcmask 27648
        %vm645 = vmand %vm644, %vm570
        %v646 = vld [vmem:[#allocation2] sm:$0xf]
        %v647 = vsel %vm645, %v630, %v646
        %648 = vst [vmem:[#allocation2] sm:$0xf] %v647
        %v649 = vld [vmem:[#allocation2 + $0x4] sm:$0x1]
        %v650 = vsel %vm533, %v631, %v649
        %651 = vst [vmem:[#allocation2 + $0x4] sm:$0x1] %v650
        %v652 = vld [vmem:[#allocation2 + $0x8] sm:$0xf]
        %v653 = vsel %vm645, %v638, %v652
        %654 = vst [vmem:[#allocation2 + $0x8] sm:$0xf] %v653
        %v655 = vld [vmem:[#allocation2 + $0xc] sm:$0x1]
        %v656 = vsel %vm533, %v639, %v655
        %657 = vst [vmem:[#allocation2 + $0xc] sm:$0x1] %v656
        %v658 = vld [vmem:[%s445] sm:$0xf]
        %v659 = vld [vmem:[%s445 + $0x4] sm:$0xf]
        %v660 = vld [vmem:[%s445 + $0x8] sm:$0xf]
        %v661 = vld [vmem:[%s445 + $0xc] sm:$0xf]
        %v662 = vld [vmem:[%s445 + $0x10] sm:$0xf]
        %v663 = vld [vmem:[%s445 + $0x14] sm:$0xf]
        %v664 = vld [vmem:[%s445 + $0x18] sm:$0xf]
        %v665 = vld [vmem:[%s445 + $0x1c] sm:$0xf]
        %v666 = vld [vmem:[%s445 + $0x20] sm:$0xf]
        %v667 = vld [vmem:[%s445 + $0x24] sm:$0xf]
        %v668 = vld [vmem:[%s445 + $0x28] sm:$0xf]
        %v669 = vld [vmem:[%s445 + $0x2c] sm:$0xf]
        %v670 = vld [vmem:[%s445 + $0x30] sm:$0xf]
        %v671 = vld [vmem:[%s445 + $0x34] sm:$0xf]
        %v672 = vld [vmem:[%s445 + $0x38] sm:$0xf]
        %v673 = vld [vmem:[%s445 + $0x3c] sm:$0xf]
        %v674 = vmax.bf16 %v658, %v659
        %v675 = vmax.bf16 %v660, %v661
        %v676 = vmax.bf16 %v662, %v663
        %v677 = vmax.bf16 %v664, %v665
        %v678 = vmax.bf16 %v666, %v667
        %v679 = vmax.bf16 %v668, %v669
        %v680 = vmax.bf16 %v670, %v671
        %v681 = vmax.bf16 %v672, %v673
        %690 = vrot.lane.b32.xlu0 %v674, 124
        %v691 = vpop.permute.xlu0 %690
        %692 = vrot.lane.b32.xlu0 %v675, 124
        %v693 = vpop.permute.xlu0 %692
        %694 = vrot.lane.b32.xlu0 %v676, 124
        %v695 = vpop.permute.xlu0 %694
        %696 = vrot.lane.b32.xlu0 %v677, 124
        %v697 = vpop.permute.xlu0 %696
        %698 = vrot.lane.b32.xlu0 %v678, 124
        %v699 = vpop.permute.xlu0 %698
        %700 = vrot.lane.b32.xlu0 %v679, 124
        %v701 = vpop.permute.xlu0 %700
        %702 = vrot.lane.b32.xlu0 %v680, 124
        %v703 = vpop.permute.xlu0 %702
        %704 = vrot.lane.b32.xlu0 %v681, 124
        %v705 = vpop.permute.xlu0 %704
        %v714 = vmax.bf16 %v674, %v691
        %v715 = vmax.bf16 %v675, %v693
        %v716 = vmax.bf16 %v676, %v695
        %v717 = vmax.bf16 %v677, %v697
        %v718 = vmax.bf16 %v678, %v699
        %v719 = vmax.bf16 %v679, %v701
        %v720 = vmax.bf16 %v680, %v703
        %v721 = vmax.bf16 %v681, %v705
        %v723 = vshrl.u32 %v714, 16
        %v725 = vrot.slane %v723, 7
        %v726 = vshll.u32 %v714, 16
        %v728 = vor.u32 %v725, %v726
        %v729 = vrot.slane %v725, 4
        %v731 = vshrl.u32 %v715, 16
        %v733 = vrot.slane %v731, 7
        %v734 = vshll.u32 %v715, 16
        %v736 = vor.u32 %v733, %v734
        %v737 = vrot.slane %v733, 4
        %v739 = vshrl.u32 %v716, 16
        %v741 = vrot.slane %v739, 7
        %v742 = vshll.u32 %v716, 16
        %v744 = vor.u32 %v741, %v742
        %v745 = vrot.slane %v741, 4
        %v747 = vshrl.u32 %v717, 16
        %v749 = vrot.slane %v747, 7
        %v750 = vshll.u32 %v717, 16
        %v752 = vor.u32 %v749, %v750
        %v753 = vrot.slane %v749, 4
        %v755 = vshrl.u32 %v718, 16
        %v757 = vrot.slane %v755, 7
        %v758 = vshll.u32 %v718, 16
        %v760 = vor.u32 %v757, %v758
        %v761 = vrot.slane %v757, 4
        %v763 = vshrl.u32 %v719, 16
        %v765 = vrot.slane %v763, 7
        %v766 = vshll.u32 %v719, 16
        %v768 = vor.u32 %v765, %v766
        %v769 = vrot.slane %v765, 4
        %v771 = vshrl.u32 %v720, 16
        %v773 = vrot.slane %v771, 7
        %v774 = vshll.u32 %v720, 16
        %v776 = vor.u32 %v773, %v774
        %v777 = vrot.slane %v773, 4
        %v779 = vshrl.u32 %v721, 16
        %v781 = vrot.slane %v779, 7
        %v782 = vshll.u32 %v721, 16
        %v784 = vor.u32 %v781, %v782
        %v785 = vrot.slane %v781, 4
        %s802 = scalar_lea.vmem [#allocation2], 16
        %v803 = vld [vmem:[%s802] sm:$0xf]
        %v804 = vsel %vm645, %v728, %v803
        %805 = vst [vmem:[%s802] sm:$0xf] %v804
        %v806 = vld [vmem:[%s802 + $0x4] sm:$0x1]
        %v807 = vsel %vm533, %v729, %v806
        %808 = vst [vmem:[%s802 + $0x4] sm:$0x1] %v807
        %v809 = vld [vmem:[%s802 + $0x8] sm:$0xf]
        %v810 = vsel %vm645, %v736, %v809
        %811 = vst [vmem:[%s802 + $0x8] sm:$0xf] %v810
        %v812 = vld [vmem:[%s802 + $0xc] sm:$0x1]
        %v813 = vsel %vm533, %v737, %v812
        %814 = vst [vmem:[%s802 + $0xc] sm:$0x1] %v813
        %v815 = vld [vmem:[%s802 + $0x10] sm:$0xf]
        %v816 = vsel %vm645, %v744, %v815
        %817 = vst [vmem:[%s802 + $0x10] sm:$0xf] %v816
        %v818 = vld [vmem:[%s802 + $0x14] sm:$0x1]
        %v819 = vsel %vm533, %v745, %v818
        %820 = vst [vmem:[%s802 + $0x14] sm:$0x1] %v819
        %v821 = vld [vmem:[%s802 + $0x18] sm:$0xf]
        %v822 = vsel %vm645, %v752, %v821
        %823 = vst [vmem:[%s802 + $0x18] sm:$0xf] %v822
        %v824 = vld [vmem:[%s802 + $0x1c] sm:$0x1]
        %v825 = vsel %vm533, %v753, %v824
        %826 = vst [vmem:[%s802 + $0x1c] sm:$0x1] %v825
        %v827 = vld [vmem:[%s802 + $0x20] sm:$0xf]
        %v828 = vsel %vm645, %v760, %v827
        %829 = vst [vmem:[%s802 + $0x20] sm:$0xf] %v828
        %v830 = vld [vmem:[%s802 + $0x24] sm:$0x1]
        %v831 = vsel %vm533, %v761, %v830
        %832 = vst [vmem:[%s802 + $0x24] sm:$0x1] %v831
        %v833 = vld [vmem:[%s802 + $0x28] sm:$0xf]
        %v834 = vsel %vm645, %v768, %v833
        %835 = vst [vmem:[%s802 + $0x28] sm:$0xf] %v834
        %v836 = vld [vmem:[%s802 + $0x2c] sm:$0x1]
        %v837 = vsel %vm533, %v769, %v836
        %838 = vst [vmem:[%s802 + $0x2c] sm:$0x1] %v837
        %v839 = vld [vmem:[%s802 + $0x30] sm:$0xf]
        %v840 = vsel %vm645, %v776, %v839
        %841 = vst [vmem:[%s802 + $0x30] sm:$0xf] %v840
        %v842 = vld [vmem:[%s802 + $0x34] sm:$0x1]
        %v843 = vsel %vm533, %v777, %v842
        %844 = vst [vmem:[%s802 + $0x34] sm:$0x1] %v843
        %v845 = vld [vmem:[%s802 + $0x38] sm:$0xf]
        %v846 = vsel %vm645, %v784, %v845
        %847 = vst [vmem:[%s802 + $0x38] sm:$0xf] %v846
        %v848 = vld [vmem:[%s802 + $0x3c] sm:$0x1]
        %v849 = vsel %vm533, %v785, %v848
        %850 = vst [vmem:[%s802 + $0x3c] sm:$0x1] %v849
        %v851 = vld [vmem:[%s463] sm:$0xf]
        %v852 = vld [vmem:[%s463 + $0x4] sm:$0xf]
        %v853 = vld [vmem:[%s463 + $0x8] sm:$0xf]
        %v854 = vld [vmem:[%s463 + $0xc] sm:$0xf]
        %v855 = vmax.bf16 %v851, %v852
        %v856 = vmax.bf16 %v853, %v854
        %859 = vrot.lane.b32.xlu0 %v855, 124
        %v860 = vpop.permute.xlu0 %859
        %861 = vrot.lane.b32.xlu0 %v856, 124
        %v862 = vpop.permute.xlu0 %861
        %v865 = vmax.bf16 %v855, %v860
        %v866 = vmax.bf16 %v856, %v862
        %v868 = vshrl.u32 %v865, 16
        %v870 = vrot.slane %v868, 7
        %v871 = vshll.u32 %v865, 16
        %v873 = vor.u32 %v870, %v871
        %v874 = vrot.slane %v870, 4
        %v876 = vshrl.u32 %v866, 16
        %v878 = vrot.slane %v876, 7
        %v879 = vshll.u32 %v866, 16
        %v881 = vor.u32 %v878, %v879
        %v882 = vrot.slane %v878, 4
        %s887 = scalar_lea.vmem [#allocation2], 80
        %v888 = vld [vmem:[%s887] sm:$0xf]
        %v889 = vsel %vm645, %v873, %v888
        %890 = vst [vmem:[%s887] sm:$0xf] %v889
        %v891 = vld [vmem:[%s887 + $0x4] sm:$0x1]
        %v892 = vsel %vm533, %v874, %v891
        %893 = vst [vmem:[%s887 + $0x4] sm:$0x1] %v892
        %v894 = vld [vmem:[%s887 + $0x8] sm:$0xf]
        %v895 = vsel %vm645, %v881, %v894
        %896 = vst [vmem:[%s887 + $0x8] sm:$0xf] %v895
        %v897 = vld [vmem:[%s887 + $0xc] sm:$0x1]
        %v898 = vsel %vm533, %v882, %v897
        %899 = vst [vmem:[%s887 + $0xc] sm:$0x1] %v898
        %p900 = scmp.eq.s32.totalorder %s35, 0
        // Predicated region
        $region77: #{tpu_custom_call.1} parent=55 // pred_check
          %p901 = pneg %p900
        $region78: #{tpu_custom_call.1} parent=55 // pred_check_branch
          %903 = sbr.rel (%p901) target = $region80
        $region79: #{tpu_custom_call.1} parent=55 // pred_region
          %v904 = vld [vmem:[#allocation2] sm:$0xf]
          %v905 = vsel %vm645, 0, %v904
          %906 = vst [vmem:[#allocation2] sm:$0xf] %v905
          %v907 = vld [vmem:[#allocation2 + $0x4] sm:$0x1]
          %v908 = vsel %vm533, 0, %v907
          %909 = vst [vmem:[#allocation2 + $0x4] sm:$0x1] %v908
          %v910 = vld [vmem:[#allocation2 + $0x8] sm:$0xf]
          %v911 = vsel %vm645, 0, %v910
          %912 = vst [vmem:[#allocation2 + $0x8] sm:$0xf] %v911
          %v913 = vld [vmem:[#allocation2 + $0xc] sm:$0x1]
          %v914 = vsel %vm533, 0, %v913
          %915 = vst [vmem:[#allocation2 + $0xc] sm:$0x1] %v914
          %v916 = vld [vmem:[%s887] sm:$0xf]
          %v917 = vsel %vm645, 0, %v916
          %918 = vst [vmem:[%s887] sm:$0xf] %v917
          %v919 = vld [vmem:[%s887 + $0x4] sm:$0x1]
          %v920 = vsel %vm533, 0, %v919
          %921 = vst [vmem:[%s887 + $0x4] sm:$0x1] %v920
          %v922 = vld [vmem:[%s887 + $0x8] sm:$0xf]
          %v923 = vsel %vm645, 0, %v922
          %924 = vst [vmem:[%s887 + $0x8] sm:$0xf] %v923
          %v925 = vld [vmem:[%s887 + $0xc] sm:$0x1]
          %v926 = vsel %vm533, 0, %v925
          %927 = vst [vmem:[%s887 + $0xc] sm:$0x1] %v926
        $region80: #{tpu_custom_call.1} parent=55 // pred_fallthru
          _
        %v928 = vld [vmem:[#allocation2] sm:$0xf]
        %v929 = vld [vmem:[#allocation2 + $0x8] sm:$0xf]
        %v930 = vld [vmem:[#allocation2 + $0x10] sm:$0xf]
        %v931 = vld [vmem:[#allocation2 + $0x18] sm:$0xf]
        %v932 = vld [vmem:[#allocation2 + $0x20] sm:$0xf]
        %v933 = vld [vmem:[#allocation2 + $0x28] sm:$0xf]
        %v934 = vld [vmem:[#allocation2 + $0x30] sm:$0xf]
        %v935 = vld [vmem:[#allocation2 + $0x38] sm:$0xf]
        %v936 = vld [vmem:[#allocation2 + $0x40] sm:$0xf]
        %v937 = vld [vmem:[#allocation2 + $0x48] sm:$0xf]
        %v938 = vld [vmem:[#allocation10] sm:$0x3]
        %v939 = vld [vmem:[#allocation2 + $0x4] sm:$0x1]
        %v940 = vld [vmem:[#allocation2 + $0xc] sm:$0x1]
        %v941 = vld [vmem:[#allocation2 + $0x14] sm:$0x1]
        %v942 = vld [vmem:[#allocation2 + $0x1c] sm:$0x1]
        %v943 = vld [vmem:[#allocation2 + $0x24] sm:$0x1]
        %v944 = vld [vmem:[#allocation2 + $0x2c] sm:$0x1]
        %v945 = vld [vmem:[#allocation2 + $0x34] sm:$0x1]
        %v946 = vld [vmem:[#allocation2 + $0x3c] sm:$0x1]
        %v947 = vld [vmem:[#allocation2 + $0x44] sm:$0x1]
        %v948 = vld [vmem:[#allocation2 + $0x4c] sm:$0x1]
        %vm949 = vsmask.f32 3328
        %vm950 = vsmask.f32 7440
        %vm951 = vmor %vm949, %vm950
        %v953 = vshrl.u32 %v928, 16
        %v955 = vrot.slane %v953, 4
        %v956 = vshll.u32 %v928, 16
        %v958 = vrot.slane %v956, 5
        %v959 = vor.u32 %v955, %v958
        %v960 = vrot.slane %v959, 4
        %v962 = vshll.u32 %v939, 16
        %v964 = vrot.slane %v962, 5
        %v965 = vsel %vm951, %v960, %v964
        %v967 = vshrl.u32 %v929, 16
        %v969 = vrot.slane %v967, 4
        %v970 = vshll.u32 %v929, 16
        %v972 = vrot.slane %v970, 5
        %v973 = vor.u32 %v969, %v972
        %v974 = vrot.slane %v973, 4
        %v976 = vshll.u32 %v940, 16
        %v978 = vrot.slane %v976, 5
        %v979 = vsel %vm951, %v974, %v978
        %v981 = vshrl.u32 %v930, 16
        %v983 = vrot.slane %v981, 4
        %v984 = vshll.u32 %v930, 16
        %v986 = vrot.slane %v984, 5
        %v987 = vor.u32 %v983, %v986
        %v988 = vrot.slane %v987, 4
        %v990 = vshll.u32 %v941, 16
        %v992 = vrot.slane %v990, 5
        %v993 = vsel %vm951, %v988, %v992
        %v995 = vshrl.u32 %v931, 16
        %v997 = vrot.slane %v995, 4
        %v998 = vshll.u32 %v931, 16
        %v1000 = vrot.slane %v998, 5
        %v1001 = vor.u32 %v997, %v1000
        %v1002 = vrot.slane %v1001, 4
        %v1004 = vshll.u32 %v942, 16
        %v1006 = vrot.slane %v1004, 5
        %v1007 = vsel %vm951, %v1002, %v1006
        %v1009 = vshrl.u32 %v932, 16
        %v1011 = vrot.slane %v1009, 4
        %v1012 = vshll.u32 %v932, 16
        %v1014 = vrot.slane %v1012, 5
        %v1015 = vor.u32 %v1011, %v1014
        %v1016 = vrot.slane %v1015, 4
        %v1018 = vshll.u32 %v943, 16
        %v1020 = vrot.slane %v1018, 5
        %v1021 = vsel %vm951, %v1016, %v1020
        %v1023 = vshrl.u32 %v933, 16
        %v1025 = vrot.slane %v1023, 4
        %v1026 = vshll.u32 %v933, 16
        %v1028 = vrot.slane %v1026, 5
        %v1029 = vor.u32 %v1025, %v1028
        %v1030 = vrot.slane %v1029, 4
        %v1032 = vshll.u32 %v944, 16
        %v1034 = vrot.slane %v1032, 5
        %v1035 = vsel %vm951, %v1030, %v1034
        %v1037 = vshrl.u32 %v934, 16
        %v1039 = vrot.slane %v1037, 4
        %v1040 = vshll.u32 %v934, 16
        %v1042 = vrot.slane %v1040, 5
        %v1043 = vor.u32 %v1039, %v1042
        %v1044 = vrot.slane %v1043, 4
        %v1046 = vshll.u32 %v945, 16
        %v1048 = vrot.slane %v1046, 5
        %v1049 = vsel %vm951, %v1044, %v1048
        %v1051 = vshrl.u32 %v935, 16
        %v1053 = vrot.slane %v1051, 4
        %v1054 = vshll.u32 %v935, 16
        %v1056 = vrot.slane %v1054, 5
        %v1057 = vor.u32 %v1053, %v1056
        %v1058 = vrot.slane %v1057, 4
        %v1060 = vshll.u32 %v946, 16
        %v1062 = vrot.slane %v1060, 5
        %v1063 = vsel %vm951, %v1058, %v1062
        %v1065 = vshrl.u32 %v936, 16
        %v1067 = vrot.slane %v1065, 4
        %v1068 = vshll.u32 %v936, 16
        %v1070 = vrot.slane %v1068, 5
        %v1071 = vor.u32 %v1067, %v1070
        %v1072 = vrot.slane %v1071, 4
        %v1074 = vshll.u32 %v947, 16
        %v1076 = vrot.slane %v1074, 5
        %v1077 = vsel %vm951, %v1072, %v1076
        %v1079 = vshrl.u32 %v937, 16
        %v1081 = vrot.slane %v1079, 4
        %v1082 = vshll.u32 %v937, 16
        %v1084 = vrot.slane %v1082, 5
        %v1085 = vor.u32 %v1081, %v1084
        %v1086 = vrot.slane %v1085, 4
        %v1088 = vshll.u32 %v948, 16
        %v1090 = vrot.slane %v1088, 5
        %v1091 = vsel %vm951, %v1086, %v1090
        %s1092 = scalar_lea.vmem [#allocation10], 2
        %v1093 = vld [vmem:[%s1092] sm:$0x3]
        %v1094 = vunpack.c.l.b16 %v965
        %v1095 = vunpack.c.l.b16 %v979
        %v1096 = vunpack.c.l.b16 %v993
        %v1097 = vunpack.c.l.b16 %v1007
        %v1098 = vunpack.c.l.b16 %v1021
        %v1099 = vunpack.c.l.b16 %v1035
        %v1100 = vunpack.c.l.b16 %v1049
        %v1101 = vunpack.c.l.b16 %v1063
        %v1102 = vunpack.c.l.b16 %v1077
        %v1103 = vunpack.c.l.b16 %v1091
        %v1104 = vpack.c.b16 %v1095, %v1094
        %v1105 = vpack.c.b16 %v1097, %v1096
        %v1106 = vpack.c.b16 %v1099, %v1098
        %v1107 = vpack.c.b16 %v1101, %v1100
        %v1108 = vpack.c.b16 %v1103, %v1102
        %vm1109 = vcmask 31744
        %v1111 = vsel %vm1109, %v1104, 0
        %v1114 = vsel %vm1109, %v1105, 0
        %v1117 = vsel %vm1109, %v1106, 0
        %v1120 = vsel %vm1109, %v1107, 0
        %v1123 = vsel %vm1109, %v1108, 0
        %vm1125 = vcmask 1041408
        %v1127 = vsel %vm1125, %v1093, 0
        %1129 = vmatprep.subr.bf16.mxu0 0
        %1130 = vmatpush1.bf16.msra.mxu0 0
        %1131 = vmatprep.subr.bf16.mxu0 0
        %1132 = vmatpush1.bf16.msra.mxu0 0
        %1133 = vmatprep.subr.bf16.mxu0 0
        %1134 = vmatpush1.bf16.msra.mxu0 0
        %1135 = vmatprep.subr.bf16.mxu0 0
        %1136 = vmatpush1.bf16.msra.mxu0 0
        %1137 = vmatprep.subr.bf16.mxu0 0
        %1138 = vmatpush1.bf16.msra.mxu0 0
        %1139 = vmatprep.subr.bf16.mxu0 0
        %1140 = vmatpush1.bf16.msra.mxu0 0
        %1141 = vmatprep.subr.bf16.mxu0 0
        %1142 = vmatpush1.bf16.msra.mxu0 0
        %1143 = vmatprep.subr.bf16.mxu0 0
        %1144 = vmatpush1.bf16.msra.mxu0 %v1127
        %1145 = vmatprep.subr.bf16.mxu0 0
        %1146 = vmatpush2.bf16.msra.mxu0 0
        %1147 = vmatprep.subr.bf16.mxu0 0
        %1148 = vmatpush2.bf16.msra.mxu0 0
        %1149 = vmatprep.subr.bf16.mxu0 0
        %1150 = vmatpush2.bf16.msra.mxu0 0
        %1151 = vmatprep.subr.bf16.mxu0 0
        %1152 = vmatpush2.bf16.msra.mxu0 0
        %1153 = vmatprep.subr.bf16.mxu0 0
        %1154 = vmatpush2.bf16.msra.mxu0 0
        %1155 = vmatprep.subr.bf16.mxu0 0
        %1156 = vmatpush2.bf16.msra.mxu0 0
        %1157 = vmatprep.subr.bf16.mxu0 0
        %1158 = vmatpush2.bf16.msra.mxu0 0
        %1159 = vmatprep.subr.bf16.mxu0 0
        %1160 = vmatpush2.bf16.msra.mxu0 0
        %1161 = vmatprep.mubr.bf16.mxu0 0
        %1162 = vmatmul.mubr.bf16.gmra.mxu0 %v1111
        %v1163 = vpop.f32.mrf.mxu0
        %v1164 = vadd.f32 0.0, %v1163
        %v1165 = vpop.f32.mrf.mxu0
        %v1166 = vpop.f32.mrf.mxu0
        %v1167 = vadd.f32 0.0, %v1166
        %v1168 = vpop.f32.mrf.mxu0
        %1169 = vmatprep.mubr.bf16.mxu0 0
        %1170 = vmatmul.mubr.bf16.gmra.mxu0 %v1114
        %v1171 = vpop.f32.mrf.mxu0
        %v1172 = vadd.f32 0.0, %v1171
        %v1173 = vpop.f32.mrf.mxu0
        %v1174 = vpop.f32.mrf.mxu0
        %v1175 = vadd.f32 0.0, %v1174
        %v1176 = vpop.f32.mrf.mxu0
        %1177 = vmatprep.mubr.bf16.mxu0 0
        %1178 = vmatmul.mubr.bf16.gmra.mxu0 %v1117
        %v1179 = vpop.f32.mrf.mxu0
        %v1180 = vadd.f32 0.0, %v1179
        %v1181 = vpop.f32.mrf.mxu0
        %v1182 = vpop.f32.mrf.mxu0
        %v1183 = vadd.f32 0.0, %v1182
        %v1184 = vpop.f32.mrf.mxu0
        %1185 = vmatprep.mubr.bf16.mxu0 0
        %1186 = vmatmul.mubr.bf16.gmra.mxu0 %v1120
        %v1187 = vpop.f32.mrf.mxu0
        %v1188 = vadd.f32 0.0, %v1187
        %v1189 = vpop.f32.mrf.mxu0
        %v1190 = vpop.f32.mrf.mxu0
        %v1191 = vadd.f32 0.0, %v1190
        %v1192 = vpop.f32.mrf.mxu0
        %1193 = vmatprep.mubr.bf16.mxu0 0
        %1194 = vmatmul.mubr.bf16.gmra.mxu0 %v1123
        %v1195 = vpop.f32.mrf.mxu0
        %v1196 = vadd.f32 0.0, %v1195
        %v1197 = vpop.f32.mrf.mxu0
        %v1198 = vpop.f32.mrf.mxu0
        %v1199 = vadd.f32 0.0, %v1198
        %v1200 = vpop.f32.mrf.mxu0
        %1201 = vdwg.mxu0
        %v1212 = vunpack.c.l.b16 %v928
        %v1213 = vunpack.c.l.b16 %v929
        %v1214 = vunpack.c.l.b16 %v930
        %v1215 = vunpack.c.l.b16 %v931
        %v1216 = vunpack.c.l.b16 %v932
        %v1217 = vunpack.c.l.b16 %v933
        %v1218 = vunpack.c.l.b16 %v934
        %v1219 = vunpack.c.l.b16 %v935
        %v1220 = vunpack.c.l.b16 %v936
        %v1221 = vunpack.c.l.b16 %v937
        %v1222 = vpack.c.b16 %v1213, %v1212
        %v1223 = vpack.c.b16 %v1215, %v1214
        %v1224 = vpack.c.b16 %v1217, %v1216
        %v1225 = vpack.c.b16 %v1219, %v1218
        %v1226 = vpack.c.b16 %v1221, %v1220
        %v1228 = vsel %vm1109, %v1222, 0
        %v1231 = vsel %vm1109, %v1223, 0
        %v1234 = vsel %vm1109, %v1224, 0
        %v1237 = vsel %vm1109, %v1225, 0
        %v1240 = vsel %vm1109, %v1226, 0
        %v1243 = vsel %vm1125, %v938, 0
        %1245 = vmatprep.subr.bf16.mxu0 0
        %1246 = vmatpush1.bf16.msra.mxu0 0
        %1247 = vmatprep.subr.bf16.mxu0 0
        %1248 = vmatpush1.bf16.msra.mxu0 0
        %1249 = vmatprep.subr.bf16.mxu0 0
        %1250 = vmatpush1.bf16.msra.mxu0 0
        %1251 = vmatprep.subr.bf16.mxu0 0
        %1252 = vmatpush1.bf16.msra.mxu0 0
        %1253 = vmatprep.subr.bf16.mxu0 0
        %1254 = vmatpush1.bf16.msra.mxu0 0
        %1255 = vmatprep.subr.bf16.mxu0 0
        %1256 = vmatpush1.bf16.msra.mxu0 0
        %1257 = vmatprep.subr.bf16.mxu0 0
        %1258 = vmatpush1.bf16.msra.mxu0 0
        %1259 = vmatprep.subr.bf16.mxu0 0
        %1260 = vmatpush1.bf16.msra.mxu0 %v1243
        %1261 = vmatprep.subr.bf16.mxu0 0
        %1262 = vmatpush2.bf16.msra.mxu0 0
        %1263 = vmatprep.subr.bf16.mxu0 0
        %1264 = vmatpush2.bf16.msra.mxu0 0
        %1265 = vmatprep.subr.bf16.mxu0 0
        %1266 = vmatpush2.bf16.msra.mxu0 0
        %1267 = vmatprep.subr.bf16.mxu0 0
        %1268 = vmatpush2.bf16.msra.mxu0 0
        %1269 = vmatprep.subr.bf16.mxu0 0
        %1270 = vmatpush2.bf16.msra.mxu0 0
        %1271 = vmatprep.subr.bf16.mxu0 0
        %1272 = vmatpush2.bf16.msra.mxu0 0
        %1273 = vmatprep.subr.bf16.mxu0 0
        %1274 = vmatpush2.bf16.msra.mxu0 0
        %1275 = vmatprep.subr.bf16.mxu0 0
        %1276 = vmatpush2.bf16.msra.mxu0 0
        %1277 = vmatprep.mubr.bf16.mxu0 0
        %1278 = vmatmul.mubr.bf16.gmra.mxu0 %v1228
        %v1279 = vpop.f32.mrf.mxu0
        %v1280 = vadd.f32 %v1164, %v1279
        %v1281 = vpop.f32.mrf.mxu0
        %v1282 = vpop.f32.mrf.mxu0
        %v1283 = vadd.f32 %v1167, %v1282
        %v1284 = vpop.f32.mrf.mxu0
        %1285 = vmatprep.mubr.bf16.mxu0 0
        %1286 = vmatmul.mubr.bf16.gmra.mxu0 %v1231
        %v1287 = vpop.f32.mrf.mxu0
        %v1288 = vadd.f32 %v1172, %v1287
        %v1289 = vpop.f32.mrf.mxu0
        %v1290 = vpop.f32.mrf.mxu0
        %v1291 = vadd.f32 %v1175, %v1290
        %v1292 = vpop.f32.mrf.mxu0
        %1293 = vmatprep.mubr.bf16.mxu0 0
        %1294 = vmatmul.mubr.bf16.gmra.mxu0 %v1234
        %v1295 = vpop.f32.mrf.mxu0
        %v1296 = vadd.f32 %v1180, %v1295
        %v1297 = vpop.f32.mrf.mxu0
        %v1298 = vpop.f32.mrf.mxu0
        %v1299 = vadd.f32 %v1183, %v1298
        %v1300 = vpop.f32.mrf.mxu0
        %1301 = vmatprep.mubr.bf16.mxu0 0
        %1302 = vmatmul.mubr.bf16.gmra.mxu0 %v1237
        %v1303 = vpop.f32.mrf.mxu0
        %v1304 = vadd.f32 %v1188, %v1303
        %v1305 = vpop.f32.mrf.mxu0
        %v1306 = vpop.f32.mrf.mxu0
        %v1307 = vadd.f32 %v1191, %v1306
        %v1308 = vpop.f32.mrf.mxu0
        %1309 = vmatprep.mubr.bf16.mxu0 0
        %1310 = vmatmul.mubr.bf16.gmra.mxu0 %v1240
        %v1311 = vpop.f32.mrf.mxu0
        %v1312 = vadd.f32 %v1196, %v1311
        %v1313 = vpop.f32.mrf.mxu0
        %v1314 = vpop.f32.mrf.mxu0
        %v1315 = vadd.f32 %v1199, %v1314
        %v1316 = vpop.f32.mrf.mxu0
        %1317 = vdwg.mxu0
        %v1318 = vld [vmem:[#allocation2] sm:$0xe]
        %v1319 = vld [vmem:[#allocation2 + $0x8] sm:$0xe]
        %v1320 = vld [vmem:[#allocation2 + $0x10] sm:$0xe]
        %v1321 = vld [vmem:[#allocation2 + $0x18] sm:$0xe]
        %v1322 = vld [vmem:[#allocation2 + $0x20] sm:$0xe]
        %v1323 = vld [vmem:[#allocation2 + $0x28] sm:$0xe]
        %v1324 = vld [vmem:[#allocation2 + $0x30] sm:$0xe]
        %v1325 = vld [vmem:[#allocation2 + $0x38] sm:$0xe]
        %v1326 = vld [vmem:[#allocation2 + $0x40] sm:$0xe]
        %v1327 = vld [vmem:[#allocation2 + $0x48] sm:$0xe]
        %vm1348 = vcmask 1042432
        %vm1349 = vcmask 1046532
        %vm1350 = vmor %vm1348, %vm1349
        %v1351 = vrot.slane %v1318, 5
        %v1352 = vrot.slane %v1351, 4
        %v1353 = vrot.slane %v939, 5
        %v1354 = vsel %vm1350, %v1352, %v1353
        %v1355 = vrot.slane %v1319, 5
        %v1356 = vrot.slane %v1355, 4
        %v1357 = vrot.slane %v940, 5
        %v1358 = vsel %vm1350, %v1356, %v1357
        %v1359 = vrot.slane %v1320, 5
        %v1360 = vrot.slane %v1359, 4
        %v1361 = vrot.slane %v941, 5
        %v1362 = vsel %vm1350, %v1360, %v1361
        %v1363 = vrot.slane %v1321, 5
        %v1364 = vrot.slane %v1363, 4
        %v1365 = vrot.slane %v942, 5
        %v1366 = vsel %vm1350, %v1364, %v1365
        %v1367 = vrot.slane %v1322, 5
        %v1368 = vrot.slane %v1367, 4
        %v1369 = vrot.slane %v943, 5
        %v1370 = vsel %vm1350, %v1368, %v1369
        %v1371 = vrot.slane %v1323, 5
        %v1372 = vrot.slane %v1371, 4
        %v1373 = vrot.slane %v944, 5
        %v1374 = vsel %vm1350, %v1372, %v1373
        %v1375 = vrot.slane %v1324, 5
        %v1376 = vrot.slane %v1375, 4
        %v1377 = vrot.slane %v945, 5
        %v1378 = vsel %vm1350, %v1376, %v1377
        %v1379 = vrot.slane %v1325, 5
        %v1380 = vrot.slane %v1379, 4
        %v1381 = vrot.slane %v946, 5
        %v1382 = vsel %vm1350, %v1380, %v1381
        %v1383 = vrot.slane %v1326, 5
        %v1384 = vrot.slane %v1383, 4
        %v1385 = vrot.slane %v947, 5
        %v1386 = vsel %vm1350, %v1384, %v1385
        %v1387 = vrot.slane %v1327, 5
        %v1388 = vrot.slane %v1387, 4
        %v1389 = vrot.slane %v948, 5
        %v1390 = vsel %vm1350, %v1388, %v1389
        %s1391 = scalar_lea.vmem [#allocation10], 4
        %v1392 = vld [vmem:[%s1391] sm:$0x3]
        %v1393 = vunpack.c.l.b16 %v1354
        %v1394 = vunpack.c.l.b16 %v1358
        %v1395 = vunpack.c.l.b16 %v1362
        %v1396 = vunpack.c.l.b16 %v1366
        %v1397 = vunpack.c.l.b16 %v1370
        %v1398 = vunpack.c.l.b16 %v1374
        %v1399 = vunpack.c.l.b16 %v1378
        %v1400 = vunpack.c.l.b16 %v1382
        %v1401 = vunpack.c.l.b16 %v1386
        %v1402 = vunpack.c.l.b16 %v1390
        %v1403 = vpack.c.b16 %v1394, %v1393
        %v1404 = vpack.c.b16 %v1396, %v1395
        %v1405 = vpack.c.b16 %v1398, %v1397
        %v1406 = vpack.c.b16 %v1400, %v1399
        %v1407 = vpack.c.b16 %v1402, %v1401
        %v1409 = vsel %vm1109, %v1403, 0
        %v1412 = vsel %vm1109, %v1404, 0
        %v1415 = vsel %vm1109, %v1405, 0
        %v1418 = vsel %vm1109, %v1406, 0
        %v1421 = vsel %vm1109, %v1407, 0
        %v1424 = vsel %vm1125, %v1392, 0
        %1426 = vmatprep.subr.bf16.mxu0 0
        %1427 = vmatpush1.bf16.msra.mxu0 0
        %1428 = vmatprep.subr.bf16.mxu0 0
        %1429 = vmatpush1.bf16.msra.mxu0 0
        %1430 = vmatprep.subr.bf16.mxu0 0
        %1431 = vmatpush1.bf16.msra.mxu0 0
        %1432 = vmatprep.subr.bf16.mxu0 0
        %1433 = vmatpush1.bf16.msra.mxu0 0
        %1434 = vmatprep.subr.bf16.mxu0 0
        %1435 = vmatpush1.bf16.msra.mxu0 0
        %1436 = vmatprep.subr.bf16.mxu0 0
        %1437 = vmatpush1.bf16.msra.mxu0 0
        %1438 = vmatprep.subr.bf16.mxu0 0
        %1439 = vmatpush1.bf16.msra.mxu0 0
        %1440 = vmatprep.subr.bf16.mxu0 0
        %1441 = vmatpush1.bf16.msra.mxu0 %v1424
        %1442 = vmatprep.subr.bf16.mxu0 0
        %1443 = vmatpush2.bf16.msra.mxu0 0
        %1444 = vmatprep.subr.bf16.mxu0 0
        %1445 = vmatpush2.bf16.msra.mxu0 0
        %1446 = vmatprep.subr.bf16.mxu0 0
        %1447 = vmatpush2.bf16.msra.mxu0 0
        %1448 = vmatprep.subr.bf16.mxu0 0
        %1449 = vmatpush2.bf16.msra.mxu0 0
        %1450 = vmatprep.subr.bf16.mxu0 0
        %1451 = vmatpush2.bf16.msra.mxu0 0
        %1452 = vmatprep.subr.bf16.mxu0 0
        %1453 = vmatpush2.bf16.msra.mxu0 0
        %1454 = vmatprep.subr.bf16.mxu0 0
        %1455 = vmatpush2.bf16.msra.mxu0 0
        %1456 = vmatprep.subr.bf16.mxu0 0
        %1457 = vmatpush2.bf16.msra.mxu0 0
        %1458 = vmatprep.mubr.bf16.mxu0 0
        %1459 = vmatmul.mubr.bf16.gmra.mxu0 %v1409
        %v1460 = vpop.f32.mrf.mxu0
        %v1461 = vadd.f32 0.0, %v1460
        %v1462 = vpop.f32.mrf.mxu0
        %v1463 = vpop.f32.mrf.mxu0
        %v1464 = vadd.f32 0.0, %v1463
        %v1465 = vpop.f32.mrf.mxu0
        %1466 = vmatprep.mubr.bf16.mxu0 0
        %1467 = vmatmul.mubr.bf16.gmra.mxu0 %v1412
        %v1468 = vpop.f32.mrf.mxu0
        %v1469 = vadd.f32 0.0, %v1468
        %v1470 = vpop.f32.mrf.mxu0
        %v1471 = vpop.f32.mrf.mxu0
        %v1472 = vadd.f32 0.0, %v1471
        %v1473 = vpop.f32.mrf.mxu0
        %1474 = vmatprep.mubr.bf16.mxu0 0
        %1475 = vmatmul.mubr.bf16.gmra.mxu0 %v1415
        %v1476 = vpop.f32.mrf.mxu0
        %v1477 = vadd.f32 0.0, %v1476
        %v1478 = vpop.f32.mrf.mxu0
        %v1479 = vpop.f32.mrf.mxu0
        %v1480 = vadd.f32 0.0, %v1479
        %v1481 = vpop.f32.mrf.mxu0
        %1482 = vmatprep.mubr.bf16.mxu0 0
        %1483 = vmatmul.mubr.bf16.gmra.mxu0 %v1418
        %v1484 = vpop.f32.mrf.mxu0
        %v1485 = vadd.f32 0.0, %v1484
        %v1486 = vpop.f32.mrf.mxu0
        %v1487 = vpop.f32.mrf.mxu0
        %v1488 = vadd.f32 0.0, %v1487
        %v1489 = vpop.f32.mrf.mxu0
        %1490 = vmatprep.mubr.bf16.mxu0 0
        %1491 = vmatmul.mubr.bf16.gmra.mxu0 %v1421
        %v1492 = vpop.f32.mrf.mxu0
        %v1493 = vadd.f32 0.0, %v1492
        %v1494 = vpop.f32.mrf.mxu0
        %v1495 = vpop.f32.mrf.mxu0
        %v1496 = vadd.f32 0.0, %v1495
        %v1497 = vpop.f32.mrf.mxu0
        %1498 = vdwg.mxu0
        %v1499 = vadd.f32 %v1280, %v1461
        %v1500 = vadd.f32 %v1283, %v1464
        %v1501 = vadd.f32 %v1288, %v1469
        %v1502 = vadd.f32 %v1291, %v1472
        %v1503 = vadd.f32 %v1296, %v1477
        %v1504 = vadd.f32 %v1299, %v1480
        %v1505 = vadd.f32 %v1304, %v1485
        %v1506 = vadd.f32 %v1307, %v1488
        %v1507 = vadd.f32 %v1312, %v1493
        %v1508 = vadd.f32 %v1315, %v1496
        %s1509 = scalar_lea.vmem [#allocation2], 8
        %v1510 = vld [vmem:[%s1509] sm:$0xf]
        %v1511 = vld [vmem:[%s1509 + $0x8] sm:$0xf]
        %v1512 = vld [vmem:[%s1509 + $0x10] sm:$0xf]
        %v1513 = vld [vmem:[%s1509 + $0x18] sm:$0xf]
        %v1514 = vld [vmem:[%s1509 + $0x20] sm:$0xf]
        %v1515 = vld [vmem:[%s1509 + $0x28] sm:$0xf]
        %v1516 = vld [vmem:[%s1509 + $0x30] sm:$0xf]
        %v1517 = vld [vmem:[%s1509 + $0x38] sm:$0xf]
        %v1518 = vld [vmem:[%s1509 + $0x40] sm:$0xf]
        %v1519 = vld [vmem:[%s1509 + $0x48] sm:$0xf]
        %s1520 = scalar_lea.vmem [#allocation10], 6
        %v1521 = vld [vmem:[%s1520] sm:$0x3]
        %v1532 = vunpack.c.l.b16 %v1510
        %v1533 = vunpack.c.l.b16 %v1511
        %v1534 = vunpack.c.l.b16 %v1512
        %v1535 = vunpack.c.l.b16 %v1513
        %v1536 = vunpack.c.l.b16 %v1514
        %v1537 = vunpack.c.l.b16 %v1515
        %v1538 = vunpack.c.l.b16 %v1516
        %v1539 = vunpack.c.l.b16 %v1517
        %v1540 = vunpack.c.l.b16 %v1518
        %v1541 = vunpack.c.l.b16 %v1519
        %v1542 = vpack.c.b16 %v1533, %v1532
        %v1543 = vpack.c.b16 %v1535, %v1534
        %v1544 = vpack.c.b16 %v1537, %v1536
        %v1545 = vpack.c.b16 %v1539, %v1538
        %v1546 = vpack.c.b16 %v1541, %v1540
        %v1548 = vsel %vm1109, %v1542, 0
        %v1551 = vsel %vm1109, %v1543, 0
        %v1554 = vsel %vm1109, %v1544, 0
        %v1557 = vsel %vm1109, %v1545, 0
        %v1560 = vsel %vm1109, %v1546, 0
        %v1563 = vsel %vm1125, %v1521, 0
        %1565 = vmatprep.subr.bf16.mxu0 0
        %1566 = vmatpush1.bf16.msra.mxu0 0
        %1567 = vmatprep.subr.bf16.mxu0 0
        %1568 = vmatpush1.bf16.msra.mxu0 0
        %1569 = vmatprep.subr.bf16.mxu0 0
        %1570 = vmatpush1.bf16.msra.mxu0 0
        %1571 = vmatprep.subr.bf16.mxu0 0
        %1572 = vmatpush1.bf16.msra.mxu0 0
        %1573 = vmatprep.subr.bf16.mxu0 0
        %1574 = vmatpush1.bf16.msra.mxu0 0
        %1575 = vmatprep.subr.bf16.mxu0 0
        %1576 = vmatpush1.bf16.msra.mxu0 0
        %1577 = vmatprep.subr.bf16.mxu0 0
        %1578 = vmatpush1.bf16.msra.mxu0 0
        %1579 = vmatprep.subr.bf16.mxu0 0
        %1580 = vmatpush1.bf16.msra.mxu0 %v1563
        %1581 = vmatprep.subr.bf16.mxu0 0
        %1582 = vmatpush2.bf16.msra.mxu0 0
        %1583 = vmatprep.subr.bf16.mxu0 0
        %1584 = vmatpush2.bf16.msra.mxu0 0
        %1585 = vmatprep.subr.bf16.mxu0 0
        %1586 = vmatpush2.bf16.msra.mxu0 0
        %1587 = vmatprep.subr.bf16.mxu0 0
        %1588 = vmatpush2.bf16.msra.mxu0 0
        %1589 = vmatprep.subr.bf16.mxu0 0
        %1590 = vmatpush2.bf16.msra.mxu0 0
        %1591 = vmatprep.subr.bf16.mxu0 0
        %1592 = vmatpush2.bf16.msra.mxu0 0
        %1593 = vmatprep.subr.bf16.mxu0 0
        %1594 = vmatpush2.bf16.msra.mxu0 0
        %1595 = vmatprep.subr.bf16.mxu0 0
        %1596 = vmatpush2.bf16.msra.mxu0 0
        %1597 = vmatprep.mubr.bf16.mxu0 0
        %1598 = vmatmul.mubr.bf16.gmra.mxu0 %v1548
        %v1599 = vpop.f32.mrf.mxu0
        %v1600 = vadd.f32 0.0, %v1599
        %v1601 = vpop.f32.mrf.mxu0
        %v1602 = vpop.f32.mrf.mxu0
        %v1603 = vadd.f32 0.0, %v1602
        %v1604 = vpop.f32.mrf.mxu0
        %1605 = vmatprep.mubr.bf16.mxu0 0
        %1606 = vmatmul.mubr.bf16.gmra.mxu0 %v1551
        %v1607 = vpop.f32.mrf.mxu0
        %v1608 = vadd.f32 0.0, %v1607
        %v1609 = vpop.f32.mrf.mxu0
        %v1610 = vpop.f32.mrf.mxu0
        %v1611 = vadd.f32 0.0, %v1610
        %v1612 = vpop.f32.mrf.mxu0
        %1613 = vmatprep.mubr.bf16.mxu0 0
        %1614 = vmatmul.mubr.bf16.gmra.mxu0 %v1554
        %v1615 = vpop.f32.mrf.mxu0
        %v1616 = vadd.f32 0.0, %v1615
        %v1617 = vpop.f32.mrf.mxu0
        %v1618 = vpop.f32.mrf.mxu0
        %v1619 = vadd.f32 0.0, %v1618
        %v1620 = vpop.f32.mrf.mxu0
        %1621 = vmatprep.mubr.bf16.mxu0 0
        %1622 = vmatmul.mubr.bf16.gmra.mxu0 %v1557
        %v1623 = vpop.f32.mrf.mxu0
        %v1624 = vadd.f32 0.0, %v1623
        %v1625 = vpop.f32.mrf.mxu0
        %v1626 = vpop.f32.mrf.mxu0
        %v1627 = vadd.f32 0.0, %v1626
        %v1628 = vpop.f32.mrf.mxu0
        %1629 = vmatprep.mubr.bf16.mxu0 0
        %1630 = vmatmul.mubr.bf16.gmra.mxu0 %v1560
        %v1631 = vpop.f32.mrf.mxu0
        %v1632 = vadd.f32 0.0, %v1631
        %v1633 = vpop.f32.mrf.mxu0
        %v1634 = vpop.f32.mrf.mxu0
        %v1635 = vadd.f32 0.0, %v1634
        %v1636 = vpop.f32.mrf.mxu0
        %1637 = vdwg.mxu0
        %v1638 = vadd.f32 %v1499, %v1600
        %v1639 = vadd.f32 %v1500, %v1603
        %v1640 = vadd.f32 %v1501, %v1608
        %v1641 = vadd.f32 %v1502, %v1611
        %v1642 = vadd.f32 %v1503, %v1616
        %v1643 = vadd.f32 %v1504, %v1619
        %v1644 = vadd.f32 %v1505, %v1624
        %v1645 = vadd.f32 %v1506, %v1627
        %v1646 = vadd.f32 %v1507, %v1632
        %v1647 = vadd.f32 %v1508, %v1635
        %v1648 = vld [vmem:[%s1509] sm:$0xf]
        %v1649 = vld [vmem:[%s1509 + $0x4] sm:$0x1]
        %v1650 = vld [vmem:[%s1509 + $0x8] sm:$0xf]
        %v1651 = vld [vmem:[%s1509 + $0xc] sm:$0x1]
        %v1652 = vld [vmem:[%s1509 + $0x10] sm:$0xf]
        %v1653 = vld [vmem:[%s1509 + $0x14] sm:$0x1]
        %v1654 = vld [vmem:[%s1509 + $0x18] sm:$0xf]
        %v1655 = vld [vmem:[%s1509 + $0x1c] sm:$0x1]
        %v1656 = vld [vmem:[%s1509 + $0x20] sm:$0xf]
        %v1657 = vld [vmem:[%s1509 + $0x24] sm:$0x1]
        %v1658 = vld [vmem:[%s1509 + $0x28] sm:$0xf]
        %v1659 = vld [vmem:[%s1509 + $0x2c] sm:$0x1]
        %v1660 = vld [vmem:[%s1509 + $0x30] sm:$0xf]
        %v1661 = vld [vmem:[%s1509 + $0x34] sm:$0x1]
        %v1662 = vld [vmem:[%s1509 + $0x38] sm:$0xf]
        %v1663 = vld [vmem:[%s1509 + $0x3c] sm:$0x1]
        %v1664 = vld [vmem:[%s1509 + $0x40] sm:$0xf]
        %v1665 = vld [vmem:[%s1509 + $0x44] sm:$0x1]
        %v1666 = vld [vmem:[%s1509 + $0x48] sm:$0xf]
        %v1667 = vld [vmem:[%s1509 + $0x4c] sm:$0x1]
        %v1669 = vshrl.u32 %v1648, 16
        %v1671 = vrot.slane %v1669, 4
        %v1672 = vshll.u32 %v1648, 16
        %v1674 = vrot.slane %v1672, 5
        %v1675 = vor.u32 %v1671, %v1674
        %v1676 = vrot.slane %v1675, 4
        %v1678 = vshll.u32 %v1649, 16
        %v1680 = vrot.slane %v1678, 5
        %v1681 = vsel %vm951, %v1676, %v1680
        %v1683 = vshrl.u32 %v1650, 16
        %v1685 = vrot.slane %v1683, 4
        %v1686 = vshll.u32 %v1650, 16
        %v1688 = vrot.slane %v1686, 5
        %v1689 = vor.u32 %v1685, %v1688
        %v1690 = vrot.slane %v1689, 4
        %v1692 = vshll.u32 %v1651, 16
        %v1694 = vrot.slane %v1692, 5
        %v1695 = vsel %vm951, %v1690, %v1694
        %v1697 = vshrl.u32 %v1652, 16
        %v1699 = vrot.slane %v1697, 4
        %v1700 = vshll.u32 %v1652, 16
        %v1702 = vrot.slane %v1700, 5
        %v1703 = vor.u32 %v1699, %v1702
        %v1704 = vrot.slane %v1703, 4
        %v1706 = vshll.u32 %v1653, 16
        %v1708 = vrot.slane %v1706, 5
        %v1709 = vsel %vm951, %v1704, %v1708
        %v1711 = vshrl.u32 %v1654, 16
        %v1713 = vrot.slane %v1711, 4
        %v1714 = vshll.u32 %v1654, 16
        %v1716 = vrot.slane %v1714, 5
        %v1717 = vor.u32 %v1713, %v1716
        %v1718 = vrot.slane %v1717, 4
        %v1720 = vshll.u32 %v1655, 16
        %v1722 = vrot.slane %v1720, 5
        %v1723 = vsel %vm951, %v1718, %v1722
        %v1725 = vshrl.u32 %v1656, 16
        %v1727 = vrot.slane %v1725, 4
        %v1728 = vshll.u32 %v1656, 16
        %v1730 = vrot.slane %v1728, 5
        %v1731 = vor.u32 %v1727, %v1730
        %v1732 = vrot.slane %v1731, 4
        %v1734 = vshll.u32 %v1657, 16
        %v1736 = vrot.slane %v1734, 5
        %v1737 = vsel %vm951, %v1732, %v1736
        %v1739 = vshrl.u32 %v1658, 16
        %v1741 = vrot.slane %v1739, 4
        %v1742 = vshll.u32 %v1658, 16
        %v1744 = vrot.slane %v1742, 5
        %v1745 = vor.u32 %v1741, %v1744
        %v1746 = vrot.slane %v1745, 4
        %v1748 = vshll.u32 %v1659, 16
        %v1750 = vrot.slane %v1748, 5
        %v1751 = vsel %vm951, %v1746, %v1750
        %v1753 = vshrl.u32 %v1660, 16
        %v1755 = vrot.slane %v1753, 4
        %v1756 = vshll.u32 %v1660, 16
        %v1758 = vrot.slane %v1756, 5
        %v1759 = vor.u32 %v1755, %v1758
        %v1760 = vrot.slane %v1759, 4
        %v1762 = vshll.u32 %v1661, 16
        %v1764 = vrot.slane %v1762, 5
        %v1765 = vsel %vm951, %v1760, %v1764
        %v1767 = vshrl.u32 %v1662, 16
        %v1769 = vrot.slane %v1767, 4
        %v1770 = vshll.u32 %v1662, 16
        %v1772 = vrot.slane %v1770, 5
        %v1773 = vor.u32 %v1769, %v1772
        %v1774 = vrot.slane %v1773, 4
        %v1776 = vshll.u32 %v1663, 16
        %v1778 = vrot.slane %v1776, 5
        %v1779 = vsel %vm951, %v1774, %v1778
        %v1781 = vshrl.u32 %v1664, 16
        %v1783 = vrot.slane %v1781, 4
        %v1784 = vshll.u32 %v1664, 16
        %v1786 = vrot.slane %v1784, 5
        %v1787 = vor.u32 %v1783, %v1786
        %v1788 = vrot.slane %v1787, 4
        %v1790 = vshll.u32 %v1665, 16
        %v1792 = vrot.slane %v1790, 5
        %v1793 = vsel %vm951, %v1788, %v1792
        %v1795 = vshrl.u32 %v1666, 16
        %v1797 = vrot.slane %v1795, 4
        %v1798 = vshll.u32 %v1666, 16
        %v1800 = vrot.slane %v1798, 5
        %v1801 = vor.u32 %v1797, %v1800
        %v1802 = vrot.slane %v1801, 4
        %v1804 = vshll.u32 %v1667, 16
        %v1806 = vrot.slane %v1804, 5
        %v1807 = vsel %vm951, %v1802, %v1806
        %s1808 = scalar_lea.vmem [#allocation10], 8
        %v1809 = vld [vmem:[%s1808] sm:$0x3]
        %v1810 = vunpack.c.l.b16 %v1681
        %v1811 = vunpack.c.l.b16 %v1695
        %v1812 = vunpack.c.l.b16 %v1709
        %v1813 = vunpack.c.l.b16 %v1723
        %v1814 = vunpack.c.l.b16 %v1737
        %v1815 = vunpack.c.l.b16 %v1751
        %v1816 = vunpack.c.l.b16 %v1765
        %v1817 = vunpack.c.l.b16 %v1779
        %v1818 = vunpack.c.l.b16 %v1793
        %v1819 = vunpack.c.l.b16 %v1807
        %v1820 = vpack.c.b16 %v1811, %v1810
        %v1821 = vpack.c.b16 %v1813, %v1812
        %v1822 = vpack.c.b16 %v1815, %v1814
        %v1823 = vpack.c.b16 %v1817, %v1816
        %v1824 = vpack.c.b16 %v1819, %v1818
        %v1826 = vsel %vm1109, %v1820, 0
        %v1829 = vsel %vm1109, %v1821, 0
        %v1832 = vsel %vm1109, %v1822, 0
        %v1835 = vsel %vm1109, %v1823, 0
        %v1838 = vsel %vm1109, %v1824, 0
        %v1841 = vsel %vm1125, %v1809, 0
        %1843 = vmatprep.subr.bf16.mxu0 0
        %1844 = vmatpush1.bf16.msra.mxu0 0
        %1845 = vmatprep.subr.bf16.mxu0 0
        %1846 = vmatpush1.bf16.msra.mxu0 0
        %1847 = vmatprep.subr.bf16.mxu0 0
        %1848 = vmatpush1.bf16.msra.mxu0 0
        %1849 = vmatprep.subr.bf16.mxu0 0
        %1850 = vmatpush1.bf16.msra.mxu0 0
        %1851 = vmatprep.subr.bf16.mxu0 0
        %1852 = vmatpush1.bf16.msra.mxu0 0
        %1853 = vmatprep.subr.bf16.mxu0 0
        %1854 = vmatpush1.bf16.msra.mxu0 0
        %1855 = vmatprep.subr.bf16.mxu0 0
        %1856 = vmatpush1.bf16.msra.mxu0 0
        %1857 = vmatprep.subr.bf16.mxu0 0
        %1858 = vmatpush1.bf16.msra.mxu0 %v1841
        %1859 = vmatprep.subr.bf16.mxu0 0
        %1860 = vmatpush2.bf16.msra.mxu0 0
        %1861 = vmatprep.subr.bf16.mxu0 0
        %1862 = vmatpush2.bf16.msra.mxu0 0
        %1863 = vmatprep.subr.bf16.mxu0 0
        %1864 = vmatpush2.bf16.msra.mxu0 0
        %1865 = vmatprep.subr.bf16.mxu0 0
        %1866 = vmatpush2.bf16.msra.mxu0 0
        %1867 = vmatprep.subr.bf16.mxu0 0
        %1868 = vmatpush2.bf16.msra.mxu0 0
        %1869 = vmatprep.subr.bf16.mxu0 0
        %1870 = vmatpush2.bf16.msra.mxu0 0
        %1871 = vmatprep.subr.bf16.mxu0 0
        %1872 = vmatpush2.bf16.msra.mxu0 0
        %1873 = vmatprep.subr.bf16.mxu0 0
        %1874 = vmatpush2.bf16.msra.mxu0 0
        %1875 = vmatprep.mubr.bf16.mxu0 0
        %1876 = vmatmul.mubr.bf16.gmra.mxu0 %v1826
        %v1877 = vpop.f32.mrf.mxu0
        %v1878 = vadd.f32 0.0, %v1877
        %v1879 = vpop.f32.mrf.mxu0
        %v1880 = vpop.f32.mrf.mxu0
        %v1881 = vadd.f32 0.0, %v1880
        %v1882 = vpop.f32.mrf.mxu0
        %1883 = vmatprep.mubr.bf16.mxu0 0
        %1884 = vmatmul.mubr.bf16.gmra.mxu0 %v1829
        %v1885 = vpop.f32.mrf.mxu0
        %v1886 = vadd.f32 0.0, %v1885
        %v1887 = vpop.f32.mrf.mxu0
        %v1888 = vpop.f32.mrf.mxu0
        %v1889 = vadd.f32 0.0, %v1888
        %v1890 = vpop.f32.mrf.mxu0
        %1891 = vmatprep.mubr.bf16.mxu0 0
        %1892 = vmatmul.mubr.bf16.gmra.mxu0 %v1832
        %v1893 = vpop.f32.mrf.mxu0
        %v1894 = vadd.f32 0.0, %v1893
        %v1895 = vpop.f32.mrf.mxu0
        %v1896 = vpop.f32.mrf.mxu0
        %v1897 = vadd.f32 0.0, %v1896
        %v1898 = vpop.f32.mrf.mxu0
        %1899 = vmatprep.mubr.bf16.mxu0 0
        %1900 = vmatmul.mubr.bf16.gmra.mxu0 %v1835
        %v1901 = vpop.f32.mrf.mxu0
        %v1902 = vadd.f32 0.0, %v1901
        %v1903 = vpop.f32.mrf.mxu0
        %v1904 = vpop.f32.mrf.mxu0
        %v1905 = vadd.f32 0.0, %v1904
        %v1906 = vpop.f32.mrf.mxu0
        %1907 = vmatprep.mubr.bf16.mxu0 0
        %1908 = vmatmul.mubr.bf16.gmra.mxu0 %v1838
        %v1909 = vpop.f32.mrf.mxu0
        %v1910 = vadd.f32 0.0, %v1909
        %v1911 = vpop.f32.mrf.mxu0
        %v1912 = vpop.f32.mrf.mxu0
        %v1913 = vadd.f32 0.0, %v1912
        %v1914 = vpop.f32.mrf.mxu0
        %1915 = vdwg.mxu0
        %v1916 = vadd.f32 %v1638, %v1878
        %v1917 = vadd.f32 %v1639, %v1881
        %v1918 = vadd.f32 %v1640, %v1886
        %v1919 = vadd.f32 %v1641, %v1889
        %v1920 = vadd.f32 %v1642, %v1894
        %v1921 = vadd.f32 %v1643, %v1897
        %v1922 = vadd.f32 %v1644, %v1902
        %v1923 = vadd.f32 %v1645, %v1905
        %v1924 = vadd.f32 %v1646, %v1910
        %v1925 = vadd.f32 %v1647, %v1913
        %v1926 = vld [vmem:[%s1509] sm:$0xe]
        %v1927 = vld [vmem:[%s1509 + $0x8] sm:$0xe]
        %v1928 = vld [vmem:[%s1509 + $0x10] sm:$0xe]
        %v1929 = vld [vmem:[%s1509 + $0x18] sm:$0xe]
        %v1930 = vld [vmem:[%s1509 + $0x20] sm:$0xe]
        %v1931 = vld [vmem:[%s1509 + $0x28] sm:$0xe]
        %v1932 = vld [vmem:[%s1509 + $0x30] sm:$0xe]
        %v1933 = vld [vmem:[%s1509 + $0x38] sm:$0xe]
        %v1934 = vld [vmem:[%s1509 + $0x40] sm:$0xe]
        %v1935 = vld [vmem:[%s1509 + $0x48] sm:$0xe]
        %v1956 = vrot.slane %v1926, 5
        %v1957 = vrot.slane %v1956, 4
        %v1958 = vrot.slane %v1649, 5
        %v1959 = vsel %vm1350, %v1957, %v1958
        %v1960 = vrot.slane %v1927, 5
        %v1961 = vrot.slane %v1960, 4
        %v1962 = vrot.slane %v1651, 5
        %v1963 = vsel %vm1350, %v1961, %v1962
        %v1964 = vrot.slane %v1928, 5
        %v1965 = vrot.slane %v1964, 4
        %v1966 = vrot.slane %v1653, 5
        %v1967 = vsel %vm1350, %v1965, %v1966
        %v1968 = vrot.slane %v1929, 5
        %v1969 = vrot.slane %v1968, 4
        %v1970 = vrot.slane %v1655, 5
        %v1971 = vsel %vm1350, %v1969, %v1970
        %v1972 = vrot.slane %v1930, 5
        %v1973 = vrot.slane %v1972, 4
        %v1974 = vrot.slane %v1657, 5
        %v1975 = vsel %vm1350, %v1973, %v1974
        %v1976 = vrot.slane %v1931, 5
        %v1977 = vrot.slane %v1976, 4
        %v1978 = vrot.slane %v1659, 5
        %v1979 = vsel %vm1350, %v1977, %v1978
        %v1980 = vrot.slane %v1932, 5
        %v1981 = vrot.slane %v1980, 4
        %v1982 = vrot.slane %v1661, 5
        %v1983 = vsel %vm1350, %v1981, %v1982
        %v1984 = vrot.slane %v1933, 5
        %v1985 = vrot.slane %v1984, 4
        %v1986 = vrot.slane %v1663, 5
        %v1987 = vsel %vm1350, %v1985, %v1986
        %v1988 = vrot.slane %v1934, 5
        %v1989 = vrot.slane %v1988, 4
        %v1990 = vrot.slane %v1665, 5
        %v1991 = vsel %vm1350, %v1989, %v1990
        %v1992 = vrot.slane %v1935, 5
        %v1993 = vrot.slane %v1992, 4
        %v1994 = vrot.slane %v1667, 5
        %v1995 = vsel %vm1350, %v1993, %v1994
        %s1996 = scalar_lea.vmem [#allocation10], 10
        %v1997 = vld [vmem:[%s1996] sm:$0x3]
        %v1998 = vunpack.c.l.b16 %v1959
        %v1999 = vunpack.c.l.b16 %v1963
        %v2000 = vunpack.c.l.b16 %v1967
        %v2001 = vunpack.c.l.b16 %v1971
        %v2002 = vunpack.c.l.b16 %v1975
        %v2003 = vunpack.c.l.b16 %v1979
        %v2004 = vunpack.c.l.b16 %v1983
        %v2005 = vunpack.c.l.b16 %v1987
        %v2006 = vunpack.c.l.b16 %v1991
        %v2007 = vunpack.c.l.b16 %v1995
        %v2008 = vpack.c.b16 %v1999, %v1998
        %v2009 = vpack.c.b16 %v2001, %v2000
        %v2010 = vpack.c.b16 %v2003, %v2002
        %v2011 = vpack.c.b16 %v2005, %v2004
        %v2012 = vpack.c.b16 %v2007, %v2006
        %v2014 = vsel %vm1109, %v2008, 0
        %v2017 = vsel %vm1109, %v2009, 0
        %v2020 = vsel %vm1109, %v2010, 0
        %v2023 = vsel %vm1109, %v2011, 0
        %v2026 = vsel %vm1109, %v2012, 0
        %v2029 = vsel %vm1125, %v1997, 0
        %2031 = vmatprep.subr.bf16.mxu0 0
        %2032 = vmatpush1.bf16.msra.mxu0 0
        %2033 = vmatprep.subr.bf16.mxu0 0
        %2034 = vmatpush1.bf16.msra.mxu0 0
        %2035 = vmatprep.subr.bf16.mxu0 0
        %2036 = vmatpush1.bf16.msra.mxu0 0
        %2037 = vmatprep.subr.bf16.mxu0 0
        %2038 = vmatpush1.bf16.msra.mxu0 0
        %2039 = vmatprep.subr.bf16.mxu0 0
        %2040 = vmatpush1.bf16.msra.mxu0 0
        %2041 = vmatprep.subr.bf16.mxu0 0
        %2042 = vmatpush1.bf16.msra.mxu0 0
        %2043 = vmatprep.subr.bf16.mxu0 0
        %2044 = vmatpush1.bf16.msra.mxu0 0
        %2045 = vmatprep.subr.bf16.mxu0 0
        %2046 = vmatpush1.bf16.msra.mxu0 %v2029
        %2047 = vmatprep.subr.bf16.mxu0 0
        %2048 = vmatpush2.bf16.msra.mxu0 0
        %2049 = vmatprep.subr.bf16.mxu0 0
        %2050 = vmatpush2.bf16.msra.mxu0 0
        %2051 = vmatprep.subr.bf16.mxu0 0
        %2052 = vmatpush2.bf16.msra.mxu0 0
        %2053 = vmatprep.subr.bf16.mxu0 0
        %2054 = vmatpush2.bf16.msra.mxu0 0
        %2055 = vmatprep.subr.bf16.mxu0 0
        %2056 = vmatpush2.bf16.msra.mxu0 0
        %2057 = vmatprep.subr.bf16.mxu0 0
        %2058 = vmatpush2.bf16.msra.mxu0 0
        %2059 = vmatprep.subr.bf16.mxu0 0
        %2060 = vmatpush2.bf16.msra.mxu0 0
        %2061 = vmatprep.subr.bf16.mxu0 0
        %2062 = vmatpush2.bf16.msra.mxu0 0
        %2063 = vmatprep.mubr.bf16.mxu0 0
        %2064 = vmatmul.mubr.bf16.gmra.mxu0 %v2014
        %v2065 = vpop.f32.mrf.mxu0
        %v2066 = vadd.f32 0.0, %v2065
        %v2067 = vpop.f32.mrf.mxu0
        %v2068 = vpop.f32.mrf.mxu0
        %v2069 = vadd.f32 0.0, %v2068
        %v2070 = vpop.f32.mrf.mxu0
        %2071 = vmatprep.mubr.bf16.mxu0 0
        %2072 = vmatmul.mubr.bf16.gmra.mxu0 %v2017
        %v2073 = vpop.f32.mrf.mxu0
        %v2074 = vadd.f32 0.0, %v2073
        %v2075 = vpop.f32.mrf.mxu0
        %v2076 = vpop.f32.mrf.mxu0
        %v2077 = vadd.f32 0.0, %v2076
        %v2078 = vpop.f32.mrf.mxu0
        %2079 = vmatprep.mubr.bf16.mxu0 0
        %2080 = vmatmul.mubr.bf16.gmra.mxu0 %v2020
        %v2081 = vpop.f32.mrf.mxu0
        %v2082 = vadd.f32 0.0, %v2081
        %v2083 = vpop.f32.mrf.mxu0
        %v2084 = vpop.f32.mrf.mxu0
        %v2085 = vadd.f32 0.0, %v2084
        %v2086 = vpop.f32.mrf.mxu0
        %2087 = vmatprep.mubr.bf16.mxu0 0
        %2088 = vmatmul.mubr.bf16.gmra.mxu0 %v2023
        %v2089 = vpop.f32.mrf.mxu0
        %v2090 = vadd.f32 0.0, %v2089
        %v2091 = vpop.f32.mrf.mxu0
        %v2092 = vpop.f32.mrf.mxu0
        %v2093 = vadd.f32 0.0, %v2092
        %v2094 = vpop.f32.mrf.mxu0
        %2095 = vmatprep.mubr.bf16.mxu0 0
        %2096 = vmatmul.mubr.bf16.gmra.mxu0 %v2026
        %v2097 = vpop.f32.mrf.mxu0
        %v2098 = vadd.f32 0.0, %v2097
        %v2099 = vpop.f32.mrf.mxu0
        %v2100 = vpop.f32.mrf.mxu0
        %v2101 = vadd.f32 0.0, %v2100
        %v2102 = vpop.f32.mrf.mxu0
        %2103 = vdwg.mxu0
        %v2104 = vadd.f32 %v1916, %v2066
        %v2105 = vadd.f32 %v1917, %v2069
        %v2106 = vadd.f32 %v1918, %v2074
        %v2107 = vadd.f32 %v1919, %v2077
        %v2108 = vadd.f32 %v1920, %v2082
        %v2109 = vadd.f32 %v1921, %v2085
        %v2110 = vadd.f32 %v1922, %v2090
        %v2111 = vadd.f32 %v1923, %v2093
        %v2112 = vadd.f32 %v1924, %v2098
        %v2113 = vadd.f32 %v1925, %v2101
        %v2114 = vld [vmem:[%s802] sm:$0xf]
        %v2115 = vld [vmem:[%s802 + $0x8] sm:$0xf]
        %v2116 = vld [vmem:[%s802 + $0x10] sm:$0xf]
        %v2117 = vld [vmem:[%s802 + $0x18] sm:$0xf]
        %v2118 = vld [vmem:[%s802 + $0x20] sm:$0xf]
        %v2119 = vld [vmem:[%s802 + $0x28] sm:$0xf]
        %v2120 = vld [vmem:[%s802 + $0x30] sm:$0xf]
        %v2121 = vld [vmem:[%s802 + $0x38] sm:$0xf]
        %v2122 = vld [vmem:[%s802 + $0x40] sm:$0xf]
        %v2123 = vld [vmem:[%s802 + $0x48] sm:$0xf]
        %s2124 = scalar_lea.vmem [#allocation10], 12
        %v2125 = vld [vmem:[%s2124] sm:$0x3]
        %v2136 = vunpack.c.l.b16 %v2114
        %v2137 = vunpack.c.l.b16 %v2115
        %v2138 = vunpack.c.l.b16 %v2116
        %v2139 = vunpack.c.l.b16 %v2117
        %v2140 = vunpack.c.l.b16 %v2118
        %v2141 = vunpack.c.l.b16 %v2119
        %v2142 = vunpack.c.l.b16 %v2120
        %v2143 = vunpack.c.l.b16 %v2121
        %v2144 = vunpack.c.l.b16 %v2122
        %v2145 = vunpack.c.l.b16 %v2123
        %v2146 = vpack.c.b16 %v2137, %v2136
        %v2147 = vpack.c.b16 %v2139, %v2138
        %v2148 = vpack.c.b16 %v2141, %v2140
        %v2149 = vpack.c.b16 %v2143, %v2142
        %v2150 = vpack.c.b16 %v2145, %v2144
        %v2152 = vsel %vm1109, %v2146, 0
        %v2155 = vsel %vm1109, %v2147, 0
        %v2158 = vsel %vm1109, %v2148, 0
        %v2161 = vsel %vm1109, %v2149, 0
        %v2164 = vsel %vm1109, %v2150, 0
        %v2167 = vsel %vm1125, %v2125, 0
        %2169 = vmatprep.subr.bf16.mxu0 0
        %2170 = vmatpush1.bf16.msra.mxu0 0
        %2171 = vmatprep.subr.bf16.mxu0 0
        %2172 = vmatpush1.bf16.msra.mxu0 0
        %2173 = vmatprep.subr.bf16.mxu0 0
        %2174 = vmatpush1.bf16.msra.mxu0 0
        %2175 = vmatprep.subr.bf16.mxu0 0
        %2176 = vmatpush1.bf16.msra.mxu0 0
        %2177 = vmatprep.subr.bf16.mxu0 0
        %2178 = vmatpush1.bf16.msra.mxu0 0
        %2179 = vmatprep.subr.bf16.mxu0 0
        %2180 = vmatpush1.bf16.msra.mxu0 0
        %2181 = vmatprep.subr.bf16.mxu0 0
        %2182 = vmatpush1.bf16.msra.mxu0 0
        %2183 = vmatprep.subr.bf16.mxu0 0
        %2184 = vmatpush1.bf16.msra.mxu0 %v2167
        %2185 = vmatprep.subr.bf16.mxu0 0
        %2186 = vmatpush2.bf16.msra.mxu0 0
        %2187 = vmatprep.subr.bf16.mxu0 0
        %2188 = vmatpush2.bf16.msra.mxu0 0
        %2189 = vmatprep.subr.bf16.mxu0 0
        %2190 = vmatpush2.bf16.msra.mxu0 0
        %2191 = vmatprep.subr.bf16.mxu0 0
        %2192 = vmatpush2.bf16.msra.mxu0 0
        %2193 = vmatprep.subr.bf16.mxu0 0
        %2194 = vmatpush2.bf16.msra.mxu0 0
        %2195 = vmatprep.subr.bf16.mxu0 0
        %2196 = vmatpush2.bf16.msra.mxu0 0
        %2197 = vmatprep.subr.bf16.mxu0 0
        %2198 = vmatpush2.bf16.msra.mxu0 0
        %2199 = vmatprep.subr.bf16.mxu0 0
        %2200 = vmatpush2.bf16.msra.mxu0 0
        %2201 = vmatprep.mubr.bf16.mxu0 0
        %2202 = vmatmul.mubr.bf16.gmra.mxu0 %v2152
        %v2203 = vpop.f32.mrf.mxu0
        %v2204 = vadd.f32 0.0, %v2203
        %v2205 = vpop.f32.mrf.mxu0
        %v2206 = vpop.f32.mrf.mxu0
        %v2207 = vadd.f32 0.0, %v2206
        %v2208 = vpop.f32.mrf.mxu0
        %2209 = vmatprep.mubr.bf16.mxu0 0
        %2210 = vmatmul.mubr.bf16.gmra.mxu0 %v2155
        %v2211 = vpop.f32.mrf.mxu0
        %v2212 = vadd.f32 0.0, %v2211
        %v2213 = vpop.f32.mrf.mxu0
        %v2214 = vpop.f32.mrf.mxu0
        %v2215 = vadd.f32 0.0, %v2214
        %v2216 = vpop.f32.mrf.mxu0
        %2217 = vmatprep.mubr.bf16.mxu0 0
        %2218 = vmatmul.mubr.bf16.gmra.mxu0 %v2158
        %v2219 = vpop.f32.mrf.mxu0
        %v2220 = vadd.f32 0.0, %v2219
        %v2221 = vpop.f32.mrf.mxu0
        %v2222 = vpop.f32.mrf.mxu0
        %v2223 = vadd.f32 0.0, %v2222
        %v2224 = vpop.f32.mrf.mxu0
        %2225 = vmatprep.mubr.bf16.mxu0 0
        %2226 = vmatmul.mubr.bf16.gmra.mxu0 %v2161
        %v2227 = vpop.f32.mrf.mxu0
        %v2228 = vadd.f32 0.0, %v2227
        %v2229 = vpop.f32.mrf.mxu0
        %v2230 = vpop.f32.mrf.mxu0
        %v2231 = vadd.f32 0.0, %v2230
        %v2232 = vpop.f32.mrf.mxu0
        %2233 = vmatprep.mubr.bf16.mxu0 0
        %2234 = vmatmul.mubr.bf16.gmra.mxu0 %v2164
        %v2235 = vpop.f32.mrf.mxu0
        %v2236 = vadd.f32 0.0, %v2235
        %v2237 = vpop.f32.mrf.mxu0
        %v2238 = vpop.f32.mrf.mxu0
        %v2239 = vadd.f32 0.0, %v2238
        %v2240 = vpop.f32.mrf.mxu0
        %2241 = vdwg.mxu0
        %v2242 = vadd.f32 %v2104, %v2204
        %v2243 = vadd.f32 %v2105, %v2207
        %v2244 = vadd.f32 %v2106, %v2212
        %v2245 = vadd.f32 %v2107, %v2215
        %v2246 = vadd.f32 %v2108, %v2220
        %v2247 = vadd.f32 %v2109, %v2223
        %v2248 = vadd.f32 %v2110, %v2228
        %v2249 = vadd.f32 %v2111, %v2231
        %v2250 = vadd.f32 %v2112, %v2236
        %v2251 = vadd.f32 %v2113, %v2239
        %v2252 = vld [vmem:[%s802] sm:$0xf]
        %v2253 = vld [vmem:[%s802 + $0x4] sm:$0x1]
        %v2254 = vld [vmem:[%s802 + $0x8] sm:$0xf]
        %v2255 = vld [vmem:[%s802 + $0xc] sm:$0x1]
        %v2256 = vld [vmem:[%s802 + $0x10] sm:$0xf]
        %v2257 = vld [vmem:[%s802 + $0x14] sm:$0x1]
        %v2258 = vld [vmem:[%s802 + $0x18] sm:$0xf]
        %v2259 = vld [vmem:[%s802 + $0x1c] sm:$0x1]
        %v2260 = vld [vmem:[%s802 + $0x20] sm:$0xf]
        %v2261 = vld [vmem:[%s802 + $0x24] sm:$0x1]
        %v2262 = vld [vmem:[%s802 + $0x28] sm:$0xf]
        %v2263 = vld [vmem:[%s802 + $0x2c] sm:$0x1]
        %v2264 = vld [vmem:[%s802 + $0x30] sm:$0xf]
        %v2265 = vld [vmem:[%s802 + $0x34] sm:$0x1]
        %v2266 = vld [vmem:[%s802 + $0x38] sm:$0xf]
        %v2267 = vld [vmem:[%s802 + $0x3c] sm:$0x1]
        %v2268 = vld [vmem:[%s802 + $0x40] sm:$0xf]
        %v2269 = vld [vmem:[%s802 + $0x44] sm:$0x1]
        %v2270 = vld [vmem:[%s802 + $0x48] sm:$0xf]
        %v2271 = vld [vmem:[%s802 + $0x4c] sm:$0x1]
        %v2273 = vshrl.u32 %v2252, 16
        %v2275 = vrot.slane %v2273, 4
        %v2276 = vshll.u32 %v2252, 16
        %v2278 = vrot.slane %v2276, 5
        %v2279 = vor.u32 %v2275, %v2278
        %v2280 = vrot.slane %v2279, 4
        %v2282 = vshll.u32 %v2253, 16
        %v2284 = vrot.slane %v2282, 5
        %v2285 = vsel %vm951, %v2280, %v2284
        %v2287 = vshrl.u32 %v2254, 16
        %v2289 = vrot.slane %v2287, 4
        %v2290 = vshll.u32 %v2254, 16
        %v2292 = vrot.slane %v2290, 5
        %v2293 = vor.u32 %v2289, %v2292
        %v2294 = vrot.slane %v2293, 4
        %v2296 = vshll.u32 %v2255, 16
        %v2298 = vrot.slane %v2296, 5
        %v2299 = vsel %vm951, %v2294, %v2298
        %v2301 = vshrl.u32 %v2256, 16
        %v2303 = vrot.slane %v2301, 4
        %v2304 = vshll.u32 %v2256, 16
        %v2306 = vrot.slane %v2304, 5
        %v2307 = vor.u32 %v2303, %v2306
        %v2308 = vrot.slane %v2307, 4
        %v2310 = vshll.u32 %v2257, 16
        %v2312 = vrot.slane %v2310, 5
        %v2313 = vsel %vm951, %v2308, %v2312
        %v2315 = vshrl.u32 %v2258, 16
        %v2317 = vrot.slane %v2315, 4
        %v2318 = vshll.u32 %v2258, 16
        %v2320 = vrot.slane %v2318, 5
        %v2321 = vor.u32 %v2317, %v2320
        %v2322 = vrot.slane %v2321, 4
        %v2324 = vshll.u32 %v2259, 16
        %v2326 = vrot.slane %v2324, 5
        %v2327 = vsel %vm951, %v2322, %v2326
        %v2329 = vshrl.u32 %v2260, 16
        %v2331 = vrot.slane %v2329, 4
        %v2332 = vshll.u32 %v2260, 16
        %v2334 = vrot.slane %v2332, 5
        %v2335 = vor.u32 %v2331, %v2334
        %v2336 = vrot.slane %v2335, 4
        %v2338 = vshll.u32 %v2261, 16
        %v2340 = vrot.slane %v2338, 5
        %v2341 = vsel %vm951, %v2336, %v2340
        %v2343 = vshrl.u32 %v2262, 16
        %v2345 = vrot.slane %v2343, 4
        %v2346 = vshll.u32 %v2262, 16
        %v2348 = vrot.slane %v2346, 5
        %v2349 = vor.u32 %v2345, %v2348
        %v2350 = vrot.slane %v2349, 4
        %v2352 = vshll.u32 %v2263, 16
        %v2354 = vrot.slane %v2352, 5
        %v2355 = vsel %vm951, %v2350, %v2354
        %v2357 = vshrl.u32 %v2264, 16
        %v2359 = vrot.slane %v2357, 4
        %v2360 = vshll.u32 %v2264, 16
        %v2362 = vrot.slane %v2360, 5
        %v2363 = vor.u32 %v2359, %v2362
        %v2364 = vrot.slane %v2363, 4
        %v2366 = vshll.u32 %v2265, 16
        %v2368 = vrot.slane %v2366, 5
        %v2369 = vsel %vm951, %v2364, %v2368
        %v2371 = vshrl.u32 %v2266, 16
        %v2373 = vrot.slane %v2371, 4
        %v2374 = vshll.u32 %v2266, 16
        %v2376 = vrot.slane %v2374, 5
        %v2377 = vor.u32 %v2373, %v2376
        %v2378 = vrot.slane %v2377, 4
        %v2380 = vshll.u32 %v2267, 16
        %v2382 = vrot.slane %v2380, 5
        %v2383 = vsel %vm951, %v2378, %v2382
        %v2385 = vshrl.u32 %v2268, 16
        %v2387 = vrot.slane %v2385, 4
        %v2388 = vshll.u32 %v2268, 16
        %v2390 = vrot.slane %v2388, 5
        %v2391 = vor.u32 %v2387, %v2390
        %v2392 = vrot.slane %v2391, 4
        %v2394 = vshll.u32 %v2269, 16
        %v2396 = vrot.slane %v2394, 5
        %v2397 = vsel %vm951, %v2392, %v2396
        %v2399 = vshrl.u32 %v2270, 16
        %v2401 = vrot.slane %v2399, 4
        %v2402 = vshll.u32 %v2270, 16
        %v2404 = vrot.slane %v2402, 5
        %v2405 = vor.u32 %v2401, %v2404
        %v2406 = vrot.slane %v2405, 4
        %v2408 = vshll.u32 %v2271, 16
        %v2410 = vrot.slane %v2408, 5
        %v2411 = vsel %vm951, %v2406, %v2410
        %s2412 = scalar_lea.vmem [#allocation10], 14
        %v2413 = vld [vmem:[%s2412] sm:$0x3]
        %v2414 = vunpack.c.l.b16 %v2285
        %v2415 = vunpack.c.l.b16 %v2299
        %v2416 = vunpack.c.l.b16 %v2313
        %v2417 = vunpack.c.l.b16 %v2327
        %v2418 = vunpack.c.l.b16 %v2341
        %v2419 = vunpack.c.l.b16 %v2355
        %v2420 = vunpack.c.l.b16 %v2369
        %v2421 = vunpack.c.l.b16 %v2383
        %v2422 = vunpack.c.l.b16 %v2397
        %v2423 = vunpack.c.l.b16 %v2411
        %v2424 = vpack.c.b16 %v2415, %v2414
        %v2425 = vpack.c.b16 %v2417, %v2416
        %v2426 = vpack.c.b16 %v2419, %v2418
        %v2427 = vpack.c.b16 %v2421, %v2420
        %v2428 = vpack.c.b16 %v2423, %v2422
        %v2430 = vsel %vm1109, %v2424, 0
        %v2433 = vsel %vm1109, %v2425, 0
        %v2436 = vsel %vm1109, %v2426, 0
        %v2439 = vsel %vm1109, %v2427, 0
        %v2442 = vsel %vm1109, %v2428, 0
        %v2445 = vsel %vm1125, %v2413, 0
        %2447 = vmatprep.subr.bf16.mxu0 0
        %2448 = vmatpush1.bf16.msra.mxu0 0
        %2449 = vmatprep.subr.bf16.mxu0 0
        %2450 = vmatpush1.bf16.msra.mxu0 0
        %2451 = vmatprep.subr.bf16.mxu0 0
        %2452 = vmatpush1.bf16.msra.mxu0 0
        %2453 = vmatprep.subr.bf16.mxu0 0
        %2454 = vmatpush1.bf16.msra.mxu0 0
        %2455 = vmatprep.subr.bf16.mxu0 0
        %2456 = vmatpush1.bf16.msra.mxu0 0
        %2457 = vmatprep.subr.bf16.mxu0 0
        %2458 = vmatpush1.bf16.msra.mxu0 0
        %2459 = vmatprep.subr.bf16.mxu0 0
        %2460 = vmatpush1.bf16.msra.mxu0 0
        %2461 = vmatprep.subr.bf16.mxu0 0
        %2462 = vmatpush1.bf16.msra.mxu0 %v2445
        %2463 = vmatprep.subr.bf16.mxu0 0
        %2464 = vmatpush2.bf16.msra.mxu0 0
        %2465 = vmatprep.subr.bf16.mxu0 0
        %2466 = vmatpush2.bf16.msra.mxu0 0
        %2467 = vmatprep.subr.bf16.mxu0 0
        %2468 = vmatpush2.bf16.msra.mxu0 0
        %2469 = vmatprep.subr.bf16.mxu0 0
        %2470 = vmatpush2.bf16.msra.mxu0 0
        %2471 = vmatprep.subr.bf16.mxu0 0
        %2472 = vmatpush2.bf16.msra.mxu0 0
        %2473 = vmatprep.subr.bf16.mxu0 0
        %2474 = vmatpush2.bf16.msra.mxu0 0
        %2475 = vmatprep.subr.bf16.mxu0 0
        %2476 = vmatpush2.bf16.msra.mxu0 0
        %2477 = vmatprep.subr.bf16.mxu0 0
        %2478 = vmatpush2.bf16.msra.mxu0 0
        %2479 = vmatprep.mubr.bf16.mxu0 0
        %2480 = vmatmul.mubr.bf16.gmra.mxu0 %v2430
        %v2481 = vpop.f32.mrf.mxu0
        %v2482 = vadd.f32 0.0, %v2481
        %v2483 = vpop.f32.mrf.mxu0
        %v2484 = vpop.f32.mrf.mxu0
        %v2485 = vadd.f32 0.0, %v2484
        %v2486 = vpop.f32.mrf.mxu0
        %2487 = vmatprep.mubr.bf16.mxu0 0
        %2488 = vmatmul.mubr.bf16.gmra.mxu0 %v2433
        %v2489 = vpop.f32.mrf.mxu0
        %v2490 = vadd.f32 0.0, %v2489
        %v2491 = vpop.f32.mrf.mxu0
        %v2492 = vpop.f32.mrf.mxu0
        %v2493 = vadd.f32 0.0, %v2492
        %v2494 = vpop.f32.mrf.mxu0
        %2495 = vmatprep.mubr.bf16.mxu0 0
        %2496 = vmatmul.mubr.bf16.gmra.mxu0 %v2436
        %v2497 = vpop.f32.mrf.mxu0
        %v2498 = vadd.f32 0.0, %v2497
        %v2499 = vpop.f32.mrf.mxu0
        %v2500 = vpop.f32.mrf.mxu0
        %v2501 = vadd.f32 0.0, %v2500
        %v2502 = vpop.f32.mrf.mxu0
        %2503 = vmatprep.mubr.bf16.mxu0 0
        %2504 = vmatmul.mubr.bf16.gmra.mxu0 %v2439
        %v2505 = vpop.f32.mrf.mxu0
        %v2506 = vadd.f32 0.0, %v2505
        %v2507 = vpop.f32.mrf.mxu0
        %v2508 = vpop.f32.mrf.mxu0
        %v2509 = vadd.f32 0.0, %v2508
        %v2510 = vpop.f32.mrf.mxu0
        %2511 = vmatprep.mubr.bf16.mxu0 0
        %2512 = vmatmul.mubr.bf16.gmra.mxu0 %v2442
        %v2513 = vpop.f32.mrf.mxu0
        %v2514 = vadd.f32 0.0, %v2513
        %v2515 = vpop.f32.mrf.mxu0
        %v2516 = vpop.f32.mrf.mxu0
        %v2517 = vadd.f32 0.0, %v2516
        %v2518 = vpop.f32.mrf.mxu0
        %2519 = vdwg.mxu0
        %v2520 = vadd.f32 %v2242, %v2482
        %v2521 = vadd.f32 %v2243, %v2485
        %v2522 = vadd.f32 %v2244, %v2490
        %v2523 = vadd.f32 %v2245, %v2493
        %v2524 = vadd.f32 %v2246, %v2498
        %v2525 = vadd.f32 %v2247, %v2501
        %v2526 = vadd.f32 %v2248, %v2506
        %v2527 = vadd.f32 %v2249, %v2509
        %v2528 = vadd.f32 %v2250, %v2514
        %v2529 = vadd.f32 %v2251, %v2517
        %v2530 = vld [vmem:[%s802] sm:$0xe]
        %v2531 = vld [vmem:[%s802 + $0x8] sm:$0xe]
        %v2532 = vld [vmem:[%s802 + $0x10] sm:$0xe]
        %v2533 = vld [vmem:[%s802 + $0x18] sm:$0xe]
        %v2534 = vld [vmem:[%s802 + $0x20] sm:$0xe]
        %v2535 = vld [vmem:[%s802 + $0x28] sm:$0xe]
        %v2536 = vld [vmem:[%s802 + $0x30] sm:$0xe]
        %v2537 = vld [vmem:[%s802 + $0x38] sm:$0xe]
        %v2538 = vld [vmem:[%s802 + $0x40] sm:$0xe]
        %v2539 = vld [vmem:[%s802 + $0x48] sm:$0xe]
        %v2560 = vrot.slane %v2530, 5
        %v2561 = vrot.slane %v2560, 4
        %v2562 = vrot.slane %v2253, 5
        %v2563 = vsel %vm1350, %v2561, %v2562
        %v2564 = vrot.slane %v2531, 5
        %v2565 = vrot.slane %v2564, 4
        %v2566 = vrot.slane %v2255, 5
        %v2567 = vsel %vm1350, %v2565, %v2566
        %v2568 = vrot.slane %v2532, 5
        %v2569 = vrot.slane %v2568, 4
        %v2570 = vrot.slane %v2257, 5
        %v2571 = vsel %vm1350, %v2569, %v2570
        %v2572 = vrot.slane %v2533, 5
        %v2573 = vrot.slane %v2572, 4
        %v2574 = vrot.slane %v2259, 5
        %v2575 = vsel %vm1350, %v2573, %v2574
        %v2576 = vrot.slane %v2534, 5
        %v2577 = vrot.slane %v2576, 4
        %v2578 = vrot.slane %v2261, 5
        %v2579 = vsel %vm1350, %v2577, %v2578
        %v2580 = vrot.slane %v2535, 5
        %v2581 = vrot.slane %v2580, 4
        %v2582 = vrot.slane %v2263, 5
        %v2583 = vsel %vm1350, %v2581, %v2582
        %v2584 = vrot.slane %v2536, 5
        %v2585 = vrot.slane %v2584, 4
        %v2586 = vrot.slane %v2265, 5
        %v2587 = vsel %vm1350, %v2585, %v2586
        %v2588 = vrot.slane %v2537, 5
        %v2589 = vrot.slane %v2588, 4
        %v2590 = vrot.slane %v2267, 5
        %v2591 = vsel %vm1350, %v2589, %v2590
        %v2592 = vrot.slane %v2538, 5
        %v2593 = vrot.slane %v2592, 4
        %v2594 = vrot.slane %v2269, 5
        %v2595 = vsel %vm1350, %v2593, %v2594
        %v2596 = vrot.slane %v2539, 5
        %v2597 = vrot.slane %v2596, 4
        %v2598 = vrot.slane %v2271, 5
        %v2599 = vsel %vm1350, %v2597, %v2598
        %s2600 = scalar_lea.vmem [#allocation10], 16
        %v2601 = vld [vmem:[%s2600] sm:$0x3]
        %v2602 = vunpack.c.l.b16 %v2563
        %v2603 = vunpack.c.l.b16 %v2567
        %v2604 = vunpack.c.l.b16 %v2571
        %v2605 = vunpack.c.l.b16 %v2575
        %v2606 = vunpack.c.l.b16 %v2579
        %v2607 = vunpack.c.l.b16 %v2583
        %v2608 = vunpack.c.l.b16 %v2587
        %v2609 = vunpack.c.l.b16 %v2591
        %v2610 = vunpack.c.l.b16 %v2595
        %v2611 = vunpack.c.l.b16 %v2599
        %v2612 = vpack.c.b16 %v2603, %v2602
        %v2613 = vpack.c.b16 %v2605, %v2604
        %v2614 = vpack.c.b16 %v2607, %v2606
        %v2615 = vpack.c.b16 %v2609, %v2608
        %v2616 = vpack.c.b16 %v2611, %v2610
        %v2618 = vsel %vm1109, %v2612, 0
        %v2621 = vsel %vm1109, %v2613, 0
        %v2624 = vsel %vm1109, %v2614, 0
        %v2627 = vsel %vm1109, %v2615, 0
        %v2630 = vsel %vm1109, %v2616, 0
        %v2633 = vsel %vm1125, %v2601, 0
        %2635 = vmatprep.subr.bf16.mxu0 0
        %2636 = vmatpush1.bf16.msra.mxu0 0
        %2637 = vmatprep.subr.bf16.mxu0 0
        %2638 = vmatpush1.bf16.msra.mxu0 0
        %2639 = vmatprep.subr.bf16.mxu0 0
        %2640 = vmatpush1.bf16.msra.mxu0 0
        %2641 = vmatprep.subr.bf16.mxu0 0
        %2642 = vmatpush1.bf16.msra.mxu0 0
        %2643 = vmatprep.subr.bf16.mxu0 0
        %2644 = vmatpush1.bf16.msra.mxu0 0
        %2645 = vmatprep.subr.bf16.mxu0 0
        %2646 = vmatpush1.bf16.msra.mxu0 0
        %2647 = vmatprep.subr.bf16.mxu0 0
        %2648 = vmatpush1.bf16.msra.mxu0 0
        %2649 = vmatprep.subr.bf16.mxu0 0
        %2650 = vmatpush1.bf16.msra.mxu0 %v2633
        %2651 = vmatprep.subr.bf16.mxu0 0
        %2652 = vmatpush2.bf16.msra.mxu0 0
        %2653 = vmatprep.subr.bf16.mxu0 0
        %2654 = vmatpush2.bf16.msra.mxu0 0
        %2655 = vmatprep.subr.bf16.mxu0 0
        %2656 = vmatpush2.bf16.msra.mxu0 0
        %2657 = vmatprep.subr.bf16.mxu0 0
        %2658 = vmatpush2.bf16.msra.mxu0 0
        %2659 = vmatprep.subr.bf16.mxu0 0
        %2660 = vmatpush2.bf16.msra.mxu0 0
        %2661 = vmatprep.subr.bf16.mxu0 0
        %2662 = vmatpush2.bf16.msra.mxu0 0
        %2663 = vmatprep.subr.bf16.mxu0 0
        %2664 = vmatpush2.bf16.msra.mxu0 0
        %2665 = vmatprep.subr.bf16.mxu0 0
        %2666 = vmatpush2.bf16.msra.mxu0 0
        %2667 = vmatprep.mubr.bf16.mxu0 0
        %2668 = vmatmul.mubr.bf16.gmra.mxu0 %v2618
        %v2669 = vpop.f32.mrf.mxu0
        %v2670 = vadd.f32 0.0, %v2669
        %v2671 = vpop.f32.mrf.mxu0
        %v2672 = vpop.f32.mrf.mxu0
        %v2673 = vadd.f32 0.0, %v2672
        %v2674 = vpop.f32.mrf.mxu0
        %2675 = vmatprep.mubr.bf16.mxu0 0
        %2676 = vmatmul.mubr.bf16.gmra.mxu0 %v2621
        %v2677 = vpop.f32.mrf.mxu0
        %v2678 = vadd.f32 0.0, %v2677
        %v2679 = vpop.f32.mrf.mxu0
        %v2680 = vpop.f32.mrf.mxu0
        %v2681 = vadd.f32 0.0, %v2680
        %v2682 = vpop.f32.mrf.mxu0
        %2683 = vmatprep.mubr.bf16.mxu0 0
        %2684 = vmatmul.mubr.bf16.gmra.mxu0 %v2624
        %v2685 = vpop.f32.mrf.mxu0
        %v2686 = vadd.f32 0.0, %v2685
        %v2687 = vpop.f32.mrf.mxu0
        %v2688 = vpop.f32.mrf.mxu0
        %v2689 = vadd.f32 0.0, %v2688
        %v2690 = vpop.f32.mrf.mxu0
        %2691 = vmatprep.mubr.bf16.mxu0 0
        %2692 = vmatmul.mubr.bf16.gmra.mxu0 %v2627
        %v2693 = vpop.f32.mrf.mxu0
        %v2694 = vadd.f32 0.0, %v2693
        %v2695 = vpop.f32.mrf.mxu0
        %v2696 = vpop.f32.mrf.mxu0
        %v2697 = vadd.f32 0.0, %v2696
        %v2698 = vpop.f32.mrf.mxu0
        %2699 = vmatprep.mubr.bf16.mxu0 0
        %2700 = vmatmul.mubr.bf16.gmra.mxu0 %v2630
        %v2701 = vpop.f32.mrf.mxu0
        %v2702 = vadd.f32 0.0, %v2701
        %v2703 = vpop.f32.mrf.mxu0
        %v2704 = vpop.f32.mrf.mxu0
        %v2705 = vadd.f32 0.0, %v2704
        %v2706 = vpop.f32.mrf.mxu0
        %2707 = vdwg.mxu0
        %v2708 = vadd.f32 %v2520, %v2670
        %v2709 = vadd.f32 %v2521, %v2673
        %v2710 = vadd.f32 %v2522, %v2678
        %v2711 = vadd.f32 %v2523, %v2681
        %v2712 = vadd.f32 %v2524, %v2686
        %v2713 = vadd.f32 %v2525, %v2689
        %v2714 = vadd.f32 %v2526, %v2694
        %v2715 = vadd.f32 %v2527, %v2697
        %v2716 = vadd.f32 %v2528, %v2702
        %v2717 = vadd.f32 %v2529, %v2705
        %v2718 = vld [vmem:[%s4] sm:$0x1]
        %v2720 = vlaneseq
        %v2721 = vshrl.u32 %v2720, 7
        %v2722 = vsub.s32 0, %v2721
        %v2723 = vrot.slane %v2718, %v2722
        %v2725 = vmul.f32 %v2708, %v2723
        %v2726 = vmul.f32 %v2709, %v2723
        %v2727 = vmul.f32 %v2710, %v2723
        %v2728 = vmul.f32 %v2711, %v2723
        %v2729 = vmul.f32 %v2712, %v2723
        %v2730 = vmul.f32 %v2713, %v2723
        %v2731 = vmul.f32 %v2714, %v2723
        %v2732 = vmul.f32 %v2715, %v2723
        %v2733 = vmul.f32 %v2716, %v2723
        %v2734 = vmul.f32 %v2717, %v2723
        %v2735 = vld [vmem:[%s5] sm:$0x1]
        %v2737 = vlaneseq
        %v2738 = vshrl.u32 %v2737, 7
        %v2739 = vsub.s32 0, %v2738
        %v2740 = vrot.slane %v2735, %v2739
        %v2742 = vadd.f32 %v2725, %v2740
        %v2743 = vadd.f32 %v2726, %v2740
        %v2744 = vadd.f32 %v2727, %v2740
        %v2745 = vadd.f32 %v2728, %v2740
        %v2746 = vadd.f32 %v2729, %v2740
        %v2747 = vadd.f32 %v2730, %v2740
        %v2748 = vadd.f32 %v2731, %v2740
        %v2749 = vadd.f32 %v2732, %v2740
        %v2750 = vadd.f32 %v2733, %v2740
        %v2751 = vadd.f32 %v2734, %v2740
        %v2752 = vmax.f32 %v2742, 0.0
        %v2753 = vmax.f32 %v2743, 0.0
        %v2754 = vmax.f32 %v2744, 0.0
        %v2755 = vmax.f32 %v2745, 0.0
        %v2756 = vmax.f32 %v2746, 0.0
        %v2757 = vmax.f32 %v2747, 0.0
        %v2758 = vmax.f32 %v2748, 0.0
        %v2759 = vmax.f32 %v2749, 0.0
        %v2760 = vmax.f32 %v2750, 0.0
        %v2761 = vmax.f32 %v2751, 0.0
        %v2762 = vpack.c.bf16 %v2752, %v2752
        %v2763 = vpack.c.bf16 %v2753, %v2753
        %v2764 = vpack.c.bf16 %v2754, %v2754
        %v2765 = vpack.c.bf16 %v2755, %v2755
        %v2766 = vpack.c.bf16 %v2756, %v2756
        %v2767 = vpack.c.bf16 %v2757, %v2757
        %v2768 = vpack.c.bf16 %v2758, %v2758
        %v2769 = vpack.c.bf16 %v2759, %v2759
        %v2770 = vpack.c.bf16 %v2760, %v2760
        %v2771 = vpack.c.bf16 %v2761, %v2761
        %vm2772 = vcmask 1040384
        %vm2773 = vmand %vm2772, %vm532
        %v2774 = vld [vmem:[#allocation3] sm:$0x1]
        %v2775 = vsel %vm2773, 0, %v2774
        %2776 = vst [vmem:[#allocation3] sm:$0x1] %v2775
        %v2777 = vld [vmem:[#allocation3 + $0x8] sm:$0x1]
        %v2778 = vsel %vm2773, 0, %v2777
        %2779 = vst [vmem:[#allocation3 + $0x8] sm:$0x1] %v2778
        %v2780 = vld [vmem:[#allocation3 + $0x10] sm:$0x1]
        %v2781 = vsel %vm2773, 0, %v2780
        %2782 = vst [vmem:[#allocation3 + $0x10] sm:$0x1] %v2781
        %v2783 = vld [vmem:[#allocation3 + $0x18] sm:$0x1]
        %v2784 = vsel %vm2773, 0, %v2783
        %2785 = vst [vmem:[#allocation3 + $0x18] sm:$0x1] %v2784
        %v2786 = vld [vmem:[#allocation3 + $0x20] sm:$0x1]
        %v2787 = vsel %vm2773, 0, %v2786
        %2788 = vst [vmem:[#allocation3 + $0x20] sm:$0x1] %v2787
        %v2789 = vld [vmem:[#allocation3 + $0x28] sm:$0x1]
        %v2790 = vsel %vm2773, 0, %v2789
        %2791 = vst [vmem:[#allocation3 + $0x28] sm:$0x1] %v2790
        %v2792 = vld [vmem:[#allocation3 + $0x30] sm:$0x1]
        %v2793 = vsel %vm2773, 0, %v2792
        %2794 = vst [vmem:[#allocation3 + $0x30] sm:$0x1] %v2793
        %v2795 = vld [vmem:[#allocation3 + $0x38] sm:$0x1]
        %v2796 = vsel %vm2773, 0, %v2795
        %2797 = vst [vmem:[#allocation3 + $0x38] sm:$0x1] %v2796
        %v2798 = vld [vmem:[#allocation3 + $0x40] sm:$0x1]
        %v2799 = vsel %vm2773, 0, %v2798
        %2800 = vst [vmem:[#allocation3 + $0x40] sm:$0x1] %v2799
        %v2801 = vld [vmem:[#allocation3 + $0x48] sm:$0x1]
        %v2802 = vsel %vm2773, 0, %v2801
        %2803 = vst [vmem:[#allocation3 + $0x48] sm:$0x1] %v2802
        %vm2804 = vmand %vm2772, %vm570
        %v2805 = vld [vmem:[#allocation3 + $0x4] sm:$0x1]
        %v2806 = vsel %vm2804, 0, %v2805
        %2807 = vst [vmem:[#allocation3 + $0x4] sm:$0x1] %v2806
        %v2808 = vld [vmem:[#allocation3 + $0xc] sm:$0x1]
        %v2809 = vsel %vm2804, 0, %v2808
        %2810 = vst [vmem:[#allocation3 + $0xc] sm:$0x1] %v2809
        %v2811 = vld [vmem:[#allocation3 + $0x14] sm:$0x1]
        %v2812 = vsel %vm2804, 0, %v2811
        %2813 = vst [vmem:[#allocation3 + $0x14] sm:$0x1] %v2812
        %v2814 = vld [vmem:[#allocation3 + $0x1c] sm:$0x1]
        %v2815 = vsel %vm2804, 0, %v2814
        %2816 = vst [vmem:[#allocation3 + $0x1c] sm:$0x1] %v2815
        %v2817 = vld [vmem:[#allocation3 + $0x24] sm:$0x1]
        %v2818 = vsel %vm2804, 0, %v2817
        %2819 = vst [vmem:[#allocation3 + $0x24] sm:$0x1] %v2818
        %v2820 = vld [vmem:[#allocation3 + $0x2c] sm:$0x1]
        %v2821 = vsel %vm2804, 0, %v2820
        %2822 = vst [vmem:[#allocation3 + $0x2c] sm:$0x1] %v2821
        %v2823 = vld [vmem:[#allocation3 + $0x34] sm:$0x1]
        %v2824 = vsel %vm2804, 0, %v2823
        %2825 = vst [vmem:[#allocation3 + $0x34] sm:$0x1] %v2824
        %v2826 = vld [vmem:[#allocation3 + $0x3c] sm:$0x1]
        %v2827 = vsel %vm2804, 0, %v2826
        %2828 = vst [vmem:[#allocation3 + $0x3c] sm:$0x1] %v2827
        %v2829 = vld [vmem:[#allocation3 + $0x44] sm:$0x1]
        %v2830 = vsel %vm2804, 0, %v2829
        %2831 = vst [vmem:[#allocation3 + $0x44] sm:$0x1] %v2830
        %v2832 = vld [vmem:[#allocation3 + $0x4c] sm:$0x1]
        %v2833 = vsel %vm2804, 0, %v2832
        %2834 = vst [vmem:[#allocation3 + $0x4c] sm:$0x1] %v2833
        %v2845 = vunpack.c.l.b16 %v2762
        %v2846 = vunpack.c.l.b16 %v2763
        %v2847 = vunpack.c.l.b16 %v2764
        %v2848 = vunpack.c.l.b16 %v2765
        %v2849 = vunpack.c.l.b16 %v2766
        %v2850 = vunpack.c.l.b16 %v2767
        %v2851 = vunpack.c.l.b16 %v2768
        %v2852 = vunpack.c.l.b16 %v2769
        %v2853 = vunpack.c.l.b16 %v2770
        %v2854 = vunpack.c.l.b16 %v2771
        %v2855 = vpack.c.b16 %v2845, %v2845
        %v2856 = vpack.c.b16 %v2846, %v2846
        %v2857 = vpack.c.b16 %v2847, %v2847
        %v2858 = vpack.c.b16 %v2848, %v2848
        %v2859 = vpack.c.b16 %v2849, %v2849
        %v2860 = vpack.c.b16 %v2850, %v2850
        %v2861 = vpack.c.b16 %v2851, %v2851
        %v2862 = vpack.c.b16 %v2852, %v2852
        %v2863 = vpack.c.b16 %v2853, %v2853
        %v2864 = vpack.c.b16 %v2854, %v2854
        %v2866 = vshrl.u32 %v2855, 16
        %v2868 = vrot.slane %v2866, 7
        %v2869 = vshll.u32 %v2855, 16
        %v2871 = vor.u32 %v2868, %v2869
        %v2872 = vrot.slane %v2868, 4
        %v2874 = vshrl.u32 %v2856, 16
        %v2876 = vrot.slane %v2874, 7
        %v2877 = vshll.u32 %v2856, 16
        %v2879 = vor.u32 %v2876, %v2877
        %v2880 = vrot.slane %v2876, 4
        %v2882 = vshrl.u32 %v2857, 16
        %v2884 = vrot.slane %v2882, 7
        %v2885 = vshll.u32 %v2857, 16
        %v2887 = vor.u32 %v2884, %v2885
        %v2888 = vrot.slane %v2884, 4
        %v2890 = vshrl.u32 %v2858, 16
        %v2892 = vrot.slane %v2890, 7
        %v2893 = vshll.u32 %v2858, 16
        %v2895 = vor.u32 %v2892, %v2893
        %v2896 = vrot.slane %v2892, 4
        %v2898 = vshrl.u32 %v2859, 16
        %v2900 = vrot.slane %v2898, 7
        %v2901 = vshll.u32 %v2859, 16
        %v2903 = vor.u32 %v2900, %v2901
        %v2904 = vrot.slane %v2900, 4
        %v2906 = vshrl.u32 %v2860, 16
        %v2908 = vrot.slane %v2906, 7
        %v2909 = vshll.u32 %v2860, 16
        %v2911 = vor.u32 %v2908, %v2909
        %v2912 = vrot.slane %v2908, 4
        %v2914 = vshrl.u32 %v2861, 16
        %v2916 = vrot.slane %v2914, 7
        %v2917 = vshll.u32 %v2861, 16
        %v2919 = vor.u32 %v2916, %v2917
        %v2920 = vrot.slane %v2916, 4
        %v2922 = vshrl.u32 %v2862, 16
        %v2924 = vrot.slane %v2922, 7
        %v2925 = vshll.u32 %v2862, 16
        %v2927 = vor.u32 %v2924, %v2925
        %v2928 = vrot.slane %v2924, 4
        %v2930 = vshrl.u32 %v2863, 16
        %v2932 = vrot.slane %v2930, 7
        %v2933 = vshll.u32 %v2863, 16
        %v2935 = vor.u32 %v2932, %v2933
        %v2936 = vrot.slane %v2932, 4
        %v2938 = vshrl.u32 %v2864, 16
        %v2940 = vrot.slane %v2938, 7
        %v2941 = vshll.u32 %v2864, 16
        %v2943 = vor.u32 %v2940, %v2941
        %v2944 = vrot.slane %v2940, 4
        %vm2965 = vcmask 1043456
        %vm2966 = vmand %vm2965, %vm570
        %v2967 = vld [vmem:[#allocation3] sm:$0xf]
        %v2968 = vsel %vm2966, %v2871, %v2967
        %2969 = vst [vmem:[#allocation3] sm:$0xf] %v2968
        %v2970 = vld [vmem:[#allocation3 + $0x4] sm:$0x1]
        %v2971 = vsel %vm2773, %v2872, %v2970
        %2972 = vst [vmem:[#allocation3 + $0x4] sm:$0x1] %v2971
        %v2973 = vld [vmem:[#allocation3 + $0x8] sm:$0xf]
        %v2974 = vsel %vm2966, %v2879, %v2973
        %2975 = vst [vmem:[#allocation3 + $0x8] sm:$0xf] %v2974
        %v2976 = vld [vmem:[#allocation3 + $0xc] sm:$0x1]
        %v2977 = vsel %vm2773, %v2880, %v2976
        %2978 = vst [vmem:[#allocation3 + $0xc] sm:$0x1] %v2977
        %v2979 = vld [vmem:[#allocation3 + $0x10] sm:$0xf]
        %v2980 = vsel %vm2966, %v2887, %v2979
        %2981 = vst [vmem:[#allocation3 + $0x10] sm:$0xf] %v2980
        %v2982 = vld [vmem:[#allocation3 + $0x14] sm:$0x1]
        %v2983 = vsel %vm2773, %v2888, %v2982
        %2984 = vst [vmem:[#allocation3 + $0x14] sm:$0x1] %v2983
        %v2985 = vld [vmem:[#allocation3 + $0x18] sm:$0xf]
        %v2986 = vsel %vm2966, %v2895, %v2985
        %2987 = vst [vmem:[#allocation3 + $0x18] sm:$0xf] %v2986
        %v2988 = vld [vmem:[#allocation3 + $0x1c] sm:$0x1]
        %v2989 = vsel %vm2773, %v2896, %v2988
        %2990 = vst [vmem:[#allocation3 + $0x1c] sm:$0x1] %v2989
        %v2991 = vld [vmem:[#allocation3 + $0x20] sm:$0xf]
        %v2992 = vsel %vm2966, %v2903, %v2991
        %2993 = vst [vmem:[#allocation3 + $0x20] sm:$0xf] %v2992
        %v2994 = vld [vmem:[#allocation3 + $0x24] sm:$0x1]
        %v2995 = vsel %vm2773, %v2904, %v2994
        %2996 = vst [vmem:[#allocation3 + $0x24] sm:$0x1] %v2995
        %v2997 = vld [vmem:[#allocation3 + $0x28] sm:$0xf]
        %v2998 = vsel %vm2966, %v2911, %v2997
        %2999 = vst [vmem:[#allocation3 + $0x28] sm:$0xf] %v2998
        %v3000 = vld [vmem:[#allocation3 + $0x2c] sm:$0x1]
        %v3001 = vsel %vm2773, %v2912, %v3000
        %3002 = vst [vmem:[#allocation3 + $0x2c] sm:$0x1] %v3001
        %v3003 = vld [vmem:[#allocation3 + $0x30] sm:$0xf]
        %v3004 = vsel %vm2966, %v2919, %v3003
        %3005 = vst [vmem:[#allocation3 + $0x30] sm:$0xf] %v3004
        %v3006 = vld [vmem:[#allocation3 + $0x34] sm:$0x1]
        %v3007 = vsel %vm2773, %v2920, %v3006
        %3008 = vst [vmem:[#allocation3 + $0x34] sm:$0x1] %v3007
        %v3009 = vld [vmem:[#allocation3 + $0x38] sm:$0xf]
        %v3010 = vsel %vm2966, %v2927, %v3009
        %3011 = vst [vmem:[#allocation3 + $0x38] sm:$0xf] %v3010
        %v3012 = vld [vmem:[#allocation3 + $0x3c] sm:$0x1]
        %v3013 = vsel %vm2773, %v2928, %v3012
        %3014 = vst [vmem:[#allocation3 + $0x3c] sm:$0x1] %v3013
        %v3015 = vld [vmem:[#allocation3 + $0x40] sm:$0xf]
        %v3016 = vsel %vm2966, %v2935, %v3015
        %3017 = vst [vmem:[#allocation3 + $0x40] sm:$0xf] %v3016
        %v3018 = vld [vmem:[#allocation3 + $0x44] sm:$0x1]
        %v3019 = vsel %vm2773, %v2936, %v3018
        %3020 = vst [vmem:[#allocation3 + $0x44] sm:$0x1] %v3019
        %v3021 = vld [vmem:[#allocation3 + $0x48] sm:$0xf]
        %v3022 = vsel %vm2966, %v2943, %v3021
        %3023 = vst [vmem:[#allocation3 + $0x48] sm:$0xf] %v3022
        %v3024 = vld [vmem:[#allocation3 + $0x4c] sm:$0x1]
        %v3025 = vsel %vm2773, %v2944, %v3024
        %3026 = vst [vmem:[#allocation3 + $0x4c] sm:$0x1] %v3025
        // Predicated region
        $region81: #{tpu_custom_call.1} parent=55 // pred_check
          %p3027 = pneg %p900
        $region82: #{tpu_custom_call.1} parent=55 // pred_check_branch
          %3029 = sbr.rel (%p3027) target = $region84
        $region83: #{tpu_custom_call.1} parent=55 // pred_region
          %v3030 = vld [vmem:[#allocation3] sm:$0xf]
          %v3031 = vsel %vm2966, 0, %v3030
          %3032 = vst [vmem:[#allocation3] sm:$0xf] %v3031
          %v3033 = vld [vmem:[#allocation3 + $0x4] sm:$0x1]
          %v3034 = vsel %vm2773, 0, %v3033
          %3035 = vst [vmem:[#allocation3 + $0x4] sm:$0x1] %v3034
          %s3036 = scalar_lea.vmem [#allocation3], 72
          %v3037 = vld [vmem:[%s3036] sm:$0xf]
          %v3038 = vsel %vm2966, 0, %v3037
          %3039 = vst [vmem:[%s3036] sm:$0xf] %v3038
          %v3040 = vld [vmem:[%s3036 + $0x4] sm:$0x1]
          %v3041 = vsel %vm2773, 0, %v3040
          %3042 = vst [vmem:[%s3036 + $0x4] sm:$0x1] %v3041
        $region84: #{tpu_custom_call.1} parent=55 // pred_fallthru
          _
        %v3043 = vld [vmem:[#allocation3] sm:$0xf]
        %v3044 = vld [vmem:[#allocation3 + $0x8] sm:$0xf]
        %v3045 = vld [vmem:[#allocation3 + $0x10] sm:$0xf]
        %v3046 = vld [vmem:[#allocation3 + $0x18] sm:$0xf]
        %v3047 = vld [vmem:[#allocation3 + $0x20] sm:$0xf]
        %v3048 = vld [vmem:[#allocation3 + $0x28] sm:$0xf]
        %v3049 = vld [vmem:[#allocation3 + $0x30] sm:$0xf]
        %v3050 = vld [vmem:[#allocation3 + $0x38] sm:$0xf]
        %v3051 = vld [vmem:[#allocation12] sm:$0xf]
        %v3052 = vld [vmem:[#allocation12 + $0x4] sm:$0xf]
        %v3053 = vld [vmem:[#allocation12 + $0x8] sm:$0xf]
        %v3054 = vld [vmem:[#allocation12 + $0xc] sm:$0xf]
        %v3055 = vld [vmem:[#allocation12 + $0x10] sm:$0xf]
        %v3056 = vld [vmem:[#allocation12 + $0x14] sm:$0xf]
        %v3057 = vld [vmem:[#allocation12 + $0x18] sm:$0xf]
        %v3058 = vld [vmem:[#allocation12 + $0x1c] sm:$0xf]
        %v3059 = vld [vmem:[#allocation12 + $0x20] sm:$0xf]
        %v3060 = vld [vmem:[#allocation12 + $0x24] sm:$0xf]
        %v3061 = vld [vmem:[#allocation12 + $0x28] sm:$0xf]
        %v3062 = vld [vmem:[#allocation12 + $0x2c] sm:$0xf]
        %v3063 = vld [vmem:[#allocation12 + $0x30] sm:$0xf]
        %v3064 = vld [vmem:[#allocation12 + $0x34] sm:$0xf]
        %v3065 = vld [vmem:[#allocation12 + $0x38] sm:$0xf]
        %v3066 = vld [vmem:[#allocation12 + $0x3c] sm:$0xf]
        %v3067 = vld [vmem:[#allocation3 + $0x4] sm:$0x1]
        %v3068 = vld [vmem:[#allocation3 + $0xc] sm:$0x1]
        %v3069 = vld [vmem:[#allocation3 + $0x14] sm:$0x1]
        %v3070 = vld [vmem:[#allocation3 + $0x1c] sm:$0x1]
        %v3071 = vld [vmem:[#allocation3 + $0x24] sm:$0x1]
        %v3072 = vld [vmem:[#allocation3 + $0x2c] sm:$0x1]
        %v3073 = vld [vmem:[#allocation3 + $0x34] sm:$0x1]
        %v3074 = vld [vmem:[#allocation3 + $0x3c] sm:$0x1]
        %v3076 = vshrl.u32 %v3043, 16
        %v3078 = vrot.slane %v3076, 4
        %v3079 = vshll.u32 %v3043, 16
        %v3081 = vrot.slane %v3079, 5
        %v3082 = vor.u32 %v3078, %v3081
        %v3083 = vrot.slane %v3082, 4
        %v3085 = vshll.u32 %v3067, 16
        %v3087 = vrot.slane %v3085, 5
        %v3088 = vsel %vm951, %v3083, %v3087
        %v3090 = vshrl.u32 %v3044, 16
        %v3092 = vrot.slane %v3090, 4
        %v3093 = vshll.u32 %v3044, 16
        %v3095 = vrot.slane %v3093, 5
        %v3096 = vor.u32 %v3092, %v3095
        %v3097 = vrot.slane %v3096, 4
        %v3099 = vshll.u32 %v3068, 16
        %v3101 = vrot.slane %v3099, 5
        %v3102 = vsel %vm951, %v3097, %v3101
        %v3104 = vshrl.u32 %v3045, 16
        %v3106 = vrot.slane %v3104, 4
        %v3107 = vshll.u32 %v3045, 16
        %v3109 = vrot.slane %v3107, 5
        %v3110 = vor.u32 %v3106, %v3109
        %v3111 = vrot.slane %v3110, 4
        %v3113 = vshll.u32 %v3069, 16
        %v3115 = vrot.slane %v3113, 5
        %v3116 = vsel %vm951, %v3111, %v3115
        %v3118 = vshrl.u32 %v3046, 16
        %v3120 = vrot.slane %v3118, 4
        %v3121 = vshll.u32 %v3046, 16
        %v3123 = vrot.slane %v3121, 5
        %v3124 = vor.u32 %v3120, %v3123
        %v3125 = vrot.slane %v3124, 4
        %v3127 = vshll.u32 %v3070, 16
        %v3129 = vrot.slane %v3127, 5
        %v3130 = vsel %vm951, %v3125, %v3129
        %v3132 = vshrl.u32 %v3047, 16
        %v3134 = vrot.slane %v3132, 4
        %v3135 = vshll.u32 %v3047, 16
        %v3137 = vrot.slane %v3135, 5
        %v3138 = vor.u32 %v3134, %v3137
        %v3139 = vrot.slane %v3138, 4
        %v3141 = vshll.u32 %v3071, 16
        %v3143 = vrot.slane %v3141, 5
        %v3144 = vsel %vm951, %v3139, %v3143
        %v3146 = vshrl.u32 %v3048, 16
        %v3148 = vrot.slane %v3146, 4
        %v3149 = vshll.u32 %v3048, 16
        %v3151 = vrot.slane %v3149, 5
        %v3152 = vor.u32 %v3148, %v3151
        %v3153 = vrot.slane %v3152, 4
        %v3155 = vshll.u32 %v3072, 16
        %v3157 = vrot.slane %v3155, 5
        %v3158 = vsel %vm951, %v3153, %v3157
        %v3160 = vshrl.u32 %v3049, 16
        %v3162 = vrot.slane %v3160, 4
        %v3163 = vshll.u32 %v3049, 16
        %v3165 = vrot.slane %v3163, 5
        %v3166 = vor.u32 %v3162, %v3165
        %v3167 = vrot.slane %v3166, 4
        %v3169 = vshll.u32 %v3073, 16
        %v3171 = vrot.slane %v3169, 5
        %v3172 = vsel %vm951, %v3167, %v3171
        %v3174 = vshrl.u32 %v3050, 16
        %v3176 = vrot.slane %v3174, 4
        %v3177 = vshll.u32 %v3050, 16
        %v3179 = vrot.slane %v3177, 5
        %v3180 = vor.u32 %v3176, %v3179
        %v3181 = vrot.slane %v3180, 4
        %v3183 = vshll.u32 %v3074, 16
        %v3185 = vrot.slane %v3183, 5
        %v3186 = vsel %vm951, %v3181, %v3185
        %s3187 = scalar_lea.vmem [#allocation12], 64
        %v3188 = vld [vmem:[%s3187] sm:$0xf]
        %v3189 = vld [vmem:[%s3187 + $0x4] sm:$0xf]
        %v3190 = vld [vmem:[%s3187 + $0x8] sm:$0xf]
        %v3191 = vld [vmem:[%s3187 + $0xc] sm:$0xf]
        %v3192 = vld [vmem:[%s3187 + $0x10] sm:$0xf]
        %v3193 = vld [vmem:[%s3187 + $0x14] sm:$0xf]
        %v3194 = vld [vmem:[%s3187 + $0x18] sm:$0xf]
        %v3195 = vld [vmem:[%s3187 + $0x1c] sm:$0xf]
        %v3196 = vld [vmem:[%s3187 + $0x20] sm:$0xf]
        %v3197 = vld [vmem:[%s3187 + $0x24] sm:$0xf]
        %v3198 = vld [vmem:[%s3187 + $0x28] sm:$0xf]
        %v3199 = vld [vmem:[%s3187 + $0x2c] sm:$0xf]
        %v3200 = vld [vmem:[%s3187 + $0x30] sm:$0xf]
        %v3201 = vld [vmem:[%s3187 + $0x34] sm:$0xf]
        %v3202 = vld [vmem:[%s3187 + $0x38] sm:$0xf]
        %v3203 = vld [vmem:[%s3187 + $0x3c] sm:$0xf]
        %v3204 = vunpack.c.l.b16 %v3088
        %v3205 = vunpack.c.l.b16 %v3102
        %v3206 = vunpack.c.l.b16 %v3116
        %v3207 = vunpack.c.l.b16 %v3130
        %v3208 = vunpack.c.l.b16 %v3144
        %v3209 = vunpack.c.l.b16 %v3158
        %v3210 = vunpack.c.l.b16 %v3172
        %v3211 = vunpack.c.l.b16 %v3186
        %v3212 = vpack.c.b16 %v3205, %v3204
        %v3213 = vpack.c.b16 %v3207, %v3206
        %v3214 = vpack.c.b16 %v3209, %v3208
        %v3215 = vpack.c.b16 %v3211, %v3210
        %v3236 = vunpack.c.l.b16 %v3188
        %v3237 = vunpack.c.l.b16 %v3189
        %v3238 = vunpack.c.l.b16 %v3190
        %v3239 = vunpack.c.l.b16 %v3191
        %v3240 = vunpack.c.l.b16 %v3192
        %v3241 = vunpack.c.l.b16 %v3193
        %v3242 = vunpack.c.l.b16 %v3194
        %v3243 = vunpack.c.l.b16 %v3195
        %v3244 = vunpack.c.l.b16 %v3196
        %v3245 = vunpack.c.l.b16 %v3197
        %v3246 = vunpack.c.l.b16 %v3198
        %v3247 = vunpack.c.l.b16 %v3199
        %v3248 = vunpack.c.l.b16 %v3200
        %v3249 = vunpack.c.l.b16 %v3201
        %v3250 = vunpack.c.l.b16 %v3202
        %v3251 = vunpack.c.l.b16 %v3203
        %v3252 = vpack.c.b16 %v3237, %v3236
        %v3253 = vpack.c.b16 %v3239, %v3238
        %v3254 = vpack.c.b16 %v3241, %v3240
        %v3255 = vpack.c.b16 %v3243, %v3242
        %v3256 = vpack.c.b16 %v3245, %v3244
        %v3257 = vpack.c.b16 %v3247, %v3246
        %v3258 = vpack.c.b16 %v3249, %v3248
        %v3259 = vpack.c.b16 %v3251, %v3250
        %3268 = vmatprep.subr.bf16.mxu0 0
        %3269 = vmatpush1.bf16.msra.mxu0 %v3259
        %3270 = vmatprep.subr.bf16.mxu0 0
        %3271 = vmatpush1.bf16.msra.mxu0 %v3258
        %3272 = vmatprep.subr.bf16.mxu0 0
        %3273 = vmatpush1.bf16.msra.mxu0 %v3257
        %3274 = vmatprep.subr.bf16.mxu0 0
        %3275 = vmatpush1.bf16.msra.mxu0 %v3256
        %3276 = vmatprep.subr.bf16.mxu0 0
        %3277 = vmatpush1.bf16.msra.mxu0 %v3255
        %3278 = vmatprep.subr.bf16.mxu0 0
        %3279 = vmatpush1.bf16.msra.mxu0 %v3254
        %3280 = vmatprep.subr.bf16.mxu0 0
        %3281 = vmatpush1.bf16.msra.mxu0 %v3253
        %3282 = vmatprep.subr.bf16.mxu0 0
        %3283 = vmatpush1.bf16.msra.mxu0 %v3252
        %3284 = vmatprep.subr.bf16.mxu0 0
        %3285 = vmatpush2.bf16.msra.mxu0 0
        %3286 = vmatprep.subr.bf16.mxu0 0
        %3287 = vmatpush2.bf16.msra.mxu0 0
        %3288 = vmatprep.subr.bf16.mxu0 0
        %3289 = vmatpush2.bf16.msra.mxu0 0
        %3290 = vmatprep.subr.bf16.mxu0 0
        %3291 = vmatpush2.bf16.msra.mxu0 0
        %3292 = vmatprep.subr.bf16.mxu0 0
        %3293 = vmatpush2.bf16.msra.mxu0 0
        %3294 = vmatprep.subr.bf16.mxu0 0
        %3295 = vmatpush2.bf16.msra.mxu0 0
        %3296 = vmatprep.subr.bf16.mxu0 0
        %3297 = vmatpush2.bf16.msra.mxu0 0
        %3298 = vmatprep.subr.bf16.mxu0 0
        %3299 = vmatpush2.bf16.msra.mxu0 0
        %3300 = vmatprep.mubr.bf16.mxu0 0
        %3301 = vmatmul.mubr.bf16.gmra.mxu0 %v3212
        %v3302 = vpop.f32.mrf.mxu0
        %v3303 = vadd.f32 0.0, %v3302
        %v3304 = vpop.f32.mrf.mxu0
        %v3305 = vpop.f32.mrf.mxu0
        %v3306 = vadd.f32 0.0, %v3305
        %v3307 = vpop.f32.mrf.mxu0
        %3308 = vmatprep.mubr.bf16.mxu0 0
        %3309 = vmatmul.mubr.bf16.gmra.mxu0 %v3213
        %v3310 = vpop.f32.mrf.mxu0
        %v3311 = vadd.f32 0.0, %v3310
        %v3312 = vpop.f32.mrf.mxu0
        %v3313 = vpop.f32.mrf.mxu0
        %v3314 = vadd.f32 0.0, %v3313
        %v3315 = vpop.f32.mrf.mxu0
        %3316 = vmatprep.mubr.bf16.mxu0 0
        %3317 = vmatmul.mubr.bf16.gmra.mxu0 %v3214
        %v3318 = vpop.f32.mrf.mxu0
        %v3319 = vadd.f32 0.0, %v3318
        %v3320 = vpop.f32.mrf.mxu0
        %v3321 = vpop.f32.mrf.mxu0
        %v3322 = vadd.f32 0.0, %v3321
        %v3323 = vpop.f32.mrf.mxu0
        %3324 = vmatprep.mubr.bf16.mxu0 0
        %3325 = vmatmul.mubr.bf16.gmra.mxu0 %v3215
        %v3326 = vpop.f32.mrf.mxu0
        %v3327 = vadd.f32 0.0, %v3326
        %v3328 = vpop.f32.mrf.mxu0
        %v3329 = vpop.f32.mrf.mxu0
        %v3330 = vadd.f32 0.0, %v3329
        %v3331 = vpop.f32.mrf.mxu0
        %3332 = vdwg.mxu0
        %v3341 = vunpack.c.l.b16 %v3043
        %v3342 = vunpack.c.l.b16 %v3044
        %v3343 = vunpack.c.l.b16 %v3045
        %v3344 = vunpack.c.l.b16 %v3046
        %v3345 = vunpack.c.l.b16 %v3047
        %v3346 = vunpack.c.l.b16 %v3048
        %v3347 = vunpack.c.l.b16 %v3049
        %v3348 = vunpack.c.l.b16 %v3050
        %v3349 = vpack.c.b16 %v3342, %v3341
        %v3350 = vpack.c.b16 %v3344, %v3343
        %v3351 = vpack.c.b16 %v3346, %v3345
        %v3352 = vpack.c.b16 %v3348, %v3347
        %v3373 = vunpack.c.l.b16 %v3051
        %v3374 = vunpack.c.l.b16 %v3052
        %v3375 = vunpack.c.l.b16 %v3053
        %v3376 = vunpack.c.l.b16 %v3054
        %v3377 = vunpack.c.l.b16 %v3055
        %v3378 = vunpack.c.l.b16 %v3056
        %v3379 = vunpack.c.l.b16 %v3057
        %v3380 = vunpack.c.l.b16 %v3058
        %v3381 = vunpack.c.l.b16 %v3059
        %v3382 = vunpack.c.l.b16 %v3060
        %v3383 = vunpack.c.l.b16 %v3061
        %v3384 = vunpack.c.l.b16 %v3062
        %v3385 = vunpack.c.l.b16 %v3063
        %v3386 = vunpack.c.l.b16 %v3064
        %v3387 = vunpack.c.l.b16 %v3065
        %v3388 = vunpack.c.l.b16 %v3066
        %v3389 = vpack.c.b16 %v3374, %v3373
        %v3390 = vpack.c.b16 %v3376, %v3375
        %v3391 = vpack.c.b16 %v3378, %v3377
        %v3392 = vpack.c.b16 %v3380, %v3379
        %v3393 = vpack.c.b16 %v3382, %v3381
        %v3394 = vpack.c.b16 %v3384, %v3383
        %v3395 = vpack.c.b16 %v3386, %v3385
        %v3396 = vpack.c.b16 %v3388, %v3387
        %3405 = vmatprep.subr.bf16.mxu0 0
        %3406 = vmatpush1.bf16.msra.mxu0 %v3396
        %3407 = vmatprep.subr.bf16.mxu0 0
        %3408 = vmatpush1.bf16.msra.mxu0 %v3395
        %3409 = vmatprep.subr.bf16.mxu0 0
        %3410 = vmatpush1.bf16.msra.mxu0 %v3394
        %3411 = vmatprep.subr.bf16.mxu0 0
        %3412 = vmatpush1.bf16.msra.mxu0 %v3393
        %3413 = vmatprep.subr.bf16.mxu0 0
        %3414 = vmatpush1.bf16.msra.mxu0 %v3392
        %3415 = vmatprep.subr.bf16.mxu0 0
        %3416 = vmatpush1.bf16.msra.mxu0 %v3391
        %3417 = vmatprep.subr.bf16.mxu0 0
        %3418 = vmatpush1.bf16.msra.mxu0 %v3390
        %3419 = vmatprep.subr.bf16.mxu0 0
        %3420 = vmatpush1.bf16.msra.mxu0 %v3389
        %3421 = vmatprep.subr.bf16.mxu0 0
        %3422 = vmatpush2.bf16.msra.mxu0 0
        %3423 = vmatprep.subr.bf16.mxu0 0
        %3424 = vmatpush2.bf16.msra.mxu0 0
        %3425 = vmatprep.subr.bf16.mxu0 0
        %3426 = vmatpush2.bf16.msra.mxu0 0
        %3427 = vmatprep.subr.bf16.mxu0 0
        %3428 = vmatpush2.bf16.msra.mxu0 0
        %3429 = vmatprep.subr.bf16.mxu0 0
        %3430 = vmatpush2.bf16.msra.mxu0 0
        %3431 = vmatprep.subr.bf16.mxu0 0
        %3432 = vmatpush2.bf16.msra.mxu0 0
        %3433 = vmatprep.subr.bf16.mxu0 0
        %3434 = vmatpush2.bf16.msra.mxu0 0
        %3435 = vmatprep.subr.bf16.mxu0 0
        %3436 = vmatpush2.bf16.msra.mxu0 0
        %3437 = vmatprep.mubr.bf16.mxu0 0
        %3438 = vmatmul.mubr.bf16.gmra.mxu0 %v3349
        %v3439 = vpop.f32.mrf.mxu0
        %v3440 = vadd.f32 %v3303, %v3439
        %v3441 = vpop.f32.mrf.mxu0
        %v3442 = vpop.f32.mrf.mxu0
        %v3443 = vadd.f32 %v3306, %v3442
        %v3444 = vpop.f32.mrf.mxu0
        %3445 = vmatprep.mubr.bf16.mxu0 0
        %3446 = vmatmul.mubr.bf16.gmra.mxu0 %v3350
        %v3447 = vpop.f32.mrf.mxu0
        %v3448 = vadd.f32 %v3311, %v3447
        %v3449 = vpop.f32.mrf.mxu0
        %v3450 = vpop.f32.mrf.mxu0
        %v3451 = vadd.f32 %v3314, %v3450
        %v3452 = vpop.f32.mrf.mxu0
        %3453 = vmatprep.mubr.bf16.mxu0 0
        %3454 = vmatmul.mubr.bf16.gmra.mxu0 %v3351
        %v3455 = vpop.f32.mrf.mxu0
        %v3456 = vadd.f32 %v3319, %v3455
        %v3457 = vpop.f32.mrf.mxu0
        %v3458 = vpop.f32.mrf.mxu0
        %v3459 = vadd.f32 %v3322, %v3458
        %v3460 = vpop.f32.mrf.mxu0
        %3461 = vmatprep.mubr.bf16.mxu0 0
        %3462 = vmatmul.mubr.bf16.gmra.mxu0 %v3352
        %v3463 = vpop.f32.mrf.mxu0
        %v3464 = vadd.f32 %v3327, %v3463
        %v3465 = vpop.f32.mrf.mxu0
        %v3466 = vpop.f32.mrf.mxu0
        %v3467 = vadd.f32 %v3330, %v3466
        %v3468 = vpop.f32.mrf.mxu0
        %3469 = vdwg.mxu0
        %v3470 = vld [vmem:[#allocation3] sm:$0xe]
        %v3471 = vld [vmem:[#allocation3 + $0x8] sm:$0xe]
        %v3472 = vld [vmem:[#allocation3 + $0x10] sm:$0xe]
        %v3473 = vld [vmem:[#allocation3 + $0x18] sm:$0xe]
        %v3474 = vld [vmem:[#allocation3 + $0x20] sm:$0xe]
        %v3475 = vld [vmem:[#allocation3 + $0x28] sm:$0xe]
        %v3476 = vld [vmem:[#allocation3 + $0x30] sm:$0xe]
        %v3477 = vld [vmem:[#allocation3 + $0x38] sm:$0xe]
        %v3494 = vrot.slane %v3470, 5
        %v3495 = vrot.slane %v3494, 4
        %v3496 = vrot.slane %v3067, 5
        %v3497 = vsel %vm1350, %v3495, %v3496
        %v3498 = vrot.slane %v3471, 5
        %v3499 = vrot.slane %v3498, 4
        %v3500 = vrot.slane %v3068, 5
        %v3501 = vsel %vm1350, %v3499, %v3500
        %v3502 = vrot.slane %v3472, 5
        %v3503 = vrot.slane %v3502, 4
        %v3504 = vrot.slane %v3069, 5
        %v3505 = vsel %vm1350, %v3503, %v3504
        %v3506 = vrot.slane %v3473, 5
        %v3507 = vrot.slane %v3506, 4
        %v3508 = vrot.slane %v3070, 5
        %v3509 = vsel %vm1350, %v3507, %v3508
        %v3510 = vrot.slane %v3474, 5
        %v3511 = vrot.slane %v3510, 4
        %v3512 = vrot.slane %v3071, 5
        %v3513 = vsel %vm1350, %v3511, %v3512
        %v3514 = vrot.slane %v3475, 5
        %v3515 = vrot.slane %v3514, 4
        %v3516 = vrot.slane %v3072, 5
        %v3517 = vsel %vm1350, %v3515, %v3516
        %v3518 = vrot.slane %v3476, 5
        %v3519 = vrot.slane %v3518, 4
        %v3520 = vrot.slane %v3073, 5
        %v3521 = vsel %vm1350, %v3519, %v3520
        %v3522 = vrot.slane %v3477, 5
        %v3523 = vrot.slane %v3522, 4
        %v3524 = vrot.slane %v3074, 5
        %v3525 = vsel %vm1350, %v3523, %v3524
        %s3526 = scalar_lea.vmem [#allocation12], 128
        %v3527 = vld [vmem:[%s3526] sm:$0xf]
        %v3528 = vld [vmem:[%s3526 + $0x4] sm:$0xf]
        %v3529 = vld [vmem:[%s3526 + $0x8] sm:$0xf]
        %v3530 = vld [vmem:[%s3526 + $0xc] sm:$0xf]
        %v3531 = vld [vmem:[%s3526 + $0x10] sm:$0xf]
        %v3532 = vld [vmem:[%s3526 + $0x14] sm:$0xf]
        %v3533 = vld [vmem:[%s3526 + $0x18] sm:$0xf]
        %v3534 = vld [vmem:[%s3526 + $0x1c] sm:$0xf]
        %v3535 = vld [vmem:[%s3526 + $0x20] sm:$0xf]
        %v3536 = vld [vmem:[%s3526 + $0x24] sm:$0xf]
        %v3537 = vld [vmem:[%s3526 + $0x28] sm:$0xf]
        %v3538 = vld [vmem:[%s3526 + $0x2c] sm:$0xf]
        %v3539 = vld [vmem:[%s3526 + $0x30] sm:$0xf]
        %v3540 = vld [vmem:[%s3526 + $0x34] sm:$0xf]
        %v3541 = vld [vmem:[%s3526 + $0x38] sm:$0xf]
        %v3542 = vld [vmem:[%s3526 + $0x3c] sm:$0xf]
        %v3543 = vunpack.c.l.b16 %v3497
        %v3544 = vunpack.c.l.b16 %v3501
        %v3545 = vunpack.c.l.b16 %v3505
        %v3546 = vunpack.c.l.b16 %v3509
        %v3547 = vunpack.c.l.b16 %v3513
        %v3548 = vunpack.c.l.b16 %v3517
        %v3549 = vunpack.c.l.b16 %v3521
        %v3550 = vunpack.c.l.b16 %v3525
        %v3551 = vpack.c.b16 %v3544, %v3543
        %v3552 = vpack.c.b16 %v3546, %v3545
        %v3553 = vpack.c.b16 %v3548, %v3547
        %v3554 = vpack.c.b16 %v3550, %v3549
        %v3575 = vunpack.c.l.b16 %v3527
        %v3576 = vunpack.c.l.b16 %v3528
        %v3577 = vunpack.c.l.b16 %v3529
        %v3578 = vunpack.c.l.b16 %v3530
        %v3579 = vunpack.c.l.b16 %v3531
        %v3580 = vunpack.c.l.b16 %v3532
        %v3581 = vunpack.c.l.b16 %v3533
        %v3582 = vunpack.c.l.b16 %v3534
        %v3583 = vunpack.c.l.b16 %v3535
        %v3584 = vunpack.c.l.b16 %v3536
        %v3585 = vunpack.c.l.b16 %v3537
        %v3586 = vunpack.c.l.b16 %v3538
        %v3587 = vunpack.c.l.b16 %v3539
        %v3588 = vunpack.c.l.b16 %v3540
        %v3589 = vunpack.c.l.b16 %v3541
        %v3590 = vunpack.c.l.b16 %v3542
        %v3591 = vpack.c.b16 %v3576, %v3575
        %v3592 = vpack.c.b16 %v3578, %v3577
        %v3593 = vpack.c.b16 %v3580, %v3579
        %v3594 = vpack.c.b16 %v3582, %v3581
        %v3595 = vpack.c.b16 %v3584, %v3583
        %v3596 = vpack.c.b16 %v3586, %v3585
        %v3597 = vpack.c.b16 %v3588, %v3587
        %v3598 = vpack.c.b16 %v3590, %v3589
        %3607 = vmatprep.subr.bf16.mxu0 0
        %3608 = vmatpush1.bf16.msra.mxu0 %v3598
        %3609 = vmatprep.subr.bf16.mxu0 0
        %3610 = vmatpush1.bf16.msra.mxu0 %v3597
        %3611 = vmatprep.subr.bf16.mxu0 0
        %3612 = vmatpush1.bf16.msra.mxu0 %v3596
        %3613 = vmatprep.subr.bf16.mxu0 0
        %3614 = vmatpush1.bf16.msra.mxu0 %v3595
        %3615 = vmatprep.subr.bf16.mxu0 0
        %3616 = vmatpush1.bf16.msra.mxu0 %v3594
        %3617 = vmatprep.subr.bf16.mxu0 0
        %3618 = vmatpush1.bf16.msra.mxu0 %v3593
        %3619 = vmatprep.subr.bf16.mxu0 0
        %3620 = vmatpush1.bf16.msra.mxu0 %v3592
        %3621 = vmatprep.subr.bf16.mxu0 0
        %3622 = vmatpush1.bf16.msra.mxu0 %v3591
        %3623 = vmatprep.subr.bf16.mxu0 0
        %3624 = vmatpush2.bf16.msra.mxu0 0
        %3625 = vmatprep.subr.bf16.mxu0 0
        %3626 = vmatpush2.bf16.msra.mxu0 0
        %3627 = vmatprep.subr.bf16.mxu0 0
        %3628 = vmatpush2.bf16.msra.mxu0 0
        %3629 = vmatprep.subr.bf16.mxu0 0
        %3630 = vmatpush2.bf16.msra.mxu0 0
        %3631 = vmatprep.subr.bf16.mxu0 0
        %3632 = vmatpush2.bf16.msra.mxu0 0
        %3633 = vmatprep.subr.bf16.mxu0 0
        %3634 = vmatpush2.bf16.msra.mxu0 0
        %3635 = vmatprep.subr.bf16.mxu0 0
        %3636 = vmatpush2.bf16.msra.mxu0 0
        %3637 = vmatprep.subr.bf16.mxu0 0
        %3638 = vmatpush2.bf16.msra.mxu0 0
        %3639 = vmatprep.mubr.bf16.mxu0 0
        %3640 = vmatmul.mubr.bf16.gmra.mxu0 %v3551
        %v3641 = vpop.f32.mrf.mxu0
        %v3642 = vadd.f32 0.0, %v3641
        %v3643 = vpop.f32.mrf.mxu0
        %v3644 = vpop.f32.mrf.mxu0
        %v3645 = vadd.f32 0.0, %v3644
        %v3646 = vpop.f32.mrf.mxu0
        %3647 = vmatprep.mubr.bf16.mxu0 0
        %3648 = vmatmul.mubr.bf16.gmra.mxu0 %v3552
        %v3649 = vpop.f32.mrf.mxu0
        %v3650 = vadd.f32 0.0, %v3649
        %v3651 = vpop.f32.mrf.mxu0
        %v3652 = vpop.f32.mrf.mxu0
        %v3653 = vadd.f32 0.0, %v3652
        %v3654 = vpop.f32.mrf.mxu0
        %3655 = vmatprep.mubr.bf16.mxu0 0
        %3656 = vmatmul.mubr.bf16.gmra.mxu0 %v3553
        %v3657 = vpop.f32.mrf.mxu0
        %v3658 = vadd.f32 0.0, %v3657
        %v3659 = vpop.f32.mrf.mxu0
        %v3660 = vpop.f32.mrf.mxu0
        %v3661 = vadd.f32 0.0, %v3660
        %v3662 = vpop.f32.mrf.mxu0
        %3663 = vmatprep.mubr.bf16.mxu0 0
        %3664 = vmatmul.mubr.bf16.gmra.mxu0 %v3554
        %v3665 = vpop.f32.mrf.mxu0
        %v3666 = vadd.f32 0.0, %v3665
        %v3667 = vpop.f32.mrf.mxu0
        %v3668 = vpop.f32.mrf.mxu0
        %v3669 = vadd.f32 0.0, %v3668
        %v3670 = vpop.f32.mrf.mxu0
        %3671 = vdwg.mxu0
        %v3672 = vadd.f32 %v3440, %v3642
        %v3673 = vadd.f32 %v3443, %v3645
        %v3674 = vadd.f32 %v3448, %v3650
        %v3675 = vadd.f32 %v3451, %v3653
        %v3676 = vadd.f32 %v3456, %v3658
        %v3677 = vadd.f32 %v3459, %v3661
        %v3678 = vadd.f32 %v3464, %v3666
        %v3679 = vadd.f32 %v3467, %v3669
        %s3680 = scalar_lea.vmem [#allocation3], 8
        %v3681 = vld [vmem:[%s3680] sm:$0xf]
        %v3682 = vld [vmem:[%s3680 + $0x8] sm:$0xf]
        %v3683 = vld [vmem:[%s3680 + $0x10] sm:$0xf]
        %v3684 = vld [vmem:[%s3680 + $0x18] sm:$0xf]
        %v3685 = vld [vmem:[%s3680 + $0x20] sm:$0xf]
        %v3686 = vld [vmem:[%s3680 + $0x28] sm:$0xf]
        %v3687 = vld [vmem:[%s3680 + $0x30] sm:$0xf]
        %v3688 = vld [vmem:[%s3680 + $0x38] sm:$0xf]
        %s3689 = scalar_lea.vmem [#allocation12], 192
        %v3690 = vld [vmem:[%s3689] sm:$0xf]
        %v3691 = vld [vmem:[%s3689 + $0x4] sm:$0xf]
        %v3692 = vld [vmem:[%s3689 + $0x8] sm:$0xf]
        %v3693 = vld [vmem:[%s3689 + $0xc] sm:$0xf]
        %v3694 = vld [vmem:[%s3689 + $0x10] sm:$0xf]
        %v3695 = vld [vmem:[%s3689 + $0x14] sm:$0xf]
        %v3696 = vld [vmem:[%s3689 + $0x18] sm:$0xf]
        %v3697 = vld [vmem:[%s3689 + $0x1c] sm:$0xf]
        %v3698 = vld [vmem:[%s3689 + $0x20] sm:$0xf]
        %v3699 = vld [vmem:[%s3689 + $0x24] sm:$0xf]
        %v3700 = vld [vmem:[%s3689 + $0x28] sm:$0xf]
        %v3701 = vld [vmem:[%s3689 + $0x2c] sm:$0xf]
        %v3702 = vld [vmem:[%s3689 + $0x30] sm:$0xf]
        %v3703 = vld [vmem:[%s3689 + $0x34] sm:$0xf]
        %v3704 = vld [vmem:[%s3689 + $0x38] sm:$0xf]
        %v3705 = vld [vmem:[%s3689 + $0x3c] sm:$0xf]
        %v3714 = vunpack.c.l.b16 %v3681
        %v3715 = vunpack.c.l.b16 %v3682
        %v3716 = vunpack.c.l.b16 %v3683
        %v3717 = vunpack.c.l.b16 %v3684
        %v3718 = vunpack.c.l.b16 %v3685
        %v3719 = vunpack.c.l.b16 %v3686
        %v3720 = vunpack.c.l.b16 %v3687
        %v3721 = vunpack.c.l.b16 %v3688
        %v3722 = vpack.c.b16 %v3715, %v3714
        %v3723 = vpack.c.b16 %v3717, %v3716
        %v3724 = vpack.c.b16 %v3719, %v3718
        %v3725 = vpack.c.b16 %v3721, %v3720
        %v3746 = vunpack.c.l.b16 %v3690
        %v3747 = vunpack.c.l.b16 %v3691
        %v3748 = vunpack.c.l.b16 %v3692
        %v3749 = vunpack.c.l.b16 %v3693
        %v3750 = vunpack.c.l.b16 %v3694
        %v3751 = vunpack.c.l.b16 %v3695
        %v3752 = vunpack.c.l.b16 %v3696
        %v3753 = vunpack.c.l.b16 %v3697
        %v3754 = vunpack.c.l.b16 %v3698
        %v3755 = vunpack.c.l.b16 %v3699
        %v3756 = vunpack.c.l.b16 %v3700
        %v3757 = vunpack.c.l.b16 %v3701
        %v3758 = vunpack.c.l.b16 %v3702
        %v3759 = vunpack.c.l.b16 %v3703
        %v3760 = vunpack.c.l.b16 %v3704
        %v3761 = vunpack.c.l.b16 %v3705
        %v3762 = vpack.c.b16 %v3747, %v3746
        %v3763 = vpack.c.b16 %v3749, %v3748
        %v3764 = vpack.c.b16 %v3751, %v3750
        %v3765 = vpack.c.b16 %v3753, %v3752
        %v3766 = vpack.c.b16 %v3755, %v3754
        %v3767 = vpack.c.b16 %v3757, %v3756
        %v3768 = vpack.c.b16 %v3759, %v3758
        %v3769 = vpack.c.b16 %v3761, %v3760
        %3778 = vmatprep.subr.bf16.mxu0 0
        %3779 = vmatpush1.bf16.msra.mxu0 %v3769
        %3780 = vmatprep.subr.bf16.mxu0 0
        %3781 = vmatpush1.bf16.msra.mxu0 %v3768
        %3782 = vmatprep.subr.bf16.mxu0 0
        %3783 = vmatpush1.bf16.msra.mxu0 %v3767
        %3784 = vmatprep.subr.bf16.mxu0 0
        %3785 = vmatpush1.bf16.msra.mxu0 %v3766
        %3786 = vmatprep.subr.bf16.mxu0 0
        %3787 = vmatpush1.bf16.msra.mxu0 %v3765
        %3788 = vmatprep.subr.bf16.mxu0 0
        %3789 = vmatpush1.bf16.msra.mxu0 %v3764
        %3790 = vmatprep.subr.bf16.mxu0 0
        %3791 = vmatpush1.bf16.msra.mxu0 %v3763
        %3792 = vmatprep.subr.bf16.mxu0 0
        %3793 = vmatpush1.bf16.msra.mxu0 %v3762
        %3794 = vmatprep.subr.bf16.mxu0 0
        %3795 = vmatpush2.bf16.msra.mxu0 0
        %3796 = vmatprep.subr.bf16.mxu0 0
        %3797 = vmatpush2.bf16.msra.mxu0 0
        %3798 = vmatprep.subr.bf16.mxu0 0
        %3799 = vmatpush2.bf16.msra.mxu0 0
        %3800 = vmatprep.subr.bf16.mxu0 0
        %3801 = vmatpush2.bf16.msra.mxu0 0
        %3802 = vmatprep.subr.bf16.mxu0 0
        %3803 = vmatpush2.bf16.msra.mxu0 0
        %3804 = vmatprep.subr.bf16.mxu0 0
        %3805 = vmatpush2.bf16.msra.mxu0 0
        %3806 = vmatprep.subr.bf16.mxu0 0
        %3807 = vmatpush2.bf16.msra.mxu0 0
        %3808 = vmatprep.subr.bf16.mxu0 0
        %3809 = vmatpush2.bf16.msra.mxu0 0
        %3810 = vmatprep.mubr.bf16.mxu0 0
        %3811 = vmatmul.mubr.bf16.gmra.mxu0 %v3722
        %v3812 = vpop.f32.mrf.mxu0
        %v3813 = vadd.f32 0.0, %v3812
        %v3814 = vpop.f32.mrf.mxu0
        %v3815 = vpop.f32.mrf.mxu0
        %v3816 = vadd.f32 0.0, %v3815
        %v3817 = vpop.f32.mrf.mxu0
        %3818 = vmatprep.mubr.bf16.mxu0 0
        %3819 = vmatmul.mubr.bf16.gmra.mxu0 %v3723
        %v3820 = vpop.f32.mrf.mxu0
        %v3821 = vadd.f32 0.0, %v3820
        %v3822 = vpop.f32.mrf.mxu0
        %v3823 = vpop.f32.mrf.mxu0
        %v3824 = vadd.f32 0.0, %v3823
        %v3825 = vpop.f32.mrf.mxu0
        %3826 = vmatprep.mubr.bf16.mxu0 0
        %3827 = vmatmul.mubr.bf16.gmra.mxu0 %v3724
        %v3828 = vpop.f32.mrf.mxu0
        %v3829 = vadd.f32 0.0, %v3828
        %v3830 = vpop.f32.mrf.mxu0
        %v3831 = vpop.f32.mrf.mxu0
        %v3832 = vadd.f32 0.0, %v3831
        %v3833 = vpop.f32.mrf.mxu0
        %3834 = vmatprep.mubr.bf16.mxu0 0
        %3835 = vmatmul.mubr.bf16.gmra.mxu0 %v3725
        %v3836 = vpop.f32.mrf.mxu0
        %v3837 = vadd.f32 0.0, %v3836
        %v3838 = vpop.f32.mrf.mxu0
        %v3839 = vpop.f32.mrf.mxu0
        %v3840 = vadd.f32 0.0, %v3839
        %v3841 = vpop.f32.mrf.mxu0
        %3842 = vdwg.mxu0
        %v3843 = vadd.f32 %v3672, %v3813
        %v3844 = vadd.f32 %v3673, %v3816
        %v3845 = vadd.f32 %v3674, %v3821
        %v3846 = vadd.f32 %v3675, %v3824
        %v3847 = vadd.f32 %v3676, %v3829
        %v3848 = vadd.f32 %v3677, %v3832
        %v3849 = vadd.f32 %v3678, %v3837
        %v3850 = vadd.f32 %v3679, %v3840
        %v3851 = vld [vmem:[%s3680] sm:$0xf]
        %v3852 = vld [vmem:[%s3680 + $0x4] sm:$0x1]
        %v3853 = vld [vmem:[%s3680 + $0x8] sm:$0xf]
        %v3854 = vld [vmem:[%s3680 + $0xc] sm:$0x1]
        %v3855 = vld [vmem:[%s3680 + $0x10] sm:$0xf]
        %v3856 = vld [vmem:[%s3680 + $0x14] sm:$0x1]
        %v3857 = vld [vmem:[%s3680 + $0x18] sm:$0xf]
        %v3858 = vld [vmem:[%s3680 + $0x1c] sm:$0x1]
        %v3859 = vld [vmem:[%s3680 + $0x20] sm:$0xf]
        %v3860 = vld [vmem:[%s3680 + $0x24] sm:$0x1]
        %v3861 = vld [vmem:[%s3680 + $0x28] sm:$0xf]
        %v3862 = vld [vmem:[%s3680 + $0x2c] sm:$0x1]
        %v3863 = vld [vmem:[%s3680 + $0x30] sm:$0xf]
        %v3864 = vld [vmem:[%s3680 + $0x34] sm:$0x1]
        %v3865 = vld [vmem:[%s3680 + $0x38] sm:$0xf]
        %v3866 = vld [vmem:[%s3680 + $0x3c] sm:$0x1]
        %v3868 = vshrl.u32 %v3851, 16
        %v3870 = vrot.slane %v3868, 4
        %v3871 = vshll.u32 %v3851, 16
        %v3873 = vrot.slane %v3871, 5
        %v3874 = vor.u32 %v3870, %v3873
        %v3875 = vrot.slane %v3874, 4
        %v3877 = vshll.u32 %v3852, 16
        %v3879 = vrot.slane %v3877, 5
        %v3880 = vsel %vm951, %v3875, %v3879
        %v3882 = vshrl.u32 %v3853, 16
        %v3884 = vrot.slane %v3882, 4
        %v3885 = vshll.u32 %v3853, 16
        %v3887 = vrot.slane %v3885, 5
        %v3888 = vor.u32 %v3884, %v3887
        %v3889 = vrot.slane %v3888, 4
        %v3891 = vshll.u32 %v3854, 16
        %v3893 = vrot.slane %v3891, 5
        %v3894 = vsel %vm951, %v3889, %v3893
        %v3896 = vshrl.u32 %v3855, 16
        %v3898 = vrot.slane %v3896, 4
        %v3899 = vshll.u32 %v3855, 16
        %v3901 = vrot.slane %v3899, 5
        %v3902 = vor.u32 %v3898, %v3901
        %v3903 = vrot.slane %v3902, 4
        %v3905 = vshll.u32 %v3856, 16
        %v3907 = vrot.slane %v3905, 5
        %v3908 = vsel %vm951, %v3903, %v3907
        %v3910 = vshrl.u32 %v3857, 16
        %v3912 = vrot.slane %v3910, 4
        %v3913 = vshll.u32 %v3857, 16
        %v3915 = vrot.slane %v3913, 5
        %v3916 = vor.u32 %v3912, %v3915
        %v3917 = vrot.slane %v3916, 4
        %v3919 = vshll.u32 %v3858, 16
        %v3921 = vrot.slane %v3919, 5
        %v3922 = vsel %vm951, %v3917, %v3921
        %v3924 = vshrl.u32 %v3859, 16
        %v3926 = vrot.slane %v3924, 4
        %v3927 = vshll.u32 %v3859, 16
        %v3929 = vrot.slane %v3927, 5
        %v3930 = vor.u32 %v3926, %v3929
        %v3931 = vrot.slane %v3930, 4
        %v3933 = vshll.u32 %v3860, 16
        %v3935 = vrot.slane %v3933, 5
        %v3936 = vsel %vm951, %v3931, %v3935
        %v3938 = vshrl.u32 %v3861, 16
        %v3940 = vrot.slane %v3938, 4
        %v3941 = vshll.u32 %v3861, 16
        %v3943 = vrot.slane %v3941, 5
        %v3944 = vor.u32 %v3940, %v3943
        %v3945 = vrot.slane %v3944, 4
        %v3947 = vshll.u32 %v3862, 16
        %v3949 = vrot.slane %v3947, 5
        %v3950 = vsel %vm951, %v3945, %v3949
        %v3952 = vshrl.u32 %v3863, 16
        %v3954 = vrot.slane %v3952, 4
        %v3955 = vshll.u32 %v3863, 16
        %v3957 = vrot.slane %v3955, 5
        %v3958 = vor.u32 %v3954, %v3957
        %v3959 = vrot.slane %v3958, 4
        %v3961 = vshll.u32 %v3864, 16
        %v3963 = vrot.slane %v3961, 5
        %v3964 = vsel %vm951, %v3959, %v3963
        %v3966 = vshrl.u32 %v3865, 16
        %v3968 = vrot.slane %v3966, 4
        %v3969 = vshll.u32 %v3865, 16
        %v3971 = vrot.slane %v3969, 5
        %v3972 = vor.u32 %v3968, %v3971
        %v3973 = vrot.slane %v3972, 4
        %v3975 = vshll.u32 %v3866, 16
        %v3977 = vrot.slane %v3975, 5
        %v3978 = vsel %vm951, %v3973, %v3977
        %s3979 = scalar_lea.vmem [#allocation12], 256
        %v3980 = vld [vmem:[%s3979] sm:$0xf]
        %v3981 = vld [vmem:[%s3979 + $0x4] sm:$0xf]
        %v3982 = vld [vmem:[%s3979 + $0x8] sm:$0xf]
        %v3983 = vld [vmem:[%s3979 + $0xc] sm:$0xf]
        %v3984 = vld [vmem:[%s3979 + $0x10] sm:$0xf]
        %v3985 = vld [vmem:[%s3979 + $0x14] sm:$0xf]
        %v3986 = vld [vmem:[%s3979 + $0x18] sm:$0xf]
        %v3987 = vld [vmem:[%s3979 + $0x1c] sm:$0xf]
        %v3988 = vld [vmem:[%s3979 + $0x20] sm:$0xf]
        %v3989 = vld [vmem:[%s3979 + $0x24] sm:$0xf]
        %v3990 = vld [vmem:[%s3979 + $0x28] sm:$0xf]
        %v3991 = vld [vmem:[%s3979 + $0x2c] sm:$0xf]
        %v3992 = vld [vmem:[%s3979 + $0x30] sm:$0xf]
        %v3993 = vld [vmem:[%s3979 + $0x34] sm:$0xf]
        %v3994 = vld [vmem:[%s3979 + $0x38] sm:$0xf]
        %v3995 = vld [vmem:[%s3979 + $0x3c] sm:$0xf]
        %v3996 = vunpack.c.l.b16 %v3880
        %v3997 = vunpack.c.l.b16 %v3894
        %v3998 = vunpack.c.l.b16 %v3908
        %v3999 = vunpack.c.l.b16 %v3922
        %v4000 = vunpack.c.l.b16 %v3936
        %v4001 = vunpack.c.l.b16 %v3950
        %v4002 = vunpack.c.l.b16 %v3964
        %v4003 = vunpack.c.l.b16 %v3978
        %v4004 = vpack.c.b16 %v3997, %v3996
        %v4005 = vpack.c.b16 %v3999, %v3998
        %v4006 = vpack.c.b16 %v4001, %v4000
        %v4007 = vpack.c.b16 %v4003, %v4002
        %v4028 = vunpack.c.l.b16 %v3980
        %v4029 = vunpack.c.l.b16 %v3981
        %v4030 = vunpack.c.l.b16 %v3982
        %v4031 = vunpack.c.l.b16 %v3983
        %v4032 = vunpack.c.l.b16 %v3984
        %v4033 = vunpack.c.l.b16 %v3985
        %v4034 = vunpack.c.l.b16 %v3986
        %v4035 = vunpack.c.l.b16 %v3987
        %v4036 = vunpack.c.l.b16 %v3988
        %v4037 = vunpack.c.l.b16 %v3989
        %v4038 = vunpack.c.l.b16 %v3990
        %v4039 = vunpack.c.l.b16 %v3991
        %v4040 = vunpack.c.l.b16 %v3992
        %v4041 = vunpack.c.l.b16 %v3993
        %v4042 = vunpack.c.l.b16 %v3994
        %v4043 = vunpack.c.l.b16 %v3995
        %v4044 = vpack.c.b16 %v4029, %v4028
        %v4045 = vpack.c.b16 %v4031, %v4030
        %v4046 = vpack.c.b16 %v4033, %v4032
        %v4047 = vpack.c.b16 %v4035, %v4034
        %v4048 = vpack.c.b16 %v4037, %v4036
        %v4049 = vpack.c.b16 %v4039, %v4038
        %v4050 = vpack.c.b16 %v4041, %v4040
        %v4051 = vpack.c.b16 %v4043, %v4042
        %4060 = vmatprep.subr.bf16.mxu0 0
        %4061 = vmatpush1.bf16.msra.mxu0 %v4051
        %4062 = vmatprep.subr.bf16.mxu0 0
        %4063 = vmatpush1.bf16.msra.mxu0 %v4050
        %4064 = vmatprep.subr.bf16.mxu0 0
        %4065 = vmatpush1.bf16.msra.mxu0 %v4049
        %4066 = vmatprep.subr.bf16.mxu0 0
        %4067 = vmatpush1.bf16.msra.mxu0 %v4048
        %4068 = vmatprep.subr.bf16.mxu0 0
        %4069 = vmatpush1.bf16.msra.mxu0 %v4047
        %4070 = vmatprep.subr.bf16.mxu0 0
        %4071 = vmatpush1.bf16.msra.mxu0 %v4046
        %4072 = vmatprep.subr.bf16.mxu0 0
        %4073 = vmatpush1.bf16.msra.mxu0 %v4045
        %4074 = vmatprep.subr.bf16.mxu0 0
        %4075 = vmatpush1.bf16.msra.mxu0 %v4044
        %4076 = vmatprep.subr.bf16.mxu0 0
        %4077 = vmatpush2.bf16.msra.mxu0 0
        %4078 = vmatprep.subr.bf16.mxu0 0
        %4079 = vmatpush2.bf16.msra.mxu0 0
        %4080 = vmatprep.subr.bf16.mxu0 0
        %4081 = vmatpush2.bf16.msra.mxu0 0
        %4082 = vmatprep.subr.bf16.mxu0 0
        %4083 = vmatpush2.bf16.msra.mxu0 0
        %4084 = vmatprep.subr.bf16.mxu0 0
        %4085 = vmatpush2.bf16.msra.mxu0 0
        %4086 = vmatprep.subr.bf16.mxu0 0
        %4087 = vmatpush2.bf16.msra.mxu0 0
        %4088 = vmatprep.subr.bf16.mxu0 0
        %4089 = vmatpush2.bf16.msra.mxu0 0
        %4090 = vmatprep.subr.bf16.mxu0 0
        %4091 = vmatpush2.bf16.msra.mxu0 0
        %4092 = vmatprep.mubr.bf16.mxu0 0
        %4093 = vmatmul.mubr.bf16.gmra.mxu0 %v4004
        %v4094 = vpop.f32.mrf.mxu0
        %v4095 = vadd.f32 0.0, %v4094
        %v4096 = vpop.f32.mrf.mxu0
        %v4097 = vpop.f32.mrf.mxu0
        %v4098 = vadd.f32 0.0, %v4097
        %v4099 = vpop.f32.mrf.mxu0
        %4100 = vmatprep.mubr.bf16.mxu0 0
        %4101 = vmatmul.mubr.bf16.gmra.mxu0 %v4005
        %v4102 = vpop.f32.mrf.mxu0
        %v4103 = vadd.f32 0.0, %v4102
        %v4104 = vpop.f32.mrf.mxu0
        %v4105 = vpop.f32.mrf.mxu0
        %v4106 = vadd.f32 0.0, %v4105
        %v4107 = vpop.f32.mrf.mxu0
        %4108 = vmatprep.mubr.bf16.mxu0 0
        %4109 = vmatmul.mubr.bf16.gmra.mxu0 %v4006
        %v4110 = vpop.f32.mrf.mxu0
        %v4111 = vadd.f32 0.0, %v4110
        %v4112 = vpop.f32.mrf.mxu0
        %v4113 = vpop.f32.mrf.mxu0
        %v4114 = vadd.f32 0.0, %v4113
        %v4115 = vpop.f32.mrf.mxu0
        %4116 = vmatprep.mubr.bf16.mxu0 0
        %4117 = vmatmul.mubr.bf16.gmra.mxu0 %v4007
        %v4118 = vpop.f32.mrf.mxu0
        %v4119 = vadd.f32 0.0, %v4118
        %v4120 = vpop.f32.mrf.mxu0
        %v4121 = vpop.f32.mrf.mxu0
        %v4122 = vadd.f32 0.0, %v4121
        %v4123 = vpop.f32.mrf.mxu0
        %4124 = vdwg.mxu0
        %v4125 = vadd.f32 %v3843, %v4095
        %v4126 = vadd.f32 %v3844, %v4098
        %v4127 = vadd.f32 %v3845, %v4103
        %v4128 = vadd.f32 %v3846, %v4106
        %v4129 = vadd.f32 %v3847, %v4111
        %v4130 = vadd.f32 %v3848, %v4114
        %v4131 = vadd.f32 %v3849, %v4119
        %v4132 = vadd.f32 %v3850, %v4122
        %v4133 = vld [vmem:[%s3680] sm:$0xe]
        %v4134 = vld [vmem:[%s3680 + $0x8] sm:$0xe]
        %v4135 = vld [vmem:[%s3680 + $0x10] sm:$0xe]
        %v4136 = vld [vmem:[%s3680 + $0x18] sm:$0xe]
        %v4137 = vld [vmem:[%s3680 + $0x20] sm:$0xe]
        %v4138 = vld [vmem:[%s3680 + $0x28] sm:$0xe]
        %v4139 = vld [vmem:[%s3680 + $0x30] sm:$0xe]
        %v4140 = vld [vmem:[%s3680 + $0x38] sm:$0xe]
        %v4157 = vrot.slane %v4133, 5
        %v4158 = vrot.slane %v4157, 4
        %v4159 = vrot.slane %v3852, 5
        %v4160 = vsel %vm1350, %v4158, %v4159
        %v4161 = vrot.slane %v4134, 5
        %v4162 = vrot.slane %v4161, 4
        %v4163 = vrot.slane %v3854, 5
        %v4164 = vsel %vm1350, %v4162, %v4163
        %v4165 = vrot.slane %v4135, 5
        %v4166 = vrot.slane %v4165, 4
        %v4167 = vrot.slane %v3856, 5
        %v4168 = vsel %vm1350, %v4166, %v4167
        %v4169 = vrot.slane %v4136, 5
        %v4170 = vrot.slane %v4169, 4
        %v4171 = vrot.slane %v3858, 5
        %v4172 = vsel %vm1350, %v4170, %v4171
        %v4173 = vrot.slane %v4137, 5
        %v4174 = vrot.slane %v4173, 4
        %v4175 = vrot.slane %v3860, 5
        %v4176 = vsel %vm1350, %v4174, %v4175
        %v4177 = vrot.slane %v4138, 5
        %v4178 = vrot.slane %v4177, 4
        %v4179 = vrot.slane %v3862, 5
        %v4180 = vsel %vm1350, %v4178, %v4179
        %v4181 = vrot.slane %v4139, 5
        %v4182 = vrot.slane %v4181, 4
        %v4183 = vrot.slane %v3864, 5
        %v4184 = vsel %vm1350, %v4182, %v4183
        %v4185 = vrot.slane %v4140, 5
        %v4186 = vrot.slane %v4185, 4
        %v4187 = vrot.slane %v3866, 5
        %v4188 = vsel %vm1350, %v4186, %v4187
        %s4189 = scalar_lea.vmem [#allocation12], 320
        %v4190 = vld [vmem:[%s4189] sm:$0xf]
        %v4191 = vld [vmem:[%s4189 + $0x4] sm:$0xf]
        %v4192 = vld [vmem:[%s4189 + $0x8] sm:$0xf]
        %v4193 = vld [vmem:[%s4189 + $0xc] sm:$0xf]
        %v4194 = vld [vmem:[%s4189 + $0x10] sm:$0xf]
        %v4195 = vld [vmem:[%s4189 + $0x14] sm:$0xf]
        %v4196 = vld [vmem:[%s4189 + $0x18] sm:$0xf]
        %v4197 = vld [vmem:[%s4189 + $0x1c] sm:$0xf]
        %v4198 = vld [vmem:[%s4189 + $0x20] sm:$0xf]
        %v4199 = vld [vmem:[%s4189 + $0x24] sm:$0xf]
        %v4200 = vld [vmem:[%s4189 + $0x28] sm:$0xf]
        %v4201 = vld [vmem:[%s4189 + $0x2c] sm:$0xf]
        %v4202 = vld [vmem:[%s4189 + $0x30] sm:$0xf]
        %v4203 = vld [vmem:[%s4189 + $0x34] sm:$0xf]
        %v4204 = vld [vmem:[%s4189 + $0x38] sm:$0xf]
        %v4205 = vld [vmem:[%s4189 + $0x3c] sm:$0xf]
        %v4206 = vunpack.c.l.b16 %v4160
        %v4207 = vunpack.c.l.b16 %v4164
        %v4208 = vunpack.c.l.b16 %v4168
        %v4209 = vunpack.c.l.b16 %v4172
        %v4210 = vunpack.c.l.b16 %v4176
        %v4211 = vunpack.c.l.b16 %v4180
        %v4212 = vunpack.c.l.b16 %v4184
        %v4213 = vunpack.c.l.b16 %v4188
        %v4214 = vpack.c.b16 %v4207, %v4206
        %v4215 = vpack.c.b16 %v4209, %v4208
        %v4216 = vpack.c.b16 %v4211, %v4210
        %v4217 = vpack.c.b16 %v4213, %v4212
        %v4238 = vunpack.c.l.b16 %v4190
        %v4239 = vunpack.c.l.b16 %v4191
        %v4240 = vunpack.c.l.b16 %v4192
        %v4241 = vunpack.c.l.b16 %v4193
        %v4242 = vunpack.c.l.b16 %v4194
        %v4243 = vunpack.c.l.b16 %v4195
        %v4244 = vunpack.c.l.b16 %v4196
        %v4245 = vunpack.c.l.b16 %v4197
        %v4246 = vunpack.c.l.b16 %v4198
        %v4247 = vunpack.c.l.b16 %v4199
        %v4248 = vunpack.c.l.b16 %v4200
        %v4249 = vunpack.c.l.b16 %v4201
        %v4250 = vunpack.c.l.b16 %v4202
        %v4251 = vunpack.c.l.b16 %v4203
        %v4252 = vunpack.c.l.b16 %v4204
        %v4253 = vunpack.c.l.b16 %v4205
        %v4254 = vpack.c.b16 %v4239, %v4238
        %v4255 = vpack.c.b16 %v4241, %v4240
        %v4256 = vpack.c.b16 %v4243, %v4242
        %v4257 = vpack.c.b16 %v4245, %v4244
        %v4258 = vpack.c.b16 %v4247, %v4246
        %v4259 = vpack.c.b16 %v4249, %v4248
        %v4260 = vpack.c.b16 %v4251, %v4250
        %v4261 = vpack.c.b16 %v4253, %v4252
        %4270 = vmatprep.subr.bf16.mxu0 0
        %4271 = vmatpush1.bf16.msra.mxu0 %v4261
        %4272 = vmatprep.subr.bf16.mxu0 0
        %4273 = vmatpush1.bf16.msra.mxu0 %v4260
        %4274 = vmatprep.subr.bf16.mxu0 0
        %4275 = vmatpush1.bf16.msra.mxu0 %v4259
        %4276 = vmatprep.subr.bf16.mxu0 0
        %4277 = vmatpush1.bf16.msra.mxu0 %v4258
        %4278 = vmatprep.subr.bf16.mxu0 0
        %4279 = vmatpush1.bf16.msra.mxu0 %v4257
        %4280 = vmatprep.subr.bf16.mxu0 0
        %4281 = vmatpush1.bf16.msra.mxu0 %v4256
        %4282 = vmatprep.subr.bf16.mxu0 0
        %4283 = vmatpush1.bf16.msra.mxu0 %v4255
        %4284 = vmatprep.subr.bf16.mxu0 0
        %4285 = vmatpush1.bf16.msra.mxu0 %v4254
        %4286 = vmatprep.subr.bf16.mxu0 0
        %4287 = vmatpush2.bf16.msra.mxu0 0
        %4288 = vmatprep.subr.bf16.mxu0 0
        %4289 = vmatpush2.bf16.msra.mxu0 0
        %4290 = vmatprep.subr.bf16.mxu0 0
        %4291 = vmatpush2.bf16.msra.mxu0 0
        %4292 = vmatprep.subr.bf16.mxu0 0
        %4293 = vmatpush2.bf16.msra.mxu0 0
        %4294 = vmatprep.subr.bf16.mxu0 0
        %4295 = vmatpush2.bf16.msra.mxu0 0
        %4296 = vmatprep.subr.bf16.mxu0 0
        %4297 = vmatpush2.bf16.msra.mxu0 0
        %4298 = vmatprep.subr.bf16.mxu0 0
        %4299 = vmatpush2.bf16.msra.mxu0 0
        %4300 = vmatprep.subr.bf16.mxu0 0
        %4301 = vmatpush2.bf16.msra.mxu0 0
        %4302 = vmatprep.mubr.bf16.mxu0 0
        %4303 = vmatmul.mubr.bf16.gmra.mxu0 %v4214
        %v4304 = vpop.f32.mrf.mxu0
        %v4305 = vadd.f32 0.0, %v4304
        %v4306 = vpop.f32.mrf.mxu0
        %v4307 = vpop.f32.mrf.mxu0
        %v4308 = vadd.f32 0.0, %v4307
        %v4309 = vpop.f32.mrf.mxu0
        %4310 = vmatprep.mubr.bf16.mxu0 0
        %4311 = vmatmul.mubr.bf16.gmra.mxu0 %v4215
        %v4312 = vpop.f32.mrf.mxu0
        %v4313 = vadd.f32 0.0, %v4312
        %v4314 = vpop.f32.mrf.mxu0
        %v4315 = vpop.f32.mrf.mxu0
        %v4316 = vadd.f32 0.0, %v4315
        %v4317 = vpop.f32.mrf.mxu0
        %4318 = vmatprep.mubr.bf16.mxu0 0
        %4319 = vmatmul.mubr.bf16.gmra.mxu0 %v4216
        %v4320 = vpop.f32.mrf.mxu0
        %v4321 = vadd.f32 0.0, %v4320
        %v4322 = vpop.f32.mrf.mxu0
        %v4323 = vpop.f32.mrf.mxu0
        %v4324 = vadd.f32 0.0, %v4323
        %v4325 = vpop.f32.mrf.mxu0
        %4326 = vmatprep.mubr.bf16.mxu0 0
        %4327 = vmatmul.mubr.bf16.gmra.mxu0 %v4217
        %v4328 = vpop.f32.mrf.mxu0
        %v4329 = vadd.f32 0.0, %v4328
        %v4330 = vpop.f32.mrf.mxu0
        %v4331 = vpop.f32.mrf.mxu0
        %v4332 = vadd.f32 0.0, %v4331
        %v4333 = vpop.f32.mrf.mxu0
        %4334 = vdwg.mxu0
        %v4335 = vadd.f32 %v4125, %v4305
        %v4336 = vadd.f32 %v4126, %v4308
        %v4337 = vadd.f32 %v4127, %v4313
        %v4338 = vadd.f32 %v4128, %v4316
        %v4339 = vadd.f32 %v4129, %v4321
        %v4340 = vadd.f32 %v4130, %v4324
        %v4341 = vadd.f32 %v4131, %v4329
        %v4342 = vadd.f32 %v4132, %v4332
        %s4343 = scalar_lea.vmem [#allocation3], 16
        %v4344 = vld [vmem:[%s4343] sm:$0xf]
        %v4345 = vld [vmem:[%s4343 + $0x8] sm:$0xf]
        %v4346 = vld [vmem:[%s4343 + $0x10] sm:$0xf]
        %v4347 = vld [vmem:[%s4343 + $0x18] sm:$0xf]
        %v4348 = vld [vmem:[%s4343 + $0x20] sm:$0xf]
        %v4349 = vld [vmem:[%s4343 + $0x28] sm:$0xf]
        %v4350 = vld [vmem:[%s4343 + $0x30] sm:$0xf]
        %v4351 = vld [vmem:[%s4343 + $0x38] sm:$0xf]
        %s4352 = scalar_lea.vmem [#allocation12], 384
        %v4353 = vld [vmem:[%s4352] sm:$0xf]
        %v4354 = vld [vmem:[%s4352 + $0x4] sm:$0xf]
        %v4355 = vld [vmem:[%s4352 + $0x8] sm:$0xf]
        %v4356 = vld [vmem:[%s4352 + $0xc] sm:$0xf]
        %v4357 = vld [vmem:[%s4352 + $0x10] sm:$0xf]
        %v4358 = vld [vmem:[%s4352 + $0x14] sm:$0xf]
        %v4359 = vld [vmem:[%s4352 + $0x18] sm:$0xf]
        %v4360 = vld [vmem:[%s4352 + $0x1c] sm:$0xf]
        %v4361 = vld [vmem:[%s4352 + $0x20] sm:$0xf]
        %v4362 = vld [vmem:[%s4352 + $0x24] sm:$0xf]
        %v4363 = vld [vmem:[%s4352 + $0x28] sm:$0xf]
        %v4364 = vld [vmem:[%s4352 + $0x2c] sm:$0xf]
        %v4365 = vld [vmem:[%s4352 + $0x30] sm:$0xf]
        %v4366 = vld [vmem:[%s4352 + $0x34] sm:$0xf]
        %v4367 = vld [vmem:[%s4352 + $0x38] sm:$0xf]
        %v4368 = vld [vmem:[%s4352 + $0x3c] sm:$0xf]
        %v4377 = vunpack.c.l.b16 %v4344
        %v4378 = vunpack.c.l.b16 %v4345
        %v4379 = vunpack.c.l.b16 %v4346
        %v4380 = vunpack.c.l.b16 %v4347
        %v4381 = vunpack.c.l.b16 %v4348
        %v4382 = vunpack.c.l.b16 %v4349
        %v4383 = vunpack.c.l.b16 %v4350
        %v4384 = vunpack.c.l.b16 %v4351
        %v4385 = vpack.c.b16 %v4378, %v4377
        %v4386 = vpack.c.b16 %v4380, %v4379
        %v4387 = vpack.c.b16 %v4382, %v4381
        %v4388 = vpack.c.b16 %v4384, %v4383
        %v4409 = vunpack.c.l.b16 %v4353
        %v4410 = vunpack.c.l.b16 %v4354
        %v4411 = vunpack.c.l.b16 %v4355
        %v4412 = vunpack.c.l.b16 %v4356
        %v4413 = vunpack.c.l.b16 %v4357
        %v4414 = vunpack.c.l.b16 %v4358
        %v4415 = vunpack.c.l.b16 %v4359
        %v4416 = vunpack.c.l.b16 %v4360
        %v4417 = vunpack.c.l.b16 %v4361
        %v4418 = vunpack.c.l.b16 %v4362
        %v4419 = vunpack.c.l.b16 %v4363
        %v4420 = vunpack.c.l.b16 %v4364
        %v4421 = vunpack.c.l.b16 %v4365
        %v4422 = vunpack.c.l.b16 %v4366
        %v4423 = vunpack.c.l.b16 %v4367
        %v4424 = vunpack.c.l.b16 %v4368
        %v4425 = vpack.c.b16 %v4410, %v4409
        %v4426 = vpack.c.b16 %v4412, %v4411
        %v4427 = vpack.c.b16 %v4414, %v4413
        %v4428 = vpack.c.b16 %v4416, %v4415
        %v4429 = vpack.c.b16 %v4418, %v4417
        %v4430 = vpack.c.b16 %v4420, %v4419
        %v4431 = vpack.c.b16 %v4422, %v4421
        %v4432 = vpack.c.b16 %v4424, %v4423
        %4441 = vmatprep.subr.bf16.mxu0 0
        %4442 = vmatpush1.bf16.msra.mxu0 %v4432
        %4443 = vmatprep.subr.bf16.mxu0 0
        %4444 = vmatpush1.bf16.msra.mxu0 %v4431
        %4445 = vmatprep.subr.bf16.mxu0 0
        %4446 = vmatpush1.bf16.msra.mxu0 %v4430
        %4447 = vmatprep.subr.bf16.mxu0 0
        %4448 = vmatpush1.bf16.msra.mxu0 %v4429
        %4449 = vmatprep.subr.bf16.mxu0 0
        %4450 = vmatpush1.bf16.msra.mxu0 %v4428
        %4451 = vmatprep.subr.bf16.mxu0 0
        %4452 = vmatpush1.bf16.msra.mxu0 %v4427
        %4453 = vmatprep.subr.bf16.mxu0 0
        %4454 = vmatpush1.bf16.msra.mxu0 %v4426
        %4455 = vmatprep.subr.bf16.mxu0 0
        %4456 = vmatpush1.bf16.msra.mxu0 %v4425
        %4457 = vmatprep.subr.bf16.mxu0 0
        %4458 = vmatpush2.bf16.msra.mxu0 0
        %4459 = vmatprep.subr.bf16.mxu0 0
        %4460 = vmatpush2.bf16.msra.mxu0 0
        %4461 = vmatprep.subr.bf16.mxu0 0
        %4462 = vmatpush2.bf16.msra.mxu0 0
        %4463 = vmatprep.subr.bf16.mxu0 0
        %4464 = vmatpush2.bf16.msra.mxu0 0
        %4465 = vmatprep.subr.bf16.mxu0 0
        %4466 = vmatpush2.bf16.msra.mxu0 0
        %4467 = vmatprep.subr.bf16.mxu0 0
        %4468 = vmatpush2.bf16.msra.mxu0 0
        %4469 = vmatprep.subr.bf16.mxu0 0
        %4470 = vmatpush2.bf16.msra.mxu0 0
        %4471 = vmatprep.subr.bf16.mxu0 0
        %4472 = vmatpush2.bf16.msra.mxu0 0
        %4473 = vmatprep.mubr.bf16.mxu0 0
        %4474 = vmatmul.mubr.bf16.gmra.mxu0 %v4385
        %v4475 = vpop.f32.mrf.mxu0
        %v4476 = vadd.f32 0.0, %v4475
        %v4477 = vpop.f32.mrf.mxu0
        %v4478 = vpop.f32.mrf.mxu0
        %v4479 = vadd.f32 0.0, %v4478
        %v4480 = vpop.f32.mrf.mxu0
        %4481 = vmatprep.mubr.bf16.mxu0 0
        %4482 = vmatmul.mubr.bf16.gmra.mxu0 %v4386
        %v4483 = vpop.f32.mrf.mxu0
        %v4484 = vadd.f32 0.0, %v4483
        %v4485 = vpop.f32.mrf.mxu0
        %v4486 = vpop.f32.mrf.mxu0
        %v4487 = vadd.f32 0.0, %v4486
        %v4488 = vpop.f32.mrf.mxu0
        %4489 = vmatprep.mubr.bf16.mxu0 0
        %4490 = vmatmul.mubr.bf16.gmra.mxu0 %v4387
        %v4491 = vpop.f32.mrf.mxu0
        %v4492 = vadd.f32 0.0, %v4491
        %v4493 = vpop.f32.mrf.mxu0
        %v4494 = vpop.f32.mrf.mxu0
        %v4495 = vadd.f32 0.0, %v4494
        %v4496 = vpop.f32.mrf.mxu0
        %4497 = vmatprep.mubr.bf16.mxu0 0
        %4498 = vmatmul.mubr.bf16.gmra.mxu0 %v4388
        %v4499 = vpop.f32.mrf.mxu0
        %v4500 = vadd.f32 0.0, %v4499
        %v4501 = vpop.f32.mrf.mxu0
        %v4502 = vpop.f32.mrf.mxu0
        %v4503 = vadd.f32 0.0, %v4502
        %v4504 = vpop.f32.mrf.mxu0
        %4505 = vdwg.mxu0
        %v4506 = vadd.f32 %v4335, %v4476
        %v4507 = vadd.f32 %v4336, %v4479
        %v4508 = vadd.f32 %v4337, %v4484
        %v4509 = vadd.f32 %v4338, %v4487
        %v4510 = vadd.f32 %v4339, %v4492
        %v4511 = vadd.f32 %v4340, %v4495
        %v4512 = vadd.f32 %v4341, %v4500
        %v4513 = vadd.f32 %v4342, %v4503
        %v4514 = vld [vmem:[%s4343] sm:$0xf]
        %v4515 = vld [vmem:[%s4343 + $0x4] sm:$0x1]
        %v4516 = vld [vmem:[%s4343 + $0x8] sm:$0xf]
        %v4517 = vld [vmem:[%s4343 + $0xc] sm:$0x1]
        %v4518 = vld [vmem:[%s4343 + $0x10] sm:$0xf]
        %v4519 = vld [vmem:[%s4343 + $0x14] sm:$0x1]
        %v4520 = vld [vmem:[%s4343 + $0x18] sm:$0xf]
        %v4521 = vld [vmem:[%s4343 + $0x1c] sm:$0x1]
        %v4522 = vld [vmem:[%s4343 + $0x20] sm:$0xf]
        %v4523 = vld [vmem:[%s4343 + $0x24] sm:$0x1]
        %v4524 = vld [vmem:[%s4343 + $0x28] sm:$0xf]
        %v4525 = vld [vmem:[%s4343 + $0x2c] sm:$0x1]
        %v4526 = vld [vmem:[%s4343 + $0x30] sm:$0xf]
        %v4527 = vld [vmem:[%s4343 + $0x34] sm:$0x1]
        %v4528 = vld [vmem:[%s4343 + $0x38] sm:$0xf]
        %v4529 = vld [vmem:[%s4343 + $0x3c] sm:$0x1]
        %v4531 = vshrl.u32 %v4514, 16
        %v4533 = vrot.slane %v4531, 4
        %v4534 = vshll.u32 %v4514, 16
        %v4536 = vrot.slane %v4534, 5
        %v4537 = vor.u32 %v4533, %v4536
        %v4538 = vrot.slane %v4537, 4
        %v4540 = vshll.u32 %v4515, 16
        %v4542 = vrot.slane %v4540, 5
        %v4543 = vsel %vm951, %v4538, %v4542
        %v4545 = vshrl.u32 %v4516, 16
        %v4547 = vrot.slane %v4545, 4
        %v4548 = vshll.u32 %v4516, 16
        %v4550 = vrot.slane %v4548, 5
        %v4551 = vor.u32 %v4547, %v4550
        %v4552 = vrot.slane %v4551, 4
        %v4554 = vshll.u32 %v4517, 16
        %v4556 = vrot.slane %v4554, 5
        %v4557 = vsel %vm951, %v4552, %v4556
        %v4559 = vshrl.u32 %v4518, 16
        %v4561 = vrot.slane %v4559, 4
        %v4562 = vshll.u32 %v4518, 16
        %v4564 = vrot.slane %v4562, 5
        %v4565 = vor.u32 %v4561, %v4564
        %v4566 = vrot.slane %v4565, 4
        %v4568 = vshll.u32 %v4519, 16
        %v4570 = vrot.slane %v4568, 5
        %v4571 = vsel %vm951, %v4566, %v4570
        %v4573 = vshrl.u32 %v4520, 16
        %v4575 = vrot.slane %v4573, 4
        %v4576 = vshll.u32 %v4520, 16
        %v4578 = vrot.slane %v4576, 5
        %v4579 = vor.u32 %v4575, %v4578
        %v4580 = vrot.slane %v4579, 4
        %v4582 = vshll.u32 %v4521, 16
        %v4584 = vrot.slane %v4582, 5
        %v4585 = vsel %vm951, %v4580, %v4584
        %v4587 = vshrl.u32 %v4522, 16
        %v4589 = vrot.slane %v4587, 4
        %v4590 = vshll.u32 %v4522, 16
        %v4592 = vrot.slane %v4590, 5
        %v4593 = vor.u32 %v4589, %v4592
        %v4594 = vrot.slane %v4593, 4
        %v4596 = vshll.u32 %v4523, 16
        %v4598 = vrot.slane %v4596, 5
        %v4599 = vsel %vm951, %v4594, %v4598
        %v4601 = vshrl.u32 %v4524, 16
        %v4603 = vrot.slane %v4601, 4
        %v4604 = vshll.u32 %v4524, 16
        %v4606 = vrot.slane %v4604, 5
        %v4607 = vor.u32 %v4603, %v4606
        %v4608 = vrot.slane %v4607, 4
        %v4610 = vshll.u32 %v4525, 16
        %v4612 = vrot.slane %v4610, 5
        %v4613 = vsel %vm951, %v4608, %v4612
        %v4615 = vshrl.u32 %v4526, 16
        %v4617 = vrot.slane %v4615, 4
        %v4618 = vshll.u32 %v4526, 16
        %v4620 = vrot.slane %v4618, 5
        %v4621 = vor.u32 %v4617, %v4620
        %v4622 = vrot.slane %v4621, 4
        %v4624 = vshll.u32 %v4527, 16
        %v4626 = vrot.slane %v4624, 5
        %v4627 = vsel %vm951, %v4622, %v4626
        %v4629 = vshrl.u32 %v4528, 16
        %v4631 = vrot.slane %v4629, 4
        %v4632 = vshll.u32 %v4528, 16
        %v4634 = vrot.slane %v4632, 5
        %v4635 = vor.u32 %v4631, %v4634
        %v4636 = vrot.slane %v4635, 4
        %v4638 = vshll.u32 %v4529, 16
        %v4640 = vrot.slane %v4638, 5
        %v4641 = vsel %vm951, %v4636, %v4640
        %s4642 = scalar_lea.vmem [#allocation12], 448
        %v4643 = vld [vmem:[%s4642] sm:$0xf]
        %v4644 = vld [vmem:[%s4642 + $0x4] sm:$0xf]
        %v4645 = vld [vmem:[%s4642 + $0x8] sm:$0xf]
        %v4646 = vld [vmem:[%s4642 + $0xc] sm:$0xf]
        %v4647 = vld [vmem:[%s4642 + $0x10] sm:$0xf]
        %v4648 = vld [vmem:[%s4642 + $0x14] sm:$0xf]
        %v4649 = vld [vmem:[%s4642 + $0x18] sm:$0xf]
        %v4650 = vld [vmem:[%s4642 + $0x1c] sm:$0xf]
        %v4651 = vld [vmem:[%s4642 + $0x20] sm:$0xf]
        %v4652 = vld [vmem:[%s4642 + $0x24] sm:$0xf]
        %v4653 = vld [vmem:[%s4642 + $0x28] sm:$0xf]
        %v4654 = vld [vmem:[%s4642 + $0x2c] sm:$0xf]
        %v4655 = vld [vmem:[%s4642 + $0x30] sm:$0xf]
        %v4656 = vld [vmem:[%s4642 + $0x34] sm:$0xf]
        %v4657 = vld [vmem:[%s4642 + $0x38] sm:$0xf]
        %v4658 = vld [vmem:[%s4642 + $0x3c] sm:$0xf]
        %v4659 = vunpack.c.l.b16 %v4543
        %v4660 = vunpack.c.l.b16 %v4557
        %v4661 = vunpack.c.l.b16 %v4571
        %v4662 = vunpack.c.l.b16 %v4585
        %v4663 = vunpack.c.l.b16 %v4599
        %v4664 = vunpack.c.l.b16 %v4613
        %v4665 = vunpack.c.l.b16 %v4627
        %v4666 = vunpack.c.l.b16 %v4641
        %v4667 = vpack.c.b16 %v4660, %v4659
        %v4668 = vpack.c.b16 %v4662, %v4661
        %v4669 = vpack.c.b16 %v4664, %v4663
        %v4670 = vpack.c.b16 %v4666, %v4665
        %v4691 = vunpack.c.l.b16 %v4643
        %v4692 = vunpack.c.l.b16 %v4644
        %v4693 = vunpack.c.l.b16 %v4645
        %v4694 = vunpack.c.l.b16 %v4646
        %v4695 = vunpack.c.l.b16 %v4647
        %v4696 = vunpack.c.l.b16 %v4648
        %v4697 = vunpack.c.l.b16 %v4649
        %v4698 = vunpack.c.l.b16 %v4650
        %v4699 = vunpack.c.l.b16 %v4651
        %v4700 = vunpack.c.l.b16 %v4652
        %v4701 = vunpack.c.l.b16 %v4653
        %v4702 = vunpack.c.l.b16 %v4654
        %v4703 = vunpack.c.l.b16 %v4655
        %v4704 = vunpack.c.l.b16 %v4656
        %v4705 = vunpack.c.l.b16 %v4657
        %v4706 = vunpack.c.l.b16 %v4658
        %v4707 = vpack.c.b16 %v4692, %v4691
        %v4708 = vpack.c.b16 %v4694, %v4693
        %v4709 = vpack.c.b16 %v4696, %v4695
        %v4710 = vpack.c.b16 %v4698, %v4697
        %v4711 = vpack.c.b16 %v4700, %v4699
        %v4712 = vpack.c.b16 %v4702, %v4701
        %v4713 = vpack.c.b16 %v4704, %v4703
        %v4714 = vpack.c.b16 %v4706, %v4705
        %4723 = vmatprep.subr.bf16.mxu0 0
        %4724 = vmatpush1.bf16.msra.mxu0 %v4714
        %4725 = vmatprep.subr.bf16.mxu0 0
        %4726 = vmatpush1.bf16.msra.mxu0 %v4713
        %4727 = vmatprep.subr.bf16.mxu0 0
        %4728 = vmatpush1.bf16.msra.mxu0 %v4712
        %4729 = vmatprep.subr.bf16.mxu0 0
        %4730 = vmatpush1.bf16.msra.mxu0 %v4711
        %4731 = vmatprep.subr.bf16.mxu0 0
        %4732 = vmatpush1.bf16.msra.mxu0 %v4710
        %4733 = vmatprep.subr.bf16.mxu0 0
        %4734 = vmatpush1.bf16.msra.mxu0 %v4709
        %4735 = vmatprep.subr.bf16.mxu0 0
        %4736 = vmatpush1.bf16.msra.mxu0 %v4708
        %4737 = vmatprep.subr.bf16.mxu0 0
        %4738 = vmatpush1.bf16.msra.mxu0 %v4707
        %4739 = vmatprep.subr.bf16.mxu0 0
        %4740 = vmatpush2.bf16.msra.mxu0 0
        %4741 = vmatprep.subr.bf16.mxu0 0
        %4742 = vmatpush2.bf16.msra.mxu0 0
        %4743 = vmatprep.subr.bf16.mxu0 0
        %4744 = vmatpush2.bf16.msra.mxu0 0
        %4745 = vmatprep.subr.bf16.mxu0 0
        %4746 = vmatpush2.bf16.msra.mxu0 0
        %4747 = vmatprep.subr.bf16.mxu0 0
        %4748 = vmatpush2.bf16.msra.mxu0 0
        %4749 = vmatprep.subr.bf16.mxu0 0
        %4750 = vmatpush2.bf16.msra.mxu0 0
        %4751 = vmatprep.subr.bf16.mxu0 0
        %4752 = vmatpush2.bf16.msra.mxu0 0
        %4753 = vmatprep.subr.bf16.mxu0 0
        %4754 = vmatpush2.bf16.msra.mxu0 0
        %4755 = vmatprep.mubr.bf16.mxu0 0
        %4756 = vmatmul.mubr.bf16.gmra.mxu0 %v4667
        %v4757 = vpop.f32.mrf.mxu0
        %v4758 = vadd.f32 0.0, %v4757
        %v4759 = vpop.f32.mrf.mxu0
        %v4760 = vpop.f32.mrf.mxu0
        %v4761 = vadd.f32 0.0, %v4760
        %v4762 = vpop.f32.mrf.mxu0
        %4763 = vmatprep.mubr.bf16.mxu0 0
        %4764 = vmatmul.mubr.bf16.gmra.mxu0 %v4668
        %v4765 = vpop.f32.mrf.mxu0
        %v4766 = vadd.f32 0.0, %v4765
        %v4767 = vpop.f32.mrf.mxu0
        %v4768 = vpop.f32.mrf.mxu0
        %v4769 = vadd.f32 0.0, %v4768
        %v4770 = vpop.f32.mrf.mxu0
        %4771 = vmatprep.mubr.bf16.mxu0 0
        %4772 = vmatmul.mubr.bf16.gmra.mxu0 %v4669
        %v4773 = vpop.f32.mrf.mxu0
        %v4774 = vadd.f32 0.0, %v4773
        %v4775 = vpop.f32.mrf.mxu0
        %v4776 = vpop.f32.mrf.mxu0
        %v4777 = vadd.f32 0.0, %v4776
        %v4778 = vpop.f32.mrf.mxu0
        %4779 = vmatprep.mubr.bf16.mxu0 0
        %4780 = vmatmul.mubr.bf16.gmra.mxu0 %v4670
        %v4781 = vpop.f32.mrf.mxu0
        %v4782 = vadd.f32 0.0, %v4781
        %v4783 = vpop.f32.mrf.mxu0
        %v4784 = vpop.f32.mrf.mxu0
        %v4785 = vadd.f32 0.0, %v4784
        %v4786 = vpop.f32.mrf.mxu0
        %4787 = vdwg.mxu0
        %v4788 = vadd.f32 %v4506, %v4758
        %v4789 = vadd.f32 %v4507, %v4761
        %v4790 = vadd.f32 %v4508, %v4766
        %v4791 = vadd.f32 %v4509, %v4769
        %v4792 = vadd.f32 %v4510, %v4774
        %v4793 = vadd.f32 %v4511, %v4777
        %v4794 = vadd.f32 %v4512, %v4782
        %v4795 = vadd.f32 %v4513, %v4785
        %v4796 = vld [vmem:[%s4343] sm:$0xe]
        %v4797 = vld [vmem:[%s4343 + $0x8] sm:$0xe]
        %v4798 = vld [vmem:[%s4343 + $0x10] sm:$0xe]
        %v4799 = vld [vmem:[%s4343 + $0x18] sm:$0xe]
        %v4800 = vld [vmem:[%s4343 + $0x20] sm:$0xe]
        %v4801 = vld [vmem:[%s4343 + $0x28] sm:$0xe]
        %v4802 = vld [vmem:[%s4343 + $0x30] sm:$0xe]
        %v4803 = vld [vmem:[%s4343 + $0x38] sm:$0xe]
        %v4820 = vrot.slane %v4796, 5
        %v4821 = vrot.slane %v4820, 4
        %v4822 = vrot.slane %v4515, 5
        %v4823 = vsel %vm1350, %v4821, %v4822
        %v4824 = vrot.slane %v4797, 5
        %v4825 = vrot.slane %v4824, 4
        %v4826 = vrot.slane %v4517, 5
        %v4827 = vsel %vm1350, %v4825, %v4826
        %v4828 = vrot.slane %v4798, 5
        %v4829 = vrot.slane %v4828, 4
        %v4830 = vrot.slane %v4519, 5
        %v4831 = vsel %vm1350, %v4829, %v4830
        %v4832 = vrot.slane %v4799, 5
        %v4833 = vrot.slane %v4832, 4
        %v4834 = vrot.slane %v4521, 5
        %v4835 = vsel %vm1350, %v4833, %v4834
        %v4836 = vrot.slane %v4800, 5
        %v4837 = vrot.slane %v4836, 4
        %v4838 = vrot.slane %v4523, 5
        %v4839 = vsel %vm1350, %v4837, %v4838
        %v4840 = vrot.slane %v4801, 5
        %v4841 = vrot.slane %v4840, 4
        %v4842 = vrot.slane %v4525, 5
        %v4843 = vsel %vm1350, %v4841, %v4842
        %v4844 = vrot.slane %v4802, 5
        %v4845 = vrot.slane %v4844, 4
        %v4846 = vrot.slane %v4527, 5
        %v4847 = vsel %vm1350, %v4845, %v4846
        %v4848 = vrot.slane %v4803, 5
        %v4849 = vrot.slane %v4848, 4
        %v4850 = vrot.slane %v4529, 5
        %v4851 = vsel %vm1350, %v4849, %v4850
        %s4852 = scalar_lea.vmem [#allocation12], 512
        %v4853 = vld [vmem:[%s4852] sm:$0xf]
        %v4854 = vld [vmem:[%s4852 + $0x4] sm:$0xf]
        %v4855 = vld [vmem:[%s4852 + $0x8] sm:$0xf]
        %v4856 = vld [vmem:[%s4852 + $0xc] sm:$0xf]
        %v4857 = vld [vmem:[%s4852 + $0x10] sm:$0xf]
        %v4858 = vld [vmem:[%s4852 + $0x14] sm:$0xf]
        %v4859 = vld [vmem:[%s4852 + $0x18] sm:$0xf]
        %v4860 = vld [vmem:[%s4852 + $0x1c] sm:$0xf]
        %v4861 = vld [vmem:[%s4852 + $0x20] sm:$0xf]
        %v4862 = vld [vmem:[%s4852 + $0x24] sm:$0xf]
        %v4863 = vld [vmem:[%s4852 + $0x28] sm:$0xf]
        %v4864 = vld [vmem:[%s4852 + $0x2c] sm:$0xf]
        %v4865 = vld [vmem:[%s4852 + $0x30] sm:$0xf]
        %v4866 = vld [vmem:[%s4852 + $0x34] sm:$0xf]
        %v4867 = vld [vmem:[%s4852 + $0x38] sm:$0xf]
        %v4868 = vld [vmem:[%s4852 + $0x3c] sm:$0xf]
        %v4869 = vunpack.c.l.b16 %v4823
        %v4870 = vunpack.c.l.b16 %v4827
        %v4871 = vunpack.c.l.b16 %v4831
        %v4872 = vunpack.c.l.b16 %v4835
        %v4873 = vunpack.c.l.b16 %v4839
        %v4874 = vunpack.c.l.b16 %v4843
        %v4875 = vunpack.c.l.b16 %v4847
        %v4876 = vunpack.c.l.b16 %v4851
        %v4877 = vpack.c.b16 %v4870, %v4869
        %v4878 = vpack.c.b16 %v4872, %v4871
        %v4879 = vpack.c.b16 %v4874, %v4873
        %v4880 = vpack.c.b16 %v4876, %v4875
        %v4901 = vunpack.c.l.b16 %v4853
        %v4902 = vunpack.c.l.b16 %v4854
        %v4903 = vunpack.c.l.b16 %v4855
        %v4904 = vunpack.c.l.b16 %v4856
        %v4905 = vunpack.c.l.b16 %v4857
        %v4906 = vunpack.c.l.b16 %v4858
        %v4907 = vunpack.c.l.b16 %v4859
        %v4908 = vunpack.c.l.b16 %v4860
        %v4909 = vunpack.c.l.b16 %v4861
        %v4910 = vunpack.c.l.b16 %v4862
        %v4911 = vunpack.c.l.b16 %v4863
        %v4912 = vunpack.c.l.b16 %v4864
        %v4913 = vunpack.c.l.b16 %v4865
        %v4914 = vunpack.c.l.b16 %v4866
        %v4915 = vunpack.c.l.b16 %v4867
        %v4916 = vunpack.c.l.b16 %v4868
        %v4917 = vpack.c.b16 %v4902, %v4901
        %v4918 = vpack.c.b16 %v4904, %v4903
        %v4919 = vpack.c.b16 %v4906, %v4905
        %v4920 = vpack.c.b16 %v4908, %v4907
        %v4921 = vpack.c.b16 %v4910, %v4909
        %v4922 = vpack.c.b16 %v4912, %v4911
        %v4923 = vpack.c.b16 %v4914, %v4913
        %v4924 = vpack.c.b16 %v4916, %v4915
        %4933 = vmatprep.subr.bf16.mxu0 0
        %4934 = vmatpush1.bf16.msra.mxu0 %v4924
        %4935 = vmatprep.subr.bf16.mxu0 0
        %4936 = vmatpush1.bf16.msra.mxu0 %v4923
        %4937 = vmatprep.subr.bf16.mxu0 0
        %4938 = vmatpush1.bf16.msra.mxu0 %v4922
        %4939 = vmatprep.subr.bf16.mxu0 0
        %4940 = vmatpush1.bf16.msra.mxu0 %v4921
        %4941 = vmatprep.subr.bf16.mxu0 0
        %4942 = vmatpush1.bf16.msra.mxu0 %v4920
        %4943 = vmatprep.subr.bf16.mxu0 0
        %4944 = vmatpush1.bf16.msra.mxu0 %v4919
        %4945 = vmatprep.subr.bf16.mxu0 0
        %4946 = vmatpush1.bf16.msra.mxu0 %v4918
        %4947 = vmatprep.subr.bf16.mxu0 0
        %4948 = vmatpush1.bf16.msra.mxu0 %v4917
        %4949 = vmatprep.subr.bf16.mxu0 0
        %4950 = vmatpush2.bf16.msra.mxu0 0
        %4951 = vmatprep.subr.bf16.mxu0 0
        %4952 = vmatpush2.bf16.msra.mxu0 0
        %4953 = vmatprep.subr.bf16.mxu0 0
        %4954 = vmatpush2.bf16.msra.mxu0 0
        %4955 = vmatprep.subr.bf16.mxu0 0
        %4956 = vmatpush2.bf16.msra.mxu0 0
        %4957 = vmatprep.subr.bf16.mxu0 0
        %4958 = vmatpush2.bf16.msra.mxu0 0
        %4959 = vmatprep.subr.bf16.mxu0 0
        %4960 = vmatpush2.bf16.msra.mxu0 0
        %4961 = vmatprep.subr.bf16.mxu0 0
        %4962 = vmatpush2.bf16.msra.mxu0 0
        %4963 = vmatprep.subr.bf16.mxu0 0
        %4964 = vmatpush2.bf16.msra.mxu0 0
        %4965 = vmatprep.mubr.bf16.mxu0 0
        %4966 = vmatmul.mubr.bf16.gmra.mxu0 %v4877
        %v4967 = vpop.f32.mrf.mxu0
        %v4968 = vadd.f32 0.0, %v4967
        %v4969 = vpop.f32.mrf.mxu0
        %v4970 = vpop.f32.mrf.mxu0
        %v4971 = vadd.f32 0.0, %v4970
        %v4972 = vpop.f32.mrf.mxu0
        %4973 = vmatprep.mubr.bf16.mxu0 0
        %4974 = vmatmul.mubr.bf16.gmra.mxu0 %v4878
        %v4975 = vpop.f32.mrf.mxu0
        %v4976 = vadd.f32 0.0, %v4975
        %v4977 = vpop.f32.mrf.mxu0
        %v4978 = vpop.f32.mrf.mxu0
        %v4979 = vadd.f32 0.0, %v4978
        %v4980 = vpop.f32.mrf.mxu0
        %4981 = vmatprep.mubr.bf16.mxu0 0
        %4982 = vmatmul.mubr.bf16.gmra.mxu0 %v4879
        %v4983 = vpop.f32.mrf.mxu0
        %v4984 = vadd.f32 0.0, %v4983
        %v4985 = vpop.f32.mrf.mxu0
        %v4986 = vpop.f32.mrf.mxu0
        %v4987 = vadd.f32 0.0, %v4986
        %v4988 = vpop.f32.mrf.mxu0
        %4989 = vmatprep.mubr.bf16.mxu0 0
        %4990 = vmatmul.mubr.bf16.gmra.mxu0 %v4880
        %v4991 = vpop.f32.mrf.mxu0
        %v4992 = vadd.f32 0.0, %v4991
        %v4993 = vpop.f32.mrf.mxu0
        %v4994 = vpop.f32.mrf.mxu0
        %v4995 = vadd.f32 0.0, %v4994
        %v4996 = vpop.f32.mrf.mxu0
        %4997 = vdwg.mxu0
        %v4998 = vadd.f32 %v4788, %v4968
        %v4999 = vadd.f32 %v4789, %v4971
        %v5000 = vadd.f32 %v4790, %v4976
        %v5001 = vadd.f32 %v4791, %v4979
        %v5002 = vadd.f32 %v4792, %v4984
        %v5003 = vadd.f32 %v4793, %v4987
        %v5004 = vadd.f32 %v4794, %v4992
        %v5005 = vadd.f32 %v4795, %v4995
        %v5006 = vld [vmem:[%s7] sm:$0x1]
        %v5008 = vlaneseq
        %v5009 = vshrl.u32 %v5008, 7
        %v5010 = vsub.s32 0, %v5009
        %v5011 = vrot.slane %v5006, %v5010
        %v5013 = vmul.f32 %v4998, %v5011
        %v5014 = vmul.f32 %v4999, %v5011
        %v5015 = vmul.f32 %v5000, %v5011
        %v5016 = vmul.f32 %v5001, %v5011
        %v5017 = vmul.f32 %v5002, %v5011
        %v5018 = vmul.f32 %v5003, %v5011
        %v5019 = vmul.f32 %v5004, %v5011
        %v5020 = vmul.f32 %v5005, %v5011
        %v5021 = vld [vmem:[%s8] sm:$0x1]
        %v5023 = vlaneseq
        %v5024 = vshrl.u32 %v5023, 7
        %v5025 = vsub.s32 0, %v5024
        %v5026 = vrot.slane %v5021, %v5025
        %v5028 = vadd.f32 %v5013, %v5026
        %v5029 = vadd.f32 %v5014, %v5026
        %v5030 = vadd.f32 %v5015, %v5026
        %v5031 = vadd.f32 %v5016, %v5026
        %v5032 = vadd.f32 %v5017, %v5026
        %v5033 = vadd.f32 %v5018, %v5026
        %v5034 = vadd.f32 %v5019, %v5026
        %v5035 = vadd.f32 %v5020, %v5026
        %v5036 = vmax.f32 %v5028, 0.0
        %v5037 = vmax.f32 %v5029, 0.0
        %v5038 = vmax.f32 %v5030, 0.0
        %v5039 = vmax.f32 %v5031, 0.0
        %v5040 = vmax.f32 %v5032, 0.0
        %v5041 = vmax.f32 %v5033, 0.0
        %v5042 = vmax.f32 %v5034, 0.0
        %v5043 = vmax.f32 %v5035, 0.0
        %v5044 = vpack.c.bf16 %v5036, %v5036
        %v5045 = vpack.c.bf16 %v5037, %v5037
        %v5046 = vpack.c.bf16 %v5038, %v5038
        %v5047 = vpack.c.bf16 %v5039, %v5039
        %v5048 = vpack.c.bf16 %v5040, %v5040
        %v5049 = vpack.c.bf16 %v5041, %v5041
        %v5050 = vpack.c.bf16 %v5042, %v5042
        %v5051 = vpack.c.bf16 %v5043, %v5043
        %5052 = vst [vmem:[%s515] sm:$0xf] %v5044
        %5053 = vst [vmem:[%s515 + $0x4] sm:$0xf] %v5045
        %5054 = vst [vmem:[%s515 + $0x8] sm:$0xf] %v5046
        %5055 = vst [vmem:[%s515 + $0xc] sm:$0xf] %v5047
        %5056 = vst [vmem:[%s515 + $0x10] sm:$0xf] %v5048
        %5057 = vst [vmem:[%s515 + $0x14] sm:$0xf] %v5049
        %5058 = vst [vmem:[%s515 + $0x18] sm:$0xf] %v5050
        %5059 = vst [vmem:[%s515 + $0x1c] sm:$0xf] %v5051
        %s5060 = sand.u32 %s282, 1
        %s5061 = scalar_lea.sflag [#allocation6], %s5060
        %s5062 = sand.u32 %s282, 1
        %s5063 = smul.addr %s5062, 32
        %s5064 = scalar_lea.vmem [#allocation13], %s5063
        // Predicated region
        $region85: #{tpu_custom_call.1} parent=55 // pred_check
          %p5065 = pneg %p292
        $region86: #{tpu_custom_call.1} parent=55 // pred_check_branch
          %5067 = sbr.rel (%p5065) target = $region88
        $region87: #{tpu_custom_call.1} parent=55 // pred_region
          %s5068 = smul.u32 8, %s35
          %s5070 = ssub.s32 512, 512
          %5071 = vsyncadd %s5061, %s5070
          %s5072 = smul.addr %s34, 8
          %s5073 = sadd.s32 %s5068, %s5072
          %s5074 = smul.addr %s5073, 64
          %s5075 = scalar_lea.hbm %s9, %s5074
          %s5076 = sshll.u32 %s5064, 4
          %s5077 = int_to_ptr.vmem [resolvable:$true] %s5076
          %5082 = dma.vmem_to_hbm [thread:$0]  %s5077, 512, %s5075, %s5061, 64, 64, 4
        $region88: #{tpu_custom_call.1} parent=55 // pred_fallthru
          _
      $region56: #{tpu_custom_call.1} parent=5 // pred_fallthru
        _
      %p5083 = scmp.le.s32.totalorder 2, %s25
      // Predicated region
      $region89: #{tpu_custom_call.1} parent=5 // pred_check
        %p5084 = pneg %p5083
      $region90: #{tpu_custom_call.1} parent=5 // pred_check_branch
        %5086 = sbr.rel (%p5084) target = $region92
      $region91: #{tpu_custom_call.1} parent=5 // pred_region
        %s5087 = ssub.s32 %s25, 2
        // Predicated region
        $region93: #{tpu_custom_call.1} parent=91 // pred_check
          %p5088 = pneg %p298
        $region94: #{tpu_custom_call.1} parent=91 // pred_check_branch
          %5090 = sbr.rel (%p5088) target = $region96
        $region95: #{tpu_custom_call.1} parent=91 // pred_region
          %s5091 = sand.u32 %s283, 1
          %s5092 = scalar_lea.sflag [#allocation6], %s5091
          %s5093 = sand.u32 %s283, 1
          %s5094 = smul.addr %s5093, 32
          %s5095 = scalar_lea.vmem [#allocation13], %s5094
          %5096 = dma.done %s5092, 512
        $region96: #{tpu_custom_call.1} parent=91 // pred_fallthru
          _
      $region92: #{tpu_custom_call.1} parent=5 // pred_fallthru
        _
    $region6: #{tpu_custom_call.1} parent=1 // loop_footer
      %s29 = sadd.s32 1, %s25
    $region7: #{tpu_custom_call.1} parent=1 // loop_footer_branch
      %24 = sbr.rel target = $region3
    $region8: #{tpu_custom_call.1} parent=1 // loop_exit
      _
    %5097 = vsyncpa [#allocation5], 1
    %s5098 = scalar_lea.sflag [#allocation5], 1
    %5099 = vsyncpa %s5098, 1
    %5100 = vsyncpa [#allocation8], 1
    %s5101 = scalar_lea.sflag [#allocation8], 1
    %5102 = vsyncpa %s5101, 1
    %5103 = vsyncpa [#allocation11], 1
    %5104 = vsyncpa [#allocation6], 1
    %s5105 = scalar_lea.sflag [#allocation6], 1
    %5106 = vsyncpa %s5105, 1

</llo_original>
